<compile_context>
chip_gen: v7x
topology: tpu7x:2x2x1
jax: 0.10.0
libtpu: 0.0.40
codegen_flags: <defaults>
</compile_context>

<pallas_src>
import functools

import jax
import jax.numpy as jnp
import numpy as np
from jax import lax
from jax.experimental import pallas as pl
from jax.experimental.pallas import tpu as pltpu

# (parity bit b, within-window offset u) -> original ConvTranspose tap index k.
# Derived from out[2q + p] += W[k] * x[q + (p + u - 1)] with k of parity p.
_K_OF = {(0, 0): 3, (0, 1): 1, (1, 0): 2, (1, 1): 0}


def _unet_up_kernel(x_ref, w_ref, mask_ref, o_ref, *, dims, eps):
    # x_ref   : (1, Cin, P + 2*halo)  zero-padded, flattened spatial on lanes
    # w_ref   : (8, Cout, 8*Cin)      per-parity fused tap weights
    # mask_ref: (1, P)                1.0 on interior (valid) spatial positions
    # o_ref   : (1, 8, Cout, P)       8 = pd*4 + ph*2 + pw parity blocks
    D, H, W = dims
    Dp, Hp, Wp = D + 2, H + 2, W + 2
    P = Dp * Hp * Wp
    Cout = o_ref.shape[2]

    x = x_ref[0]            # (Cin, P + 2*halo) -- a handful of vregs
    mask = mask_ref[...]    # (1, P)

    ch_sum = jnp.zeros((Cout, 1), jnp.float32)
    ch_ssq = jnp.zeros((Cout, 1), jnp.float32)

    # Pass 1: per parity, one fused K=8*Cin matmul; result stays in vregs and is
    # stored once (full lane width).  Stats accumulate in registers.
    for p in range(8):
        pd, ph, pw = (p >> 2) & 1, (p >> 1) & 1, p & 1
        taps = []
        for a in range(2):
            for b in range(2):
                for c in range(2):
                    start = (pd + a) * Hp * Wp + (ph + b) * Wp + (pw + c)
                    taps.append(x[:, start:start + P])        # shifted (Cin, P)
        x_p = jnp.concatenate(taps, axis=0)                   # (8*Cin, P)
        out_p = jnp.dot(w_ref[p], x_p,
                        preferred_element_type=jnp.float32)   # (Cout, P)

        masked = out_p * mask
        ch_sum = ch_sum + jnp.sum(masked, axis=1, keepdims=True)
        ch_ssq = ch_ssq + jnp.sum(masked * out_p, axis=1, keepdims=True)
        o_ref[0, p] = out_p                                   # un-normalized

    # Pass 2: InstanceNorm3d (biased variance, affine=False) + ReLU in-place.
    count = float(8 * D * H * W)
    mean = ch_sum / count
    var = ch_ssq / count - mean * mean
    scale = lax.rsqrt(var + eps)          # (Cout, 1), broadcasts along lanes
    shift = -mean * scale
    for p in range(8):
        o_ref[0, p] = jnp.maximum(o_ref[0, p] * scale + shift, 0.0)


def unet_up_forward(x, weight, bias, skip_input=None, *, eps=1e-5):
    """Forward pass of UNetUp. x, skip_input: NCDHW. weight: (Cin, Cout, 4,4,4)."""
    if skip_input is not None:
        x = jnp.concatenate([x, skip_input], axis=1)          # channel concat
    N, Cin, D, H, W = x.shape
    assert weight.shape[0] == Cin and weight.shape[2:] == (4, 4, 4)
    Cout = weight.shape[1]
    # ConvTranspose bias is a per-channel constant: it cancels exactly under
    # InstanceNorm3d(affine=False), so it is intentionally not applied.
    del bias

    Dp, Hp, Wp = D + 2, H + 2, W + 2
    P = Dp * Hp * Wp
    halo = Hp * Wp + Wp + 1          # max |flat shift| of any tap

    # NCDHW already has channels leading: zero-pad spatial dims by 1, flatten
    # spatial, and add a flat halo so every tap shift is a static lane slice.
    x_pad = jnp.pad(x.astype(jnp.float32),
                    ((0, 0), (0, 0), (1, 1), (1, 1), (1, 1)))
    x_flat = x_pad.reshape(N, Cin, P)
    x_ext = jnp.pad(x_flat, ((0, 0), (0, 0), (halo, halo)))   # (N, Cin, P+2*halo)

    # Per-parity fused weights: w_par[p] is (Cout, 8*Cin), rows ordered (tap, ci)
    # matching the in-kernel concatenation order.
    w_blocks = []
    for pd in range(2):
        for ph in range(2):
            for pw in range(2):
                taps = []
                for a in range(2):
                    for b in range(2):
                        for c in range(2):
                            kd = _K_OF[(pd, a)]
                            kh = _K_OF[(ph, b)]
                            kw = _K_OF[(pw, c)]
                            taps.append(weight[:, :, kd, kh, kw])   # (Cin, Cout)
                w_blocks.append(jnp.concatenate(taps, axis=0).T)    # (Cout, 8*Cin)
    w_par = jnp.stack(w_blocks, axis=0).astype(jnp.float32)         # (8, Cout, 8*Cin)

    # Static interior mask over the padded flat spatial axis (excludes halo/pad
    # garbage from the InstanceNorm statistics).
    m3 = np.zeros((Dp, Hp, Wp), np.float32)
    m3[1:D + 1, 1:H + 1, 1:W + 1] = 1.0
    mask = jnp.asarray(m3.reshape(1, P))

    kernel = functools.partial(_unet_up_kernel, dims=(D, H, W), eps=eps)
    out = pl.pallas_call(
        kernel,
        out_shape=jax.ShapeDtypeStruct((N, 8, Cout, P), jnp.float32),
        grid_spec=pltpu.PrefetchScalarGridSpec(
            num_scalar_prefetch=0,
            grid=(N,),
            in_specs=[
                pl.BlockSpec((1, Cin, P + 2 * halo), lambda n: (n, 0, 0)),
                pl.BlockSpec((8, Cout, 8 * Cin), lambda n: (0, 0, 0)),
                pl.BlockSpec((1, P), lambda n: (0, 0)),
            ],
            out_specs=pl.BlockSpec((1, 8, Cout, P), lambda n: (n, 0, 0, 0)),
        ),
        compiler_params=pltpu.CompilerParams(
            dimension_semantics=("parallel",)),
    )(x_ext, w_par, mask)

    # Crop the padded halo and interleave the 8 parity blocks back to NCDHW
    # (single fused XLA copy on the output side).
    out = out.reshape(N, 2, 2, 2, Cout, Dp, Hp, Wp)[
        :, :, :, :, :, 1:D + 1, 1:H + 1, 1:W + 1]             # (N,2,2,2,C,D,H,W)
    out = out.transpose(0, 4, 5, 1, 6, 2, 7, 3)               # (N,C,D,pd,H,ph,W,pw)
    return out.reshape(N, Cout, 2 * D, 2 * H, 2 * W)


def _reference(x, weight, bias, skip_input=None, eps=1e-5):
    """Pure-JAX reference: ConvTranspose3d via dilated conv + InstanceNorm + ReLU."""
    if skip_input is not None:
        x = jnp.concatenate([x, skip_input], axis=1)
    w = jnp.flip(weight, axis=(2, 3, 4)).transpose(1, 0, 2, 3, 4)  # (Cout,Cin,4,4,4)
    y = lax.conv_general_dilated(
        x, w, window_strides=(1, 1, 1), padding=[(2, 2)] * 3,
        lhs_dilation=(2, 2, 2),
        dimension_numbers=("NCDHW", "OIDHW", "NCDHW"))
    y = y + bias[None, :, None, None, None]
    mean = y.mean(axis=(2, 3, 4), keepdims=True)
    var = ((y - mean) ** 2).mean(axis=(2, 3, 4), keepdims=True)
    return jnp.maximum((y - mean) * lax.rsqrt(var + eps), 0.0)


if __name__ == "__main__":
    # UNetUp(in_size=8, out_size=8); forward(x, skip) with channel concat 4 + 4 = 8.
    N, C_x, C_skip, D, H, W = 2, 4, 4, 8, 8, 8
    in_size, out_size = C_x + C_skip, 8

    key = jax.random.PRNGKey(0)
    kx, ks, kw, kb = jax.random.split(key, 4)
    x = jax.random.normal(kx, (N, C_x, D, H, W), jnp.float32)
    skip = jax.random.normal(ks, (N, C_skip, D, H, W), jnp.float32)
    # Deterministic synthetic params (ConvTranspose3d weight: (in, out, 4, 4, 4)).
    weight = 0.1 * jax.random.normal(kw, (in_size, out_size, 4, 4, 4), jnp.float32)
    bias = 0.1 * jax.random.normal(kb, (out_size,), jnp.float32)

    out = jax.block_until_ready(unet_up_forward(x, weight, bias, skip))
    assert out.shape == (N, out_size, 2 * D, 2 * H, 2 * W), out.shape

    ref = jax.block_until_ready(_reference(x, weight, bias, skip))
    np.testing.assert_allclose(np.asarray(out), np.asarray(ref),
                               rtol=3e-2, atol=3e-2)
    print("KERNEL_OK")
</pallas_src>

<mosaic_0001>
module attributes {stable_mosaic.version = 11 : i64} {
  func.func @_unet_up_kernel(%arg0: i32, %arg1: memref<1x8x1222xf32, #tpu.memory_space<vmem>>, %arg2: memref<8x8x64xf32, #tpu.memory_space<vmem>>, %arg3: memref<1x1000xf32, #tpu.memory_space<vmem>>, %arg4: memref<1x8x8x1000xf32, #tpu.memory_space<vmem>>) attributes {dimension_semantics = [#tpu.dimension_semantics<parallel>], iteration_bounds = array<i64: 2>, scalar_prefetch = 0 : i64, scratch_operands = 0 : i64, tpu.core_type = #tpu.core_type<tc>, window_params = [{transform_indices = @transform_0, window_bounds = array<i64: 1, 8, 1222>}, {pipeline_mode = #tpu.pipeline_mode<synchronous>, transform_indices = @transform_1, window_bounds = array<i64: 8, 8, 64>}, {pipeline_mode = #tpu.pipeline_mode<synchronous>, transform_indices = @transform_2, window_bounds = array<i64: 1, 1000>}, {transform_indices = @transform_3, window_bounds = array<i64: 1, 8, 8, 1000>}]} {
    %c0 = arith.constant 0 : index
    %c0_0 = arith.constant 0 : index
    %c0_1 = arith.constant 0 : index
    %0 = vector.load %arg1[%c0, %c0_0, %c0_1] : memref<1x8x1222xf32, #tpu.memory_space<vmem>>, vector<1x8x1222xf32>
    %1 = vector.shape_cast %0 : vector<1x8x1222xf32> to vector<8x1222xf32>
    %c0_2 = arith.constant 0 : index
    %c0_3 = arith.constant 0 : index
    %2 = vector.load %arg3[%c0_2, %c0_3] : memref<1x1000xf32, #tpu.memory_space<vmem>>, vector<1x1000xf32>
    %cst = arith.constant 0.000000e+00 : f32
    %3 = vector.broadcast %cst : f32 to vector<8x1xf32>
    %cst_4 = arith.constant 0.000000e+00 : f32
    %4 = vector.broadcast %cst_4 : f32 to vector<8x1xf32>
    %5 = vector.extract_strided_slice %1 {offsets = [0, 0], sizes = [8, 1000], strides = [1, 1]} : vector<8x1222xf32> to vector<8x1000xf32>
    %6 = vector.extract_strided_slice %1 {offsets = [0, 1], sizes = [8, 1000], strides = [1, 1]} : vector<8x1222xf32> to vector<8x1000xf32>
    %7 = vector.extract_strided_slice %1 {offsets = [0, 10], sizes = [8, 1000], strides = [1, 1]} : vector<8x1222xf32> to vector<8x1000xf32>
    %8 = vector.extract_strided_slice %1 {offsets = [0, 11], sizes = [8, 1000], strides = [1, 1]} : vector<8x1222xf32> to vector<8x1000xf32>
    %9 = vector.extract_strided_slice %1 {offsets = [0, 100], sizes = [8, 1000], strides = [1, 1]} : vector<8x1222xf32> to vector<8x1000xf32>
    %10 = vector.extract_strided_slice %1 {offsets = [0, 101], sizes = [8, 1000], strides = [1, 1]} : vector<8x1222xf32> to vector<8x1000xf32>
    %11 = vector.extract_strided_slice %1 {offsets = [0, 110], sizes = [8, 1000], strides = [1, 1]} : vector<8x1222xf32> to vector<8x1000xf32>
    %12 = vector.extract_strided_slice %1 {offsets = [0, 111], sizes = [8, 1000], strides = [1, 1]} : vector<8x1222xf32> to vector<8x1000xf32>
    %13 = tpu.concatenate %5, %6, %7, %8, %9, %10, %11, %12 in 0 : vector<8x1000xf32>, vector<8x1000xf32>, vector<8x1000xf32>, vector<8x1000xf32>, vector<8x1000xf32>, vector<8x1000xf32>, vector<8x1000xf32>, vector<8x1000xf32> -> vector<64x1000xf32>
    %c0_5 = arith.constant 0 : index
    %c0_6 = arith.constant 0 : index
    %c0_7 = arith.constant 0 : index
    %14 = vector.load %arg2[%c0_5, %c0_6, %c0_7] : memref<8x8x64xf32, #tpu.memory_space<vmem>>, vector<1x8x64xf32>
    %15 = vector.shape_cast %14 : vector<1x8x64xf32> to vector<8x64xf32>
    %cst_8 = arith.constant dense<0.000000e+00> : vector<8x1000xf32>
    %16 = tpu.matmul %15, %13, %cst_8 {dimension_numbers = #tpu.dot_dimension_numbers<[1], [0], [0], [1], [0, 0, 1, 1], [], []>} : vector<8x64xf32>, vector<64x1000xf32>, vector<8x1000xf32> -> vector<8x1000xf32>
    %17 = vector.broadcast %2 : vector<1x1000xf32> to vector<8x1000xf32>
    %18 = arith.mulf %16, %17 : vector<8x1000xf32>
    %cst_9 = arith.constant dense<0.000000e+00> : vector<8xf32>
    %19 = vector.multi_reduction <add>, %18, %cst_9 [1] : vector<8x1000xf32> to vector<8xf32>
    %20 = vector.shape_cast %19 : vector<8xf32> to vector<8x1xf32>
    %21 = arith.addf %3, %20 : vector<8x1xf32>
    %22 = arith.mulf %18, %16 : vector<8x1000xf32>
    %cst_10 = arith.constant dense<0.000000e+00> : vector<8xf32>
    %23 = vector.multi_reduction <add>, %22, %cst_10 [1] : vector<8x1000xf32> to vector<8xf32>
    %24 = vector.shape_cast %23 : vector<8xf32> to vector<8x1xf32>
    %25 = arith.addf %4, %24 : vector<8x1xf32>
    %c0_11 = arith.constant 0 : index
    %c0_12 = arith.constant 0 : index
    %c0_13 = arith.constant 0 : index
    %c0_14 = arith.constant 0 : index
    %26 = vector.load %arg4[%c0_11, %c0_12, %c0_13, %c0_14] : memref<1x8x8x1000xf32, #tpu.memory_space<vmem>>, vector<1x1x8x1000xf32>
    %27 = vector.shape_cast %26 : vector<1x1x8x1000xf32> to vector<8x1000xf32>
    %28 = vector.shape_cast %16 : vector<8x1000xf32> to vector<1x1x8x1000xf32>
    tpu.vector_store %arg4[%c0_11, %c0_12, %c0_13, %c0_14], %28 {strides = array<i32>} : memref<1x8x8x1000xf32, #tpu.memory_space<vmem>>, vector<1x1x8x1000xf32>,
    %29 = vector.extract_strided_slice %1 {offsets = [0, 1], sizes = [8, 1000], strides = [1, 1]} : vector<8x1222xf32> to vector<8x1000xf32>
    %30 = vector.extract_strided_slice %1 {offsets = [0, 2], sizes = [8, 1000], strides = [1, 1]} : vector<8x1222xf32> to vector<8x1000xf32>
    %31 = vector.extract_strided_slice %1 {offsets = [0, 11], sizes = [8, 1000], strides = [1, 1]} : vector<8x1222xf32> to vector<8x1000xf32>
    %32 = vector.extract_strided_slice %1 {offsets = [0, 12], sizes = [8, 1000], strides = [1, 1]} : vector<8x1222xf32> to vector<8x1000xf32>
    %33 = vector.extract_strided_slice %1 {offsets = [0, 101], sizes = [8, 1000], strides = [1, 1]} : vector<8x1222xf32> to vector<8x1000xf32>
    %34 = vector.extract_strided_slice %1 {offsets = [0, 102], sizes = [8, 1000], strides = [1, 1]} : vector<8x1222xf32> to vector<8x1000xf32>
    %35 = vector.extract_strided_slice %1 {offsets = [0, 111], sizes = [8, 1000], strides = [1, 1]} : vector<8x1222xf32> to vector<8x1000xf32>
    %36 = vector.extract_strided_slice %1 {offsets = [0, 112], sizes = [8, 1000], strides = [1, 1]} : vector<8x1222xf32> to vector<8x1000xf32>
    %37 = tpu.concatenate %29, %30, %31, %32, %33, %34, %35, %36 in 0 : vector<8x1000xf32>, vector<8x1000xf32>, vector<8x1000xf32>, vector<8x1000xf32>, vector<8x1000xf32>, vector<8x1000xf32>, vector<8x1000xf32>, vector<8x1000xf32> -> vector<64x1000xf32>
    %c1 = arith.constant 1 : index
    %c0_15 = arith.constant 0 : index
    %c0_16 = arith.constant 0 : index
    %38 = vector.load %arg2[%c1, %c0_15, %c0_16] : memref<8x8x64xf32, #tpu.memory_space<vmem>>, vector<1x8x64xf32>
    %39 = vector.shape_cast %38 : vector<1x8x64xf32> to vector<8x64xf32>
    %cst_17 = arith.constant dense<0.000000e+00> : vector<8x1000xf32>
    %40 = tpu.matmul %39, %37, %cst_17 {dimension_numbers = #tpu.dot_dimension_numbers<[1], [0], [0], [1], [0, 0, 1, 1], [], []>} : vector<8x64xf32>, vector<64x1000xf32>, vector<8x1000xf32> -> vector<8x1000xf32>
    %41 = vector.broadcast %2 : vector<1x1000xf32> to vector<8x1000xf32>
    %42 = arith.mulf %40, %41 : vector<8x1000xf32>
    %cst_18 = arith.constant dense<0.000000e+00> : vector<8xf32>
    %43 = vector.multi_reduction <add>, %42, %cst_18 [1] : vector<8x1000xf32> to vector<8xf32>
    %44 = vector.shape_cast %43 : vector<8xf32> to vector<8x1xf32>
    %45 = arith.addf %21, %44 : vector<8x1xf32>
    %46 = arith.mulf %42, %40 : vector<8x1000xf32>
    %cst_19 = arith.constant dense<0.000000e+00> : vector<8xf32>
    %47 = vector.multi_reduction <add>, %46, %cst_19 [1] : vector<8x1000xf32> to vector<8xf32>
    %48 = vector.shape_cast %47 : vector<8xf32> to vector<8x1xf32>
    %49 = arith.addf %25, %48 : vector<8x1xf32>
    %c0_20 = arith.constant 0 : index
    %c1_21 = arith.constant 1 : index
    %c0_22 = arith.constant 0 : index
    %c0_23 = arith.constant 0 : index
    %50 = vector.load %arg4[%c0_20, %c1_21, %c0_22, %c0_23] : memref<1x8x8x1000xf32, #tpu.memory_space<vmem>>, vector<1x1x8x1000xf32>
    %51 = vector.shape_cast %50 : vector<1x1x8x1000xf32> to vector<8x1000xf32>
    %52 = vector.shape_cast %40 : vector<8x1000xf32> to vector<1x1x8x1000xf32>
    tpu.vector_store %arg4[%c0_20, %c1_21, %c0_22, %c0_23], %52 {strides = array<i32>} : memref<1x8x8x1000xf32, #tpu.memory_space<vmem>>, vector<1x1x8x1000xf32>,
    %53 = vector.extract_strided_slice %1 {offsets = [0, 10], sizes = [8, 1000], strides = [1, 1]} : vector<8x1222xf32> to vector<8x1000xf32>
    %54 = vector.extract_strided_slice %1 {offsets = [0, 11], sizes = [8, 1000], strides = [1, 1]} : vector<8x1222xf32> to vector<8x1000xf32>
    %55 = vector.extract_strided_slice %1 {offsets = [0, 20], sizes = [8, 1000], strides = [1, 1]} : vector<8x1222xf32> to vector<8x1000xf32>
    %56 = vector.extract_strided_slice %1 {offsets = [0, 21], sizes = [8, 1000], strides = [1, 1]} : vector<8x1222xf32> to vector<8x1000xf32>
    %57 = vector.extract_strided_slice %1 {offsets = [0, 110], sizes = [8, 1000], strides = [1, 1]} : vector<8x1222xf32> to vector<8x1000xf32>
    %58 = vector.extract_strided_slice %1 {offsets = [0, 111], sizes = [8, 1000], strides = [1, 1]} : vector<8x1222xf32> to vector<8x1000xf32>
    %59 = vector.extract_strided_slice %1 {offsets = [0, 120], sizes = [8, 1000], strides = [1, 1]} : vector<8x1222xf32> to vector<8x1000xf32>
    %60 = vector.extract_strided_slice %1 {offsets = [0, 121], sizes = [8, 1000], strides = [1, 1]} : vector<8x1222xf32> to vector<8x1000xf32>
    %61 = tpu.concatenate %53, %54, %55, %56, %57, %58, %59, %60 in 0 : vector<8x1000xf32>, vector<8x1000xf32>, vector<8x1000xf32>, vector<8x1000xf32>, vector<8x1000xf32>, vector<8x1000xf32>, vector<8x1000xf32>, vector<8x1000xf32> -> vector<64x1000xf32>
    %c2 = arith.constant 2 : index
    %c0_24 = arith.constant 0 : index
    %c0_25 = arith.constant 0 : index
    %62 = vector.load %arg2[%c2, %c0_24, %c0_25] : memref<8x8x64xf32, #tpu.memory_space<vmem>>, vector<1x8x64xf32>
    %63 = vector.shape_cast %62 : vector<1x8x64xf32> to vector<8x64xf32>
    %cst_26 = arith.constant dense<0.000000e+00> : vector<8x1000xf32>
    %64 = tpu.matmul %63, %61, %cst_26 {dimension_numbers = #tpu.dot_dimension_numbers<[1], [0], [0], [1], [0, 0, 1, 1], [], []>} : vector<8x64xf32>, vector<64x1000xf32>, vector<8x1000xf32> -> vector<8x1000xf32>
    %65 = vector.broadcast %2 : vector<1x1000xf32> to vector<8x1000xf32>
    %66 = arith.mulf %64, %65 : vector<8x1000xf32>
    %cst_27 = arith.constant dense<0.000000e+00> : vector<8xf32>
    %67 = vector.multi_reduction <add>, %66, %cst_27 [1] : vector<8x1000xf32> to vector<8xf32>
    %68 = vector.shape_cast %67 : vector<8xf32> to vector<8x1xf32>
    %69 = arith.addf %45, %68 : vector<8x1xf32>
    %70 = arith.mulf %66, %64 : vector<8x1000xf32>
    %cst_28 = arith.constant dense<0.000000e+00> : vector<8xf32>
    %71 = vector.multi_reduction <add>, %70, %cst_28 [1] : vector<8x1000xf32> to vector<8xf32>
    %72 = vector.shape_cast %71 : vector<8xf32> to vector<8x1xf32>
    %73 = arith.addf %49, %72 : vector<8x1xf32>
    %c0_29 = arith.constant 0 : index
    %c2_30 = arith.constant 2 : index
    %c0_31 = arith.constant 0 : index
    %c0_32 = arith.constant 0 : index
    %74 = vector.load %arg4[%c0_29, %c2_30, %c0_31, %c0_32] : memref<1x8x8x1000xf32, #tpu.memory_space<vmem>>, vector<1x1x8x1000xf32>
    %75 = vector.shape_cast %74 : vector<1x1x8x1000xf32> to vector<8x1000xf32>
    %76 = vector.shape_cast %64 : vector<8x1000xf32> to vector<1x1x8x1000xf32>
    tpu.vector_store %arg4[%c0_29, %c2_30, %c0_31, %c0_32], %76 {strides = array<i32>} : memref<1x8x8x1000xf32, #tpu.memory_space<vmem>>, vector<1x1x8x1000xf32>,
    %77 = vector.extract_strided_slice %1 {offsets = [0, 11], sizes = [8, 1000], strides = [1, 1]} : vector<8x1222xf32> to vector<8x1000xf32>
    %78 = vector.extract_strided_slice %1 {offsets = [0, 12], sizes = [8, 1000], strides = [1, 1]} : vector<8x1222xf32> to vector<8x1000xf32>
    %79 = vector.extract_strided_slice %1 {offsets = [0, 21], sizes = [8, 1000], strides = [1, 1]} : vector<8x1222xf32> to vector<8x1000xf32>
    %80 = vector.extract_strided_slice %1 {offsets = [0, 22], sizes = [8, 1000], strides = [1, 1]} : vector<8x1222xf32> to vector<8x1000xf32>
    %81 = vector.extract_strided_slice %1 {offsets = [0, 111], sizes = [8, 1000], strides = [1, 1]} : vector<8x1222xf32> to vector<8x1000xf32>
    %82 = vector.extract_strided_slice %1 {offsets = [0, 112], sizes = [8, 1000], strides = [1, 1]} : vector<8x1222xf32> to vector<8x1000xf32>
    %83 = vector.extract_strided_slice %1 {offsets = [0, 121], sizes = [8, 1000], strides = [1, 1]} : vector<8x1222xf32> to vector<8x1000xf32>
    %84 = vector.extract_strided_slice %1 {offsets = [0, 122], sizes = [8, 1000], strides = [1, 1]} : vector<8x1222xf32> to vector<8x1000xf32>
    %85 = tpu.concatenate %77, %78, %79, %80, %81, %82, %83, %84 in 0 : vector<8x1000xf32>, vector<8x1000xf32>, vector<8x1000xf32>, vector<8x1000xf32>, vector<8x1000xf32>, vector<8x1000xf32>, vector<8x1000xf32>, vector<8x1000xf32> -> vector<64x1000xf32>
    %c3 = arith.constant 3 : index
    %c0_33 = arith.constant 0 : index
    %c0_34 = arith.constant 0 : index
    %86 = vector.load %arg2[%c3, %c0_33, %c0_34] : memref<8x8x64xf32, #tpu.memory_space<vmem>>, vector<1x8x64xf32>
    %87 = vector.shape_cast %86 : vector<1x8x64xf32> to vector<8x64xf32>
    %cst_35 = arith.constant dense<0.000000e+00> : vector<8x1000xf32>
    %88 = tpu.matmul %87, %85, %cst_35 {dimension_numbers = #tpu.dot_dimension_numbers<[1], [0], [0], [1], [0, 0, 1, 1], [], []>} : vector<8x64xf32>, vector<64x1000xf32>, vector<8x1000xf32> -> vector<8x1000xf32>
    %89 = vector.broadcast %2 : vector<1x1000xf32> to vector<8x1000xf32>
    %90 = arith.mulf %88, %89 : vector<8x1000xf32>
    %cst_36 = arith.constant dense<0.000000e+00> : vector<8xf32>
    %91 = vector.multi_reduction <add>, %90, %cst_36 [1] : vector<8x1000xf32> to vector<8xf32>
    %92 = vector.shape_cast %91 : vector<8xf32> to vector<8x1xf32>
    %93 = arith.addf %69, %92 : vector<8x1xf32>
    %94 = arith.mulf %90, %88 : vector<8x1000xf32>
    %cst_37 = arith.constant dense<0.000000e+00> : vector<8xf32>
    %95 = vector.multi_reduction <add>, %94, %cst_37 [1] : vector<8x1000xf32> to vector<8xf32>
    %96 = vector.shape_cast %95 : vector<8xf32> to vector<8x1xf32>
    %97 = arith.addf %73, %96 : vector<8x1xf32>
    %c0_38 = arith.constant 0 : index
    %c3_39 = arith.constant 3 : index
    %c0_40 = arith.constant 0 : index
    %c0_41 = arith.constant 0 : index
    %98 = vector.load %arg4[%c0_38, %c3_39, %c0_40, %c0_41] : memref<1x8x8x1000xf32, #tpu.memory_space<vmem>>, vector<1x1x8x1000xf32>
    %99 = vector.shape_cast %98 : vector<1x1x8x1000xf32> to vector<8x1000xf32>
    %100 = vector.shape_cast %88 : vector<8x1000xf32> to vector<1x1x8x1000xf32>
    tpu.vector_store %arg4[%c0_38, %c3_39, %c0_40, %c0_41], %100 {strides = array<i32>} : memref<1x8x8x1000xf32, #tpu.memory_space<vmem>>, vector<1x1x8x1000xf32>,
    %101 = vector.extract_strided_slice %1 {offsets = [0, 100], sizes = [8, 1000], strides = [1, 1]} : vector<8x1222xf32> to vector<8x1000xf32>
    %102 = vector.extract_strided_slice %1 {offsets = [0, 101], sizes = [8, 1000], strides = [1, 1]} : vector<8x1222xf32> to vector<8x1000xf32>
    %103 = vector.extract_strided_slice %1 {offsets = [0, 110], sizes = [8, 1000], strides = [1, 1]} : vector<8x1222xf32> to vector<8x1000xf32>
    %104 = vector.extract_strided_slice %1 {offsets = [0, 111], sizes = [8, 1000], strides = [1, 1]} : vector<8x1222xf32> to vector<8x1000xf32>
    %105 = vector.extract_strided_slice %1 {offsets = [0, 200], sizes = [8, 1000], strides = [1, 1]} : vector<8x1222xf32> to vector<8x1000xf32>
    %106 = vector.extract_strided_slice %1 {offsets = [0, 201], sizes = [8, 1000], strides = [1, 1]} : vector<8x1222xf32> to vector<8x1000xf32>
    %107 = vector.extract_strided_slice %1 {offsets = [0, 210], sizes = [8, 1000], strides = [1, 1]} : vector<8x1222xf32> to vector<8x1000xf32>
    %108 = vector.extract_strided_slice %1 {offsets = [0, 211], sizes = [8, 1000], strides = [1, 1]} : vector<8x1222xf32> to vector<8x1000xf32>
    %109 = tpu.concatenate %101, %102, %103, %104, %105, %106, %107, %108 in 0 : vector<8x1000xf32>, vector<8x1000xf32>, vector<8x1000xf32>, vector<8x1000xf32>, vector<8x1000xf32>, vector<8x1000xf32>, vector<8x1000xf32>, vector<8x1000xf32> -> vector<64x1000xf32>
    %c4 = arith.constant 4 : index
    %c0_42 = arith.constant 0 : index
    %c0_43 = arith.constant 0 : index
    %110 = vector.load %arg2[%c4, %c0_42, %c0_43] : memref<8x8x64xf32, #tpu.memory_space<vmem>>, vector<1x8x64xf32>
    %111 = vector.shape_cast %110 : vector<1x8x64xf32> to vector<8x64xf32>
    %cst_44 = arith.constant dense<0.000000e+00> : vector<8x1000xf32>
    %112 = tpu.matmul %111, %109, %cst_44 {dimension_numbers = #tpu.dot_dimension_numbers<[1], [0], [0], [1], [0, 0, 1, 1], [], []>} : vector<8x64xf32>, vector<64x1000xf32>, vector<8x1000xf32> -> vector<8x1000xf32>
    %113 = vector.broadcast %2 : vector<1x1000xf32> to vector<8x1000xf32>
    %114 = arith.mulf %112, %113 : vector<8x1000xf32>
    %cst_45 = arith.constant dense<0.000000e+00> : vector<8xf32>
    %115 = vector.multi_reduction <add>, %114, %cst_45 [1] : vector<8x1000xf32> to vector<8xf32>
    %116 = vector.shape_cast %115 : vector<8xf32> to vector<8x1xf32>
    %117 = arith.addf %93, %116 : vector<8x1xf32>
    %118 = arith.mulf %114, %112 : vector<8x1000xf32>
    %cst_46 = arith.constant dense<0.000000e+00> : vector<8xf32>
    %119 = vector.multi_reduction <add>, %118, %cst_46 [1] : vector<8x1000xf32> to vector<8xf32>
    %120 = vector.shape_cast %119 : vector<8xf32> to vector<8x1xf32>
    %121 = arith.addf %97, %120 : vector<8x1xf32>
    %c0_47 = arith.constant 0 : index
    %c4_48 = arith.constant 4 : index
    %c0_49 = arith.constant 0 : index
    %c0_50 = arith.constant 0 : index
    %122 = vector.load %arg4[%c0_47, %c4_48, %c0_49, %c0_50] : memref<1x8x8x1000xf32, #tpu.memory_space<vmem>>, vector<1x1x8x1000xf32>
    %123 = vector.shape_cast %122 : vector<1x1x8x1000xf32> to vector<8x1000xf32>
    %124 = vector.shape_cast %112 : vector<8x1000xf32> to vector<1x1x8x1000xf32>
    tpu.vector_store %arg4[%c0_47, %c4_48, %c0_49, %c0_50], %124 {strides = array<i32>} : memref<1x8x8x1000xf32, #tpu.memory_space<vmem>>, vector<1x1x8x1000xf32>,
    %125 = vector.extract_strided_slice %1 {offsets = [0, 101], sizes = [8, 1000], strides = [1, 1]} : vector<8x1222xf32> to vector<8x1000xf32>
    %126 = vector.extract_strided_slice %1 {offsets = [0, 102], sizes = [8, 1000], strides = [1, 1]} : vector<8x1222xf32> to vector<8x1000xf32>
    %127 = vector.extract_strided_slice %1 {offsets = [0, 111], sizes = [8, 1000], strides = [1, 1]} : vector<8x1222xf32> to vector<8x1000xf32>
    %128 = vector.extract_strided_slice %1 {offsets = [0, 112], sizes = [8, 1000], strides = [1, 1]} : vector<8x1222xf32> to vector<8x1000xf32>
    %129 = vector.extract_strided_slice %1 {offsets = [0, 201], sizes = [8, 1000], strides = [1, 1]} : vector<8x1222xf32> to vector<8x1000xf32>
    %130 = vector.extract_strided_slice %1 {offsets = [0, 202], sizes = [8, 1000], strides = [1, 1]} : vector<8x1222xf32> to vector<8x1000xf32>
    %131 = vector.extract_strided_slice %1 {offsets = [0, 211], sizes = [8, 1000], strides = [1, 1]} : vector<8x1222xf32> to vector<8x1000xf32>
    %132 = vector.extract_strided_slice %1 {offsets = [0, 212], sizes = [8, 1000], strides = [1, 1]} : vector<8x1222xf32> to vector<8x1000xf32>
    %133 = tpu.concatenate %125, %126, %127, %128, %129, %130, %131, %132 in 0 : vector<8x1000xf32>, vector<8x1000xf32>, vector<8x1000xf32>, vector<8x1000xf32>, vector<8x1000xf32>, vector<8x1000xf32>, vector<8x1000xf32>, vector<8x1000xf32> -> vector<64x1000xf32>
    %c5 = arith.constant 5 : index
    %c0_51 = arith.constant 0 : index
    %c0_52 = arith.constant 0 : index
    %134 = vector.load %arg2[%c5, %c0_51, %c0_52] : memref<8x8x64xf32, #tpu.memory_space<vmem>>, vector<1x8x64xf32>
    %135 = vector.shape_cast %134 : vector<1x8x64xf32> to vector<8x64xf32>
    %cst_53 = arith.constant dense<0.000000e+00> : vector<8x1000xf32>
    %136 = tpu.matmul %135, %133, %cst_53 {dimension_numbers = #tpu.dot_dimension_numbers<[1], [0], [0], [1], [0, 0, 1, 1], [], []>} : vector<8x64xf32>, vector<64x1000xf32>, vector<8x1000xf32> -> vector<8x1000xf32>
    %137 = vector.broadcast %2 : vector<1x1000xf32> to vector<8x1000xf32>
    %138 = arith.mulf %136, %137 : vector<8x1000xf32>
    %cst_54 = arith.constant dense<0.000000e+00> : vector<8xf32>
    %139 = vector.multi_reduction <add>, %138, %cst_54 [1] : vector<8x1000xf32> to vector<8xf32>
    %140 = vector.shape_cast %139 : vector<8xf32> to vector<8x1xf32>
    %141 = arith.addf %117, %140 : vector<8x1xf32>
    %142 = arith.mulf %138, %136 : vector<8x1000xf32>
    %cst_55 = arith.constant dense<0.000000e+00> : vector<8xf32>
    %143 = vector.multi_reduction <add>, %142, %cst_55 [1] : vector<8x1000xf32> to vector<8xf32>
    %144 = vector.shape_cast %143 : vector<8xf32> to vector<8x1xf32>
    %145 = arith.addf %121, %144 : vector<8x1xf32>
    %c0_56 = arith.constant 0 : index
    %c5_57 = arith.constant 5 : index
    %c0_58 = arith.constant 0 : index
    %c0_59 = arith.constant 0 : index
    %146 = vector.load %arg4[%c0_56, %c5_57, %c0_58, %c0_59] : memref<1x8x8x1000xf32, #tpu.memory_space<vmem>>, vector<1x1x8x1000xf32>
    %147 = vector.shape_cast %146 : vector<1x1x8x1000xf32> to vector<8x1000xf32>
    %148 = vector.shape_cast %136 : vector<8x1000xf32> to vector<1x1x8x1000xf32>
    tpu.vector_store %arg4[%c0_56, %c5_57, %c0_58, %c0_59], %148 {strides = array<i32>} : memref<1x8x8x1000xf32, #tpu.memory_space<vmem>>, vector<1x1x8x1000xf32>,
    %149 = vector.extract_strided_slice %1 {offsets = [0, 110], sizes = [8, 1000], strides = [1, 1]} : vector<8x1222xf32> to vector<8x1000xf32>
    %150 = vector.extract_strided_slice %1 {offsets = [0, 111], sizes = [8, 1000], strides = [1, 1]} : vector<8x1222xf32> to vector<8x1000xf32>
    %151 = vector.extract_strided_slice %1 {offsets = [0, 120], sizes = [8, 1000], strides = [1, 1]} : vector<8x1222xf32> to vector<8x1000xf32>
    %152 = vector.extract_strided_slice %1 {offsets = [0, 121], sizes = [8, 1000], strides = [1, 1]} : vector<8x1222xf32> to vector<8x1000xf32>
    %153 = vector.extract_strided_slice %1 {offsets = [0, 210], sizes = [8, 1000], strides = [1, 1]} : vector<8x1222xf32> to vector<8x1000xf32>
    %154 = vector.extract_strided_slice %1 {offsets = [0, 211], sizes = [8, 1000], strides = [1, 1]} : vector<8x1222xf32> to vector<8x1000xf32>
    %155 = vector.extract_strided_slice %1 {offsets = [0, 220], sizes = [8, 1000], strides = [1, 1]} : vector<8x1222xf32> to vector<8x1000xf32>
    %156 = vector.extract_strided_slice %1 {offsets = [0, 221], sizes = [8, 1000], strides = [1, 1]} : vector<8x1222xf32> to vector<8x1000xf32>
    %157 = tpu.concatenate %149, %150, %151, %152, %153, %154, %155, %156 in 0 : vector<8x1000xf32>, vector<8x1000xf32>, vector<8x1000xf32>, vector<8x1000xf32>, vector<8x1000xf32>, vector<8x1000xf32>, vector<8x1000xf32>, vector<8x1000xf32> -> vector<64x1000xf32>
    %c6 = arith.constant 6 : index
    %c0_60 = arith.constant 0 : index
    %c0_61 = arith.constant 0 : index
    %158 = vector.load %arg2[%c6, %c0_60, %c0_61] : memref<8x8x64xf32, #tpu.memory_space<vmem>>, vector<1x8x64xf32>
    %159 = vector.shape_cast %158 : vector<1x8x64xf32> to vector<8x64xf32>
    %cst_62 = arith.constant dense<0.000000e+00> : vector<8x1000xf32>
    %160 = tpu.matmul %159, %157, %cst_62 {dimension_numbers = #tpu.dot_dimension_numbers<[1], [0], [0], [1], [0, 0, 1, 1], [], []>} : vector<8x64xf32>, vector<64x1000xf32>, vector<8x1000xf32> -> vector<8x1000xf32>
    %161 = vector.broadcast %2 : vector<1x1000xf32> to vector<8x1000xf32>
    %162 = arith.mulf %160, %161 : vector<8x1000xf32>
    %cst_63 = arith.constant dense<0.000000e+00> : vector<8xf32>
    %163 = vector.multi_reduction <add>, %162, %cst_63 [1] : vector<8x1000xf32> to vector<8xf32>
    %164 = vector.shape_cast %163 : vector<8xf32> to vector<8x1xf32>
    %165 = arith.addf %141, %164 : vector<8x1xf32>
    %166 = arith.mulf %162, %160 : vector<8x1000xf32>
    %cst_64 = arith.constant dense<0.000000e+00> : vector<8xf32>
    %167 = vector.multi_reduction <add>, %166, %cst_64 [1] : vector<8x1000xf32> to vector<8xf32>
    %168 = vector.shape_cast %167 : vector<8xf32> to vector<8x1xf32>
    %169 = arith.addf %145, %168 : vector<8x1xf32>
    %c0_65 = arith.constant 0 : index
    %c6_66 = arith.constant 6 : index
    %c0_67 = arith.constant 0 : index
    %c0_68 = arith.constant 0 : index
    %170 = vector.load %arg4[%c0_65, %c6_66, %c0_67, %c0_68] : memref<1x8x8x1000xf32, #tpu.memory_space<vmem>>, vector<1x1x8x1000xf32>
    %171 = vector.shape_cast %170 : vector<1x1x8x1000xf32> to vector<8x1000xf32>
    %172 = vector.shape_cast %160 : vector<8x1000xf32> to vector<1x1x8x1000xf32>
    tpu.vector_store %arg4[%c0_65, %c6_66, %c0_67, %c0_68], %172 {strides = array<i32>} : memref<1x8x8x1000xf32, #tpu.memory_space<vmem>>, vector<1x1x8x1000xf32>,
    %173 = vector.extract_strided_slice %1 {offsets = [0, 111], sizes = [8, 1000], strides = [1, 1]} : vector<8x1222xf32> to vector<8x1000xf32>
    %174 = vector.extract_strided_slice %1 {offsets = [0, 112], sizes = [8, 1000], strides = [1, 1]} : vector<8x1222xf32> to vector<8x1000xf32>
    %175 = vector.extract_strided_slice %1 {offsets = [0, 121], sizes = [8, 1000], strides = [1, 1]} : vector<8x1222xf32> to vector<8x1000xf32>
    %176 = vector.extract_strided_slice %1 {offsets = [0, 122], sizes = [8, 1000], strides = [1, 1]} : vector<8x1222xf32> to vector<8x1000xf32>
    %177 = vector.extract_strided_slice %1 {offsets = [0, 211], sizes = [8, 1000], strides = [1, 1]} : vector<8x1222xf32> to vector<8x1000xf32>
    %178 = vector.extract_strided_slice %1 {offsets = [0, 212], sizes = [8, 1000], strides = [1, 1]} : vector<8x1222xf32> to vector<8x1000xf32>
    %179 = vector.extract_strided_slice %1 {offsets = [0, 221], sizes = [8, 1000], strides = [1, 1]} : vector<8x1222xf32> to vector<8x1000xf32>
    %180 = vector.extract_strided_slice %1 {offsets = [0, 222], sizes = [8, 1000], strides = [1, 1]} : vector<8x1222xf32> to vector<8x1000xf32>
    %181 = tpu.concatenate %173, %174, %175, %176, %177, %178, %179, %180 in 0 : vector<8x1000xf32>, vector<8x1000xf32>, vector<8x1000xf32>, vector<8x1000xf32>, vector<8x1000xf32>, vector<8x1000xf32>, vector<8x1000xf32>, vector<8x1000xf32> -> vector<64x1000xf32>
    %c7 = arith.constant 7 : index
    %c0_69 = arith.constant 0 : index
    %c0_70 = arith.constant 0 : index
    %182 = vector.load %arg2[%c7, %c0_69, %c0_70] : memref<8x8x64xf32, #tpu.memory_space<vmem>>, vector<1x8x64xf32>
    %183 = vector.shape_cast %182 : vector<1x8x64xf32> to vector<8x64xf32>
    %cst_71 = arith.constant dense<0.000000e+00> : vector<8x1000xf32>
    %184 = tpu.matmul %183, %181, %cst_71 {dimension_numbers = #tpu.dot_dimension_numbers<[1], [0], [0], [1], [0, 0, 1, 1], [], []>} : vector<8x64xf32>, vector<64x1000xf32>, vector<8x1000xf32> -> vector<8x1000xf32>
    %185 = vector.broadcast %2 : vector<1x1000xf32> to vector<8x1000xf32>
    %186 = arith.mulf %184, %185 : vector<8x1000xf32>
    %cst_72 = arith.constant dense<0.000000e+00> : vector<8xf32>
    %187 = vector.multi_reduction <add>, %186, %cst_72 [1] : vector<8x1000xf32> to vector<8xf32>
    %188 = vector.shape_cast %187 : vector<8xf32> to vector<8x1xf32>
    %189 = arith.addf %165, %188 : vector<8x1xf32>
    %190 = arith.mulf %186, %184 : vector<8x1000xf32>
    %cst_73 = arith.constant dense<0.000000e+00> : vector<8xf32>
    %191 = vector.multi_reduction <add>, %190, %cst_73 [1] : vector<8x1000xf32> to vector<8xf32>
    %192 = vector.shape_cast %191 : vector<8xf32> to vector<8x1xf32>
    %193 = arith.addf %169, %192 : vector<8x1xf32>
    %c0_74 = arith.constant 0 : index
    %c7_75 = arith.constant 7 : index
    %c0_76 = arith.constant 0 : index
    %c0_77 = arith.constant 0 : index
    %194 = vector.load %arg4[%c0_74, %c7_75, %c0_76, %c0_77] : memref<1x8x8x1000xf32, #tpu.memory_space<vmem>>, vector<1x1x8x1000xf32>
    %195 = vector.shape_cast %194 : vector<1x1x8x1000xf32> to vector<8x1000xf32>
    %196 = vector.shape_cast %184 : vector<8x1000xf32> to vector<1x1x8x1000xf32>
    tpu.vector_store %arg4[%c0_74, %c7_75, %c0_76, %c0_77], %196 {strides = array<i32>} : memref<1x8x8x1000xf32, #tpu.memory_space<vmem>>, vector<1x1x8x1000xf32>,
    %cst_78 = arith.constant 4.096000e+03 : f32
    %197 = vector.broadcast %cst_78 : f32 to vector<8x1xf32>
    %198 = arith.divf %189, %197 : vector<8x1xf32>
    %cst_79 = arith.constant 4.096000e+03 : f32
    %199 = vector.broadcast %cst_79 : f32 to vector<8x1xf32>
    %200 = arith.divf %193, %199 : vector<8x1xf32>
    %201 = arith.mulf %198, %198 : vector<8x1xf32>
    %202 = arith.subf %200, %201 : vector<8x1xf32>
    %cst_80 = arith.constant 9.99999974E-6 : f32
    %203 = vector.broadcast %cst_80 : f32 to vector<8x1xf32>
    %204 = arith.addf %202, %203 : vector<8x1xf32>
    %205 = math.rsqrt %204 : vector<8x1xf32>
    %cst_81 = arith.constant 0.000000e+00 : f32
    %206 = vector.broadcast %cst_81 : f32 to vector<8x1xf32>
    %207 = arith.subf %206, %198 : vector<8x1xf32>
    %208 = arith.mulf %207, %205 : vector<8x1xf32>
    %c0_82 = arith.constant 0 : index
    %c0_83 = arith.constant 0 : index
    %c0_84 = arith.constant 0 : index
    %c0_85 = arith.constant 0 : index
    %209 = vector.load %arg4[%c0_82, %c0_83, %c0_84, %c0_85] : memref<1x8x8x1000xf32, #tpu.memory_space<vmem>>, vector<1x1x8x1000xf32>
    %210 = vector.shape_cast %209 : vector<1x1x8x1000xf32> to vector<8x1000xf32>
    %211 = vector.broadcast %205 : vector<8x1xf32> to vector<8x1000xf32>
    %212 = arith.mulf %210, %211 : vector<8x1000xf32>
    %213 = vector.broadcast %208 : vector<8x1xf32> to vector<8x1000xf32>
    %214 = arith.addf %212, %213 : vector<8x1000xf32>
    %cst_86 = arith.constant 0.000000e+00 : f32
    %215 = vector.broadcast %cst_86 : f32 to vector<8x1000xf32>
    %216 = arith.maximumf %214, %215 : vector<8x1000xf32>
    %c0_87 = arith.constant 0 : index
    %c0_88 = arith.constant 0 : index
    %c0_89 = arith.constant 0 : index
    %c0_90 = arith.constant 0 : index
    %217 = vector.load %arg4[%c0_87, %c0_88, %c0_89, %c0_90] : memref<1x8x8x1000xf32, #tpu.memory_space<vmem>>, vector<1x1x8x1000xf32>
    %218 = vector.shape_cast %217 : vector<1x1x8x1000xf32> to vector<8x1000xf32>
    %219 = vector.shape_cast %216 : vector<8x1000xf32> to vector<1x1x8x1000xf32>
    tpu.vector_store %arg4[%c0_87, %c0_88, %c0_89, %c0_90], %219 {strides = array<i32>} : memref<1x8x8x1000xf32, #tpu.memory_space<vmem>>, vector<1x1x8x1000xf32>,
    %c0_91 = arith.constant 0 : index
    %c1_92 = arith.constant 1 : index
    %c0_93 = arith.constant 0 : index
    %c0_94 = arith.constant 0 : index
    %220 = vector.load %arg4[%c0_91, %c1_92, %c0_93, %c0_94] : memref<1x8x8x1000xf32, #tpu.memory_space<vmem>>, vector<1x1x8x1000xf32>
    %221 = vector.shape_cast %220 : vector<1x1x8x1000xf32> to vector<8x1000xf32>
    %222 = vector.broadcast %205 : vector<8x1xf32> to vector<8x1000xf32>
    %223 = arith.mulf %221, %222 : vector<8x1000xf32>
    %224 = vector.broadcast %208 : vector<8x1xf32> to vector<8x1000xf32>
    %225 = arith.addf %223, %224 : vector<8x1000xf32>
    %cst_95 = arith.constant 0.000000e+00 : f32
    %226 = vector.broadcast %cst_95 : f32 to vector<8x1000xf32>
    %227 = arith.maximumf %225, %226 : vector<8x1000xf32>
    %c0_96 = arith.constant 0 : index
    %c1_97 = arith.constant 1 : index
    %c0_98 = arith.constant 0 : index
    %c0_99 = arith.constant 0 : index
    %228 = vector.load %arg4[%c0_96, %c1_97, %c0_98, %c0_99] : memref<1x8x8x1000xf32, #tpu.memory_space<vmem>>, vector<1x1x8x1000xf32>
    %229 = vector.shape_cast %228 : vector<1x1x8x1000xf32> to vector<8x1000xf32>
    %230 = vector.shape_cast %227 : vector<8x1000xf32> to vector<1x1x8x1000xf32>
    tpu.vector_store %arg4[%c0_96, %c1_97, %c0_98, %c0_99], %230 {strides = array<i32>} : memref<1x8x8x1000xf32, #tpu.memory_space<vmem>>, vector<1x1x8x1000xf32>,
    %c0_100 = arith.constant 0 : index
    %c2_101 = arith.constant 2 : index
    %c0_102 = arith.constant 0 : index
    %c0_103 = arith.constant 0 : index
    %231 = vector.load %arg4[%c0_100, %c2_101, %c0_102, %c0_103] : memref<1x8x8x1000xf32, #tpu.memory_space<vmem>>, vector<1x1x8x1000xf32>
    %232 = vector.shape_cast %231 : vector<1x1x8x1000xf32> to vector<8x1000xf32>
    %233 = vector.broadcast %205 : vector<8x1xf32> to vector<8x1000xf32>
    %234 = arith.mulf %232, %233 : vector<8x1000xf32>
    %235 = vector.broadcast %208 : vector<8x1xf32> to vector<8x1000xf32>
    %236 = arith.addf %234, %235 : vector<8x1000xf32>
    %cst_104 = arith.constant 0.000000e+00 : f32
    %237 = vector.broadcast %cst_104 : f32 to vector<8x1000xf32>
    %238 = arith.maximumf %236, %237 : vector<8x1000xf32>
    %c0_105 = arith.constant 0 : index
    %c2_106 = arith.constant 2 : index
    %c0_107 = arith.constant 0 : index
    %c0_108 = arith.constant 0 : index
    %239 = vector.load %arg4[%c0_105, %c2_106, %c0_107, %c0_108] : memref<1x8x8x1000xf32, #tpu.memory_space<vmem>>, vector<1x1x8x1000xf32>
    %240 = vector.shape_cast %239 : vector<1x1x8x1000xf32> to vector<8x1000xf32>
    %241 = vector.shape_cast %238 : vector<8x1000xf32> to vector<1x1x8x1000xf32>
    tpu.vector_store %arg4[%c0_105, %c2_106, %c0_107, %c0_108], %241 {strides = array<i32>} : memref<1x8x8x1000xf32, #tpu.memory_space<vmem>>, vector<1x1x8x1000xf32>,
    %c0_109 = arith.constant 0 : index
    %c3_110 = arith.constant 3 : index
    %c0_111 = arith.constant 0 : index
    %c0_112 = arith.constant 0 : index
    %242 = vector.load %arg4[%c0_109, %c3_110, %c0_111, %c0_112] : memref<1x8x8x1000xf32, #tpu.memory_space<vmem>>, vector<1x1x8x1000xf32>
    %243 = vector.shape_cast %242 : vector<1x1x8x1000xf32> to vector<8x1000xf32>
    %244 = vector.broadcast %205 : vector<8x1xf32> to vector<8x1000xf32>
    %245 = arith.mulf %243, %244 : vector<8x1000xf32>
    %246 = vector.broadcast %208 : vector<8x1xf32> to vector<8x1000xf32>
    %247 = arith.addf %245, %246 : vector<8x1000xf32>
    %cst_113 = arith.constant 0.000000e+00 : f32
    %248 = vector.broadcast %cst_113 : f32 to vector<8x1000xf32>
    %249 = arith.maximumf %247, %248 : vector<8x1000xf32>
    %c0_114 = arith.constant 0 : index
    %c3_115 = arith.constant 3 : index
    %c0_116 = arith.constant 0 : index
    %c0_117 = arith.constant 0 : index
    %250 = vector.load %arg4[%c0_114, %c3_115, %c0_116, %c0_117] : memref<1x8x8x1000xf32, #tpu.memory_space<vmem>>, vector<1x1x8x1000xf32>
    %251 = vector.shape_cast %250 : vector<1x1x8x1000xf32> to vector<8x1000xf32>
    %252 = vector.shape_cast %249 : vector<8x1000xf32> to vector<1x1x8x1000xf32>
    tpu.vector_store %arg4[%c0_114, %c3_115, %c0_116, %c0_117], %252 {strides = array<i32>} : memref<1x8x8x1000xf32, #tpu.memory_space<vmem>>, vector<1x1x8x1000xf32>,
    %c0_118 = arith.constant 0 : index
    %c4_119 = arith.constant 4 : index
    %c0_120 = arith.constant 0 : index
    %c0_121 = arith.constant 0 : index
    %253 = vector.load %arg4[%c0_118, %c4_119, %c0_120, %c0_121] : memref<1x8x8x1000xf32, #tpu.memory_space<vmem>>, vector<1x1x8x1000xf32>
    %254 = vector.shape_cast %253 : vector<1x1x8x1000xf32> to vector<8x1000xf32>
    %255 = vector.broadcast %205 : vector<8x1xf32> to vector<8x1000xf32>
    %256 = arith.mulf %254, %255 : vector<8x1000xf32>
    %257 = vector.broadcast %208 : vector<8x1xf32> to vector<8x1000xf32>
    %258 = arith.addf %256, %257 : vector<8x1000xf32>
    %cst_122 = arith.constant 0.000000e+00 : f32
    %259 = vector.broadcast %cst_122 : f32 to vector<8x1000xf32>
    %260 = arith.maximumf %258, %259 : vector<8x1000xf32>
    %c0_123 = arith.constant 0 : index
    %c4_124 = arith.constant 4 : index
    %c0_125 = arith.constant 0 : index
    %c0_126 = arith.constant 0 : index
    %261 = vector.load %arg4[%c0_123, %c4_124, %c0_125, %c0_126] : memref<1x8x8x1000xf32, #tpu.memory_space<vmem>>, vector<1x1x8x1000xf32>
    %262 = vector.shape_cast %261 : vector<1x1x8x1000xf32> to vector<8x1000xf32>
    %263 = vector.shape_cast %260 : vector<8x1000xf32> to vector<1x1x8x1000xf32>
    tpu.vector_store %arg4[%c0_123, %c4_124, %c0_125, %c0_126], %263 {strides = array<i32>} : memref<1x8x8x1000xf32, #tpu.memory_space<vmem>>, vector<1x1x8x1000xf32>,
    %c0_127 = arith.constant 0 : index
    %c5_128 = arith.constant 5 : index
    %c0_129 = arith.constant 0 : index
    %c0_130 = arith.constant 0 : index
    %264 = vector.load %arg4[%c0_127, %c5_128, %c0_129, %c0_130] : memref<1x8x8x1000xf32, #tpu.memory_space<vmem>>, vector<1x1x8x1000xf32>
    %265 = vector.shape_cast %264 : vector<1x1x8x1000xf32> to vector<8x1000xf32>
    %266 = vector.broadcast %205 : vector<8x1xf32> to vector<8x1000xf32>
    %267 = arith.mulf %265, %266 : vector<8x1000xf32>
    %268 = vector.broadcast %208 : vector<8x1xf32> to vector<8x1000xf32>
    %269 = arith.addf %267, %268 : vector<8x1000xf32>
    %cst_131 = arith.constant 0.000000e+00 : f32
    %270 = vector.broadcast %cst_131 : f32 to vector<8x1000xf32>
    %271 = arith.maximumf %269, %270 : vector<8x1000xf32>
    %c0_132 = arith.constant 0 : index
    %c5_133 = arith.constant 5 : index
    %c0_134 = arith.constant 0 : index
    %c0_135 = arith.constant 0 : index
    %272 = vector.load %arg4[%c0_132, %c5_133, %c0_134, %c0_135] : memref<1x8x8x1000xf32, #tpu.memory_space<vmem>>, vector<1x1x8x1000xf32>
    %273 = vector.shape_cast %272 : vector<1x1x8x1000xf32> to vector<8x1000xf32>
    %274 = vector.shape_cast %271 : vector<8x1000xf32> to vector<1x1x8x1000xf32>
    tpu.vector_store %arg4[%c0_132, %c5_133, %c0_134, %c0_135], %274 {strides = array<i32>} : memref<1x8x8x1000xf32, #tpu.memory_space<vmem>>, vector<1x1x8x1000xf32>,
    %c0_136 = arith.constant 0 : index
    %c6_137 = arith.constant 6 : index
    %c0_138 = arith.constant 0 : index
    %c0_139 = arith.constant 0 : index
    %275 = vector.load %arg4[%c0_136, %c6_137, %c0_138, %c0_139] : memref<1x8x8x1000xf32, #tpu.memory_space<vmem>>, vector<1x1x8x1000xf32>
    %276 = vector.shape_cast %275 : vector<1x1x8x1000xf32> to vector<8x1000xf32>
    %277 = vector.broadcast %205 : vector<8x1xf32> to vector<8x1000xf32>
    %278 = arith.mulf %276, %277 : vector<8x1000xf32>
    %279 = vector.broadcast %208 : vector<8x1xf32> to vector<8x1000xf32>
    %280 = arith.addf %278, %279 : vector<8x1000xf32>
    %cst_140 = arith.constant 0.000000e+00 : f32
    %281 = vector.broadcast %cst_140 : f32 to vector<8x1000xf32>
    %282 = arith.maximumf %280, %281 : vector<8x1000xf32>
    %c0_141 = arith.constant 0 : index
    %c6_142 = arith.constant 6 : index
    %c0_143 = arith.constant 0 : index
    %c0_144 = arith.constant 0 : index
    %283 = vector.load %arg4[%c0_141, %c6_142, %c0_143, %c0_144] : memref<1x8x8x1000xf32, #tpu.memory_space<vmem>>, vector<1x1x8x1000xf32>
    %284 = vector.shape_cast %283 : vector<1x1x8x1000xf32> to vector<8x1000xf32>
    %285 = vector.shape_cast %282 : vector<8x1000xf32> to vector<1x1x8x1000xf32>
    tpu.vector_store %arg4[%c0_141, %c6_142, %c0_143, %c0_144], %285 {strides = array<i32>} : memref<1x8x8x1000xf32, #tpu.memory_space<vmem>>, vector<1x1x8x1000xf32>,
    %c0_145 = arith.constant 0 : index
    %c7_146 = arith.constant 7 : index
    %c0_147 = arith.constant 0 : index
    %c0_148 = arith.constant 0 : index
    %286 = vector.load %arg4[%c0_145, %c7_146, %c0_147, %c0_148] : memref<1x8x8x1000xf32, #tpu.memory_space<vmem>>, vector<1x1x8x1000xf32>
    %287 = vector.shape_cast %286 : vector<1x1x8x1000xf32> to vector<8x1000xf32>
    %288 = vector.broadcast %205 : vector<8x1xf32> to vector<8x1000xf32>
    %289 = arith.mulf %287, %288 : vector<8x1000xf32>
    %290 = vector.broadcast %208 : vector<8x1xf32> to vector<8x1000xf32>
    %291 = arith.addf %289, %290 : vector<8x1000xf32>
    %cst_149 = arith.constant 0.000000e+00 : f32
    %292 = vector.broadcast %cst_149 : f32 to vector<8x1000xf32>
    %293 = arith.maximumf %291, %292 : vector<8x1000xf32>
    %c0_150 = arith.constant 0 : index
    %c7_151 = arith.constant 7 : index
    %c0_152 = arith.constant 0 : index
    %c0_153 = arith.constant 0 : index
    %294 = vector.load %arg4[%c0_150, %c7_151, %c0_152, %c0_153] : memref<1x8x8x1000xf32, #tpu.memory_space<vmem>>, vector<1x1x8x1000xf32>
    %295 = vector.shape_cast %294 : vector<1x1x8x1000xf32> to vector<8x1000xf32>
    %296 = vector.shape_cast %293 : vector<8x1000xf32> to vector<1x1x8x1000xf32>
    tpu.vector_store %arg4[%c0_150, %c7_151, %c0_152, %c0_153], %296 {strides = array<i32>} : memref<1x8x8x1000xf32, #tpu.memory_space<vmem>>, vector<1x1x8x1000xf32>,
    return
  }
  func.func @transform_0(%arg0: i32) -> (i32, i32, i32) {
    %c0_i32 = arith.constant 0 : i32
    %c0_i32_0 = arith.constant 0 : i32
    %c0_i32_1 = arith.constant 0 : i32
    return %arg0, %c0_i32, %c0_i32_0 : i32, i32, i32
  }
  func.func @transform_1(%arg0: i32) -> (i32, i32, i32) {
    %c0_i32 = arith.constant 0 : i32
    %c0_i32_0 = arith.constant 0 : i32
    %c0_i32_1 = arith.constant 0 : i32
    %c0_i32_2 = arith.constant 0 : i32
    return %c0_i32, %c0_i32_0, %c0_i32_1 : i32, i32, i32
  }
  func.func @transform_2(%arg0: i32) -> (i32, i32) {
    %c0_i32 = arith.constant 0 : i32
    %c0_i32_0 = arith.constant 0 : i32
    %c0_i32_1 = arith.constant 0 : i32
    return %c0_i32, %c0_i32_0 : i32, i32
  }
  func.func @transform_3(%arg0: i32) -> (i32, i32, i32, i32) {
    %c0_i32 = arith.constant 0 : i32
    %c0_i32_0 = arith.constant 0 : i32
    %c0_i32_1 = arith.constant 0 : i32
    %c0_i32_2 = arith.constant 0 : i32
    return %arg0, %c0_i32, %c0_i32_0, %c0_i32_1 : i32, i32, i32, i32
  }
}

</mosaic_0001>

<llo_original>
// kernel: tpu_custom_call.1
$region0: #{tpu_custom_call.1}
  #allocation0 [shape = 'u32[]', space=smem, size = 0x4, offset = 0x4, fixed_abs, tag = 'smem constant byte address 0x4 - core index']
  #allocation1 [shape = 'u32[144,128]{1,0:T(1,128)}', space=vmem, size = 0x12000, scoped, tag = 'internal scratch']
  %s0 = inlined_call_operand.hbm [shape: f32[2,8,1222], index: 0, kind: input, shape index: {}]
  %s1 = inlined_call_operand.hbm [shape: f32[8,8,64], index: 1, kind: input, shape index: {}]
  %s2 = inlined_call_operand.hbm [shape: f32[1,1000], index: 2, kind: input, shape index: {}]
  %s3 = inlined_call_operand.hbm [shape: f32[2,8,8,1000], index: 3, kind: output, shape index: {}]
  %s4 = sld [smem:[#allocation0]]
  $region57: #{tpu_custom_call.1} parent=0
    _
  %s6 = ssub.s32 1, %s4
  %s7 = scalar_select 0, %s6, %s4
  $region1: #{tpu_custom_call.1} parent=0
    #allocation2 [shape = 'u8[81920]{0}', space=vmem, size = 0x14000, scoped, tag = 'input window, operand 0']
    #allocation3 [shape = 's32[2]{0}', space=sflag, size = 0x8, scoped, tag = 'scoped memory for tpu_custom_call.1']
    #allocation4 [shape = 's32[2]{0}', space=sflag, size = 0x8, scoped, tag = 'scoped memory for tpu_custom_call.1']
    #allocation5 [shape = 'u8[32768]{0}', space=vmem, size = 0x8000, scoped, tag = 'input window, operand 1, single buffered']
    #allocation6 [shape = 's32[1]{0}', space=sflag, size = 0x4, scoped, tag = 'scoped memory for tpu_custom_call.1']
    #allocation7 [shape = 'u8[4096]{0}', space=vmem, size = 0x1000, scoped, tag = 'input window, operand 2, single buffered']
    #allocation8 [shape = 'u8[524288]{0}', space=vmem, size = 0x80000, scoped, tag = 'output window, operand 0']
    %8 = vsyncpa [#allocation3], 0
    %s9 = scalar_lea.sflag [#allocation3], 1
    %10 = vsyncpa %s9, 0
    %11 = vsyncpa [#allocation6], 0
    %12 = vsyncpa [#allocation4], 0
    %s13 = scalar_lea.sflag [#allocation4], 1
    %14 = vsyncpa %s13, 0
    loop: start=0, step=1, limit=4
    $region2: #{tpu_custom_call.1} parent=1 // loop_pre_header
      _
    $region3: #{tpu_custom_call.1} parent=1 // loop_header
      %s16 = sphi 0, %s20
      %p17 = scmp.ge.s32.totalorder %s16, 4
      %s26 = sphi 0, %s28
      %s29 = sphi 0, %s26
      %s30 = sphi 0, %s29
      %s46 = sphi 0, %s30
      %s50 = sphi 0, %s50
      %s52 = sphi 0, %s50
      %s53 = sphi 0, %s52
      %s67 = sphi 0, %s53
      %s71 = sphi 0, %s71
      %s73 = sphi 0, %s71
      %s74 = sphi 0, %s73
      %s88 = sphi 0, %s74
      %s94 = sphi 0, %s96
      %s97 = sphi 0, %s94
      %s98 = sphi 0, %s97
      %s114 = sphi 0, %s98
    $region4: #{tpu_custom_call.1} parent=1 // loop_header_branch
      %19 = sbr.rel (%p17) target = $region8
    $region5: #{tpu_custom_call.1} parent=1 // loop_body
      %s21 = ssub.s32 %s16, 1
      %s22 = ssub.s32 %s16, 2
      %s23 = sadd.s32 %s16, 1
      %s24 = ssub.s32 %s16, %s23
      %p25 = scmp.eq.s32.totalorder %s24, 0
      %s27 = sadd.s32 %s26, 1
      %s28 = scalar_select %p25, %s26, %s27
      %p31 = pneg %p25
      %p32 = scmp.eq.s32.totalorder %s16, 1
      %p33 = por %p31, %p32
      %p34 = scmp.ne.s32.totalorder %s26, %s29
      %p35 = scmp.eq.s32.totalorder %s16, 0
      %p36 = por %p34, %p35
      %p37 = scmp.ne.s32.totalorder %s26, %s29
      %p38 = scmp.eq.s32.totalorder %s21, 1
      %p39 = por %p37, %p38
      %p40 = scmp.ne.s32.totalorder %s29, %s30
      %p41 = scmp.eq.s32.totalorder %s21, 0
      %p42 = por %p40, %p41
      %p43 = scmp.ne.s32.totalorder %s29, %s30
      %p44 = scmp.eq.s32.totalorder %s22, 1
      %p45 = por %p43, %p44
      %p47 = scmp.ne.s32.totalorder %s30, %s46
      %p48 = scmp.eq.s32.totalorder %s22, 0
      %p49 = por %p47, %p48
      %s51 = sadd.s32 %s50, 1
      %p54 = scmp.eq.s32.totalorder %s16, 1
      %p55 = scmp.ne.s32.totalorder %s50, %s52
      %p56 = scmp.eq.s32.totalorder %s16, 0
      %p57 = por %p55, %p56
      %p58 = scmp.ne.s32.totalorder %s50, %s52
      %p59 = scmp.eq.s32.totalorder %s21, 1
      %p60 = por %p58, %p59
      %p61 = scmp.ne.s32.totalorder %s52, %s53
      %p62 = scmp.eq.s32.totalorder %s21, 0
      %p63 = por %p61, %p62
      %p64 = scmp.ne.s32.totalorder %s52, %s53
      %p65 = scmp.eq.s32.totalorder %s22, 1
      %p66 = por %p64, %p65
      %p68 = scmp.ne.s32.totalorder %s53, %s67
      %p69 = scmp.eq.s32.totalorder %s22, 0
      %p70 = por %p68, %p69
      %s72 = sadd.s32 %s71, 1
      %p75 = scmp.eq.s32.totalorder %s16, 1
      %p76 = scmp.ne.s32.totalorder %s71, %s73
      %p77 = scmp.eq.s32.totalorder %s16, 0
      %p78 = por %p76, %p77
      %p79 = scmp.ne.s32.totalorder %s71, %s73
      %p80 = scmp.eq.s32.totalorder %s21, 1
      %p81 = por %p79, %p80
      %p82 = scmp.ne.s32.totalorder %s73, %s74
      %p83 = scmp.eq.s32.totalorder %s21, 0
      %p84 = por %p82, %p83
      %p85 = scmp.ne.s32.totalorder %s73, %s74
      %p86 = scmp.eq.s32.totalorder %s22, 1
      %p87 = por %p85, %p86
      %p89 = scmp.ne.s32.totalorder %s74, %s88
      %p90 = scmp.eq.s32.totalorder %s22, 0
      %p91 = por %p89, %p90
      %s92 = ssub.s32 %s16, %s23
      %p93 = scmp.eq.s32.totalorder %s92, 0
      %s95 = sadd.s32 %s94, 1
      %s96 = scalar_select %p93, %s94, %s95
      %p99 = pneg %p93
      %p100 = scmp.eq.s32.totalorder %s16, 1
      %p101 = por %p99, %p100
      %p102 = scmp.ne.s32.totalorder %s94, %s97
      %p103 = scmp.eq.s32.totalorder %s16, 0
      %p104 = por %p102, %p103
      %p105 = scmp.ne.s32.totalorder %s94, %s97
      %p106 = scmp.eq.s32.totalorder %s21, 1
      %p107 = por %p105, %p106
      %p108 = scmp.ne.s32.totalorder %s97, %s98
      %p109 = scmp.eq.s32.totalorder %s21, 0
      %p110 = por %p108, %p109
      %p111 = scmp.ne.s32.totalorder %s97, %s98
      %p112 = scmp.eq.s32.totalorder %s22, 1
      %p113 = por %p111, %p112
      %p115 = scmp.ne.s32.totalorder %s98, %s114
      %p116 = scmp.eq.s32.totalorder %s22, 0
      %p117 = por %p115, %p116
      %p118 = scmp.le.s32.totalorder 1, %s16
      %p119 = scmp.lt.s32.totalorder %s16, 3
      %p120 = pnand %p118, %p119
      %p121 = pneg %p120
      // Predicated region
      $region9: #{tpu_custom_call.1} parent=5 // pred_check
        _
      $region10: #{tpu_custom_call.1} parent=5 // pred_check_branch
        %123 = sbr.rel (%p120) target = $region12
      $region11: #{tpu_custom_call.1} parent=5 // pred_region
        %s124 = ssub.s32 %s16, 1
        // Predicated region
        $region13: #{tpu_custom_call.1} parent=11 // pred_check
          %p125 = pneg %p63
        $region14: #{tpu_custom_call.1} parent=11 // pred_check_branch
          %127 = sbr.rel (%p125) target = $region16
        $region15: #{tpu_custom_call.1} parent=11 // pred_region
          %s129 = ssub.s32 1024, 1024
          %130 = vsyncadd [#allocation6], %s129
          %s131 = sshll.u32 [#allocation5], 4
          %s132 = int_to_ptr.vmem [resolvable:$true] %s131
          %137 = dma.hbm_to_vmem [thread:$0]  %s1, 1024, %s132, [#allocation6], 128, 128, 8
        $region16: #{tpu_custom_call.1} parent=11 // pred_fallthru
          _
        // Predicated region
        $region17: #{tpu_custom_call.1} parent=11 // pred_check
          %p138 = pneg %p84
        $region18: #{tpu_custom_call.1} parent=11 // pred_check_branch
          %140 = sbr.rel (%p138) target = $region20
        $region19: #{tpu_custom_call.1} parent=11 // pred_region
          %s142 = ssub.s32 128, 128
          %143 = vsyncadd [#allocation6], %s142
          %s145 = sshll.u32 [#allocation7], 4
          %s146 = int_to_ptr.vmem [resolvable:$true] %s145
          %148 = dma.hbm_to_vmem [thread:$0]  %s2, 128, %s146, [#allocation6]
        $region20: #{tpu_custom_call.1} parent=11 // pred_fallthru
          _
      $region12: #{tpu_custom_call.1} parent=5 // pred_fallthru
        _
      %p149 = scmp.lt.s32.totalorder %s16, 2
      // Predicated region
      $region21: #{tpu_custom_call.1} parent=5 // pred_check
        %p150 = pneg %p149
      $region22: #{tpu_custom_call.1} parent=5 // pred_check_branch
        %152 = sbr.rel (%p150) target = $region24
      $region23: #{tpu_custom_call.1} parent=5 // pred_region
        // Predicated region
        $region25: #{tpu_custom_call.1} parent=23 // pred_check
          %p153 = pneg %p36
        $region26: #{tpu_custom_call.1} parent=23 // pred_check_branch
          %155 = sbr.rel (%p153) target = $region28
        $region27: #{tpu_custom_call.1} parent=23 // pred_region
          %s156 = sand.u32 %s26, 1
          %s157 = scalar_lea.sflag [#allocation3], %s156
          %s158 = sand.u32 %s26, 1
          %s159 = smul.addr %s158, 80
          %s160 = scalar_lea.vmem [#allocation2], %s159
          %s162 = ssub.s32 1280, 1280
          %163 = vsyncadd %s157, %s162
          %s164 = smul.addr %s16, 10
          %s165 = smul.addr %s164, 128
          %s166 = scalar_lea.hbm %s0, %s165
          %s168 = sshll.u32 %s160, 4
          %s169 = int_to_ptr.vmem [resolvable:$true] %s168
          %171 = dma.hbm_to_vmem [thread:$0]  %s166, 1280, %s169, %s157
        $region28: #{tpu_custom_call.1} parent=23 // pred_fallthru
          _
      $region24: #{tpu_custom_call.1} parent=5 // pred_fallthru
        _
      %p172 = scmp.le.s32.totalorder 1, %s16
      %p173 = scmp.lt.s32.totalorder %s16, 3
      %p174 = pnand %p172, %p173
      %p175 = pneg %p174
      // Predicated region
      $region29: #{tpu_custom_call.1} parent=5 // pred_check
        _
      $region30: #{tpu_custom_call.1} parent=5 // pred_check_branch
        %177 = sbr.rel (%p174) target = $region32
      $region31: #{tpu_custom_call.1} parent=5 // pred_region
        %s178 = ssub.s32 %s16, 1
        %s179 = sand.u32 %s29, 1
        %s180 = scalar_lea.sflag [#allocation3], %s179
        %s181 = sand.u32 %s29, 1
        %s182 = smul.addr %s181, 80
        %s183 = scalar_lea.vmem [#allocation2], %s182
        // Predicated region
        $region33: #{tpu_custom_call.1} parent=31 // pred_check
          %p184 = pneg %p42
        $region34: #{tpu_custom_call.1} parent=31 // pred_check_branch
          %186 = sbr.rel (%p184) target = $region36
        $region35: #{tpu_custom_call.1} parent=31 // pred_region
          %187 = dma.done %s180, 1280
        $region36: #{tpu_custom_call.1} parent=31 // pred_fallthru
          _
        // Predicated region
        $region37: #{tpu_custom_call.1} parent=31 // pred_check
          %p188 = pneg %p63
        $region38: #{tpu_custom_call.1} parent=31 // pred_check_branch
          %190 = sbr.rel (%p188) target = $region40
        $region39: #{tpu_custom_call.1} parent=31 // pred_region
          %191 = dma.done [#allocation6], 1024
        $region40: #{tpu_custom_call.1} parent=31 // pred_fallthru
          _
        // Predicated region
        $region41: #{tpu_custom_call.1} parent=31 // pred_check
          %p192 = pneg %p84
        $region42: #{tpu_custom_call.1} parent=31 // pred_check_branch
          %194 = sbr.rel (%p192) target = $region44
        $region43: #{tpu_custom_call.1} parent=31 // pred_region
          %195 = dma.done [#allocation6], 128
        $region44: #{tpu_custom_call.1} parent=31 // pred_fallthru
          _
        %s196 = sand.u32 %s29, 1
        %s197 = scalar_lea.sflag [#allocation3], %s196
        %s198 = sand.u32 %s29, 1
        %s199 = smul.addr %s198, 80
        %s200 = scalar_lea.vmem [#allocation2], %s199
        %p201 = pneg %p42
        %p202 = pneg %p39
        %p203 = pneg %p63
        %p204 = pneg %p60
        %p205 = pneg %p84
        %p206 = pneg %p81
        %p207 = pneg %p110
        %p208 = pneg %p107
        %s209 = sand.u32 %s97, 1
        %s210 = scalar_lea.sflag [#allocation4], %s209
        %s211 = sand.u32 %s97, 1
        %s212 = smul.addr %s211, 512
        %s213 = scalar_lea.vmem [#allocation8], %s212
        %v214 = vld [vmem:[%s183] sm:$0xff]
        %v215 = vld [vmem:[%s183 + $0x8] sm:$0xff]
        %v216 = vld [vmem:[%s183 + $0x10] sm:$0xff]
        %v217 = vld [vmem:[%s183 + $0x18] sm:$0xff]
        %v218 = vld [vmem:[%s183 + $0x20] sm:$0xff]
        %v219 = vld [vmem:[%s183 + $0x28] sm:$0xff]
        %v220 = vld [vmem:[%s183 + $0x30] sm:$0xff]
        %v221 = vld [vmem:[%s183 + $0x38] sm:$0xff]
        %v222 = vld [vmem:[%s183 + $0x40] sm:$0xff]
        %v223 = vld [vmem:[%s183 + $0x48] sm:$0xff]
        %v224 = vld [vmem:[#allocation7] sm:$0xff]
        %233 = vrot.lane.b32.xlu0 %v214, 127
        %v234 = vpop.permute.xlu0 %233
        %235 = vrot.lane.b32.xlu0 %v215, 127
        %v236 = vpop.permute.xlu0 %235
        %237 = vrot.lane.b32.xlu0 %v216, 127
        %v238 = vpop.permute.xlu0 %237
        %239 = vrot.lane.b32.xlu0 %v217, 127
        %v240 = vpop.permute.xlu0 %239
        %241 = vrot.lane.b32.xlu0 %v218, 127
        %v242 = vpop.permute.xlu0 %241
        %243 = vrot.lane.b32.xlu0 %v219, 127
        %v244 = vpop.permute.xlu0 %243
        %245 = vrot.lane.b32.xlu0 %v220, 127
        %v246 = vpop.permute.xlu0 %245
        %247 = vrot.lane.b32.xlu0 %v221, 127
        %v248 = vpop.permute.xlu0 %247
        %vm249 = vcmask 1039360
        %v250 = vsel %vm249, %v234, %v236
        %v251 = vsel %vm249, %v236, %v238
        %v252 = vsel %vm249, %v238, %v240
        %v253 = vsel %vm249, %v240, %v242
        %v254 = vsel %vm249, %v242, %v244
        %v255 = vsel %vm249, %v244, %v246
        %v256 = vsel %vm249, %v246, %v248
        %265 = vrot.lane.b32.xlu0 %v214, 118
        %v266 = vpop.permute.xlu0 %265
        %267 = vrot.lane.b32.xlu0 %v215, 118
        %v268 = vpop.permute.xlu0 %267
        %269 = vrot.lane.b32.xlu0 %v216, 118
        %v270 = vpop.permute.xlu0 %269
        %271 = vrot.lane.b32.xlu0 %v217, 118
        %v272 = vpop.permute.xlu0 %271
        %273 = vrot.lane.b32.xlu0 %v218, 118
        %v274 = vpop.permute.xlu0 %273
        %275 = vrot.lane.b32.xlu0 %v219, 118
        %v276 = vpop.permute.xlu0 %275
        %277 = vrot.lane.b32.xlu0 %v220, 118
        %v278 = vpop.permute.xlu0 %277
        %279 = vrot.lane.b32.xlu0 %v221, 118
        %v280 = vpop.permute.xlu0 %279
        %vm281 = vcmask 965632
        %v282 = vsel %vm281, %v266, %v268
        %v283 = vsel %vm281, %v268, %v270
        %v284 = vsel %vm281, %v270, %v272
        %v285 = vsel %vm281, %v272, %v274
        %v286 = vsel %vm281, %v274, %v276
        %v287 = vsel %vm281, %v276, %v278
        %v288 = vsel %vm281, %v278, %v280
        %297 = vrot.lane.b32.xlu0 %v214, 117
        %v298 = vpop.permute.xlu0 %297
        %299 = vrot.lane.b32.xlu0 %v215, 117
        %v300 = vpop.permute.xlu0 %299
        %301 = vrot.lane.b32.xlu0 %v216, 117
        %v302 = vpop.permute.xlu0 %301
        %303 = vrot.lane.b32.xlu0 %v217, 117
        %v304 = vpop.permute.xlu0 %303
        %305 = vrot.lane.b32.xlu0 %v218, 117
        %v306 = vpop.permute.xlu0 %305
        %307 = vrot.lane.b32.xlu0 %v219, 117
        %v308 = vpop.permute.xlu0 %307
        %309 = vrot.lane.b32.xlu0 %v220, 117
        %v310 = vpop.permute.xlu0 %309
        %311 = vrot.lane.b32.xlu0 %v221, 117
        %v312 = vpop.permute.xlu0 %311
        %vm313 = vcmask 957440
        %v314 = vsel %vm313, %v298, %v300
        %v315 = vsel %vm313, %v300, %v302
        %v316 = vsel %vm313, %v302, %v304
        %v317 = vsel %vm313, %v304, %v306
        %v318 = vsel %vm313, %v306, %v308
        %v319 = vsel %vm313, %v308, %v310
        %v320 = vsel %vm313, %v310, %v312
        %330 = vrot.lane.b32.xlu0 %v214, 28
        %v331 = vpop.permute.xlu0 %330
        %332 = vrot.lane.b32.xlu0 %v215, 28
        %v333 = vpop.permute.xlu0 %332
        %334 = vrot.lane.b32.xlu0 %v216, 28
        %v335 = vpop.permute.xlu0 %334
        %336 = vrot.lane.b32.xlu0 %v217, 28
        %v337 = vpop.permute.xlu0 %336
        %338 = vrot.lane.b32.xlu0 %v218, 28
        %v339 = vpop.permute.xlu0 %338
        %340 = vrot.lane.b32.xlu0 %v219, 28
        %v341 = vpop.permute.xlu0 %340
        %342 = vrot.lane.b32.xlu0 %v220, 28
        %v343 = vpop.permute.xlu0 %342
        %344 = vrot.lane.b32.xlu0 %v221, 28
        %v345 = vpop.permute.xlu0 %344
        %346 = vrot.lane.b32.xlu0 %v222, 28
        %v347 = vpop.permute.xlu0 %346
        %vm348 = vcmask 228352
        %v349 = vsel %vm348, %v331, %v333
        %v350 = vsel %vm348, %v333, %v335
        %v351 = vsel %vm348, %v335, %v337
        %v352 = vsel %vm348, %v337, %v339
        %v353 = vsel %vm348, %v339, %v341
        %v354 = vsel %vm348, %v341, %v343
        %v355 = vsel %vm348, %v343, %v345
        %v356 = vsel %vm348, %v345, %v347
        %365 = vrot.lane.b32.xlu0 %v214, 27
        %v366 = vpop.permute.xlu0 %365
        %367 = vrot.lane.b32.xlu0 %v215, 27
        %v368 = vpop.permute.xlu0 %367
        %369 = vrot.lane.b32.xlu0 %v216, 27
        %v370 = vpop.permute.xlu0 %369
        %371 = vrot.lane.b32.xlu0 %v217, 27
        %v372 = vpop.permute.xlu0 %371
        %373 = vrot.lane.b32.xlu0 %v218, 27
        %v374 = vpop.permute.xlu0 %373
        %375 = vrot.lane.b32.xlu0 %v219, 27
        %v376 = vpop.permute.xlu0 %375
        %377 = vrot.lane.b32.xlu0 %v220, 27
        %v378 = vpop.permute.xlu0 %377
        %379 = vrot.lane.b32.xlu0 %v221, 27
        %v380 = vpop.permute.xlu0 %379
        %381 = vrot.lane.b32.xlu0 %v222, 27
        %v382 = vpop.permute.xlu0 %381
        %vm383 = vcmask 220160
        %v384 = vsel %vm383, %v366, %v368
        %v385 = vsel %vm383, %v368, %v370
        %v386 = vsel %vm383, %v370, %v372
        %v387 = vsel %vm383, %v372, %v374
        %v388 = vsel %vm383, %v374, %v376
        %v389 = vsel %vm383, %v376, %v378
        %v390 = vsel %vm383, %v378, %v380
        %v391 = vsel %vm383, %v380, %v382
        %400 = vrot.lane.b32.xlu0 %v214, 18
        %v401 = vpop.permute.xlu0 %400
        %402 = vrot.lane.b32.xlu0 %v215, 18
        %v403 = vpop.permute.xlu0 %402
        %404 = vrot.lane.b32.xlu0 %v216, 18
        %v405 = vpop.permute.xlu0 %404
        %406 = vrot.lane.b32.xlu0 %v217, 18
        %v407 = vpop.permute.xlu0 %406
        %408 = vrot.lane.b32.xlu0 %v218, 18
        %v409 = vpop.permute.xlu0 %408
        %410 = vrot.lane.b32.xlu0 %v219, 18
        %v411 = vpop.permute.xlu0 %410
        %412 = vrot.lane.b32.xlu0 %v220, 18
        %v413 = vpop.permute.xlu0 %412
        %414 = vrot.lane.b32.xlu0 %v221, 18
        %v415 = vpop.permute.xlu0 %414
        %416 = vrot.lane.b32.xlu0 %v222, 18
        %v417 = vpop.permute.xlu0 %416
        %vm418 = vcmask 146432
        %v419 = vsel %vm418, %v401, %v403
        %v420 = vsel %vm418, %v403, %v405
        %v421 = vsel %vm418, %v405, %v407
        %v422 = vsel %vm418, %v407, %v409
        %v423 = vsel %vm418, %v409, %v411
        %v424 = vsel %vm418, %v411, %v413
        %v425 = vsel %vm418, %v413, %v415
        %v426 = vsel %vm418, %v415, %v417
        %435 = vrot.lane.b32.xlu0 %v214, 17
        %v436 = vpop.permute.xlu0 %435
        %437 = vrot.lane.b32.xlu0 %v215, 17
        %v438 = vpop.permute.xlu0 %437
        %439 = vrot.lane.b32.xlu0 %v216, 17
        %v440 = vpop.permute.xlu0 %439
        %441 = vrot.lane.b32.xlu0 %v217, 17
        %v442 = vpop.permute.xlu0 %441
        %443 = vrot.lane.b32.xlu0 %v218, 17
        %v444 = vpop.permute.xlu0 %443
        %445 = vrot.lane.b32.xlu0 %v219, 17
        %v446 = vpop.permute.xlu0 %445
        %447 = vrot.lane.b32.xlu0 %v220, 17
        %v448 = vpop.permute.xlu0 %447
        %449 = vrot.lane.b32.xlu0 %v221, 17
        %v450 = vpop.permute.xlu0 %449
        %451 = vrot.lane.b32.xlu0 %v222, 17
        %v452 = vpop.permute.xlu0 %451
        %vm453 = vcmask 138240
        %v454 = vsel %vm453, %v436, %v438
        %v455 = vsel %vm453, %v438, %v440
        %v456 = vsel %vm453, %v440, %v442
        %v457 = vsel %vm453, %v442, %v444
        %v458 = vsel %vm453, %v444, %v446
        %v459 = vsel %vm453, %v446, %v448
        %v460 = vsel %vm453, %v448, %v450
        %v461 = vsel %vm453, %v450, %v452
        %v470 = vld [vmem:[#allocation5] sm:$0xff]
        %vm471 = vcmask 523264
        %v473 = vsel %vm471, %v470, 0
        %475 = vmatprep.subr.mxu0 %v215
        %476 = vmatpush1.msra.mxu0 %v214
        %477 = vmatprep.subr.mxu0 %v251
        %478 = vmatpush1.msra.mxu0 %v250
        %479 = vmatprep.subr.mxu0 %v283
        %480 = vmatpush1.msra.mxu0 %v282
        %481 = vmatprep.subr.mxu0 %v315
        %482 = vmatpush1.msra.mxu0 %v314
        %483 = vmatprep.subr.mxu0 %v350
        %484 = vmatpush1.msra.mxu0 %v349
        %485 = vmatprep.subr.mxu0 %v385
        %486 = vmatpush1.msra.mxu0 %v384
        %487 = vmatprep.subr.mxu0 %v420
        %488 = vmatpush1.msra.mxu0 %v419
        %489 = vmatprep.subr.mxu0 %v455
        %490 = vmatpush1.msra.mxu0 %v454
        %491 = vmatprep.subr.mxu0 0.0
        %492 = vmatpush1.msra.mxu0 0.0
        %493 = vmatprep.subr.mxu0 0.0
        %494 = vmatpush1.msra.mxu0 0.0
        %495 = vmatprep.subr.mxu0 0.0
        %496 = vmatpush1.msra.mxu0 0.0
        %497 = vmatprep.subr.mxu0 0.0
        %498 = vmatpush1.msra.mxu0 0.0
        %499 = vmatprep.subr.mxu0 0.0
        %500 = vmatpush1.msra.mxu0 0.0
        %501 = vmatprep.subr.mxu0 0.0
        %502 = vmatpush1.msra.mxu0 0.0
        %503 = vmatprep.subr.mxu0 0.0
        %504 = vmatpush1.msra.mxu0 0.0
        %505 = vmatprep.subr.mxu0 0.0
        %506 = vmatpush1.msra.mxu0 0.0
        %507 = vmatprep.subr.mxu0 0.0
        %508 = vmatpush1.msra.mxu0 0.0
        %509 = vmatprep.subr.mxu0 0.0
        %510 = vmatpush1.msra.mxu0 0.0
        %511 = vmatprep.subr.mxu0 0.0
        %512 = vmatpush1.msra.mxu0 0.0
        %513 = vmatprep.subr.mxu0 0.0
        %514 = vmatpush1.msra.mxu0 0.0
        %515 = vmatprep.subr.mxu0 0.0
        %516 = vmatpush1.msra.mxu0 0.0
        %517 = vmatprep.subr.mxu0 0.0
        %518 = vmatpush1.msra.mxu0 0.0
        %519 = vmatprep.subr.mxu0 0.0
        %520 = vmatpush1.msra.mxu0 0.0
        %521 = vmatprep.subr.mxu0 0.0
        %522 = vmatpush1.msra.mxu0 0.0
        %523 = vmatprep.subr.mxu0 0.0
        %524 = vmatpush1.msra.mxu0 0.0
        %525 = vmatprep.subr.mxu0 0.0
        %526 = vmatpush1.msra.mxu0 0.0
        %527 = vmatprep.subr.mxu0 0.0
        %528 = vmatpush1.msra.mxu0 0.0
        %529 = vmatprep.subr.mxu0 0.0
        %530 = vmatpush1.msra.mxu0 0.0
        %531 = vmatprep.subr.mxu0 0.0
        %532 = vmatpush1.msra.mxu0 0.0
        %533 = vmatprep.subr.mxu0 0.0
        %534 = vmatpush1.msra.mxu0 0.0
        %535 = vmatprep.subr.mxu0 0.0
        %536 = vmatpush1.msra.mxu0 0.0
        %537 = vmatprep.subr.mxu0 0.0
        %538 = vmatpush1.msra.mxu0 0.0
        %539 = vmatprep.mubr.f32.mxu0 0.0
        %540 = vmatmul.mubr.f32.gmra.mrb[0].mxu0 %v473
        %v541 = vpop.f32.mrb[0].mxu0
        %v542 = vadd.f32 0.0, %v541
        %v543 = vpop.f32.mrb[0].mxu0
        %v544 = vadd.f32 0.0, %v543
        %545 = vdwg.mxu0
        %546 = vmatprep.subr.mxu0 %v217
        %547 = vmatpush1.msra.mxu0 %v216
        %548 = vmatprep.subr.mxu0 %v253
        %549 = vmatpush1.msra.mxu0 %v252
        %550 = vmatprep.subr.mxu0 %v285
        %551 = vmatpush1.msra.mxu0 %v284
        %552 = vmatprep.subr.mxu0 %v317
        %553 = vmatpush1.msra.mxu0 %v316
        %554 = vmatprep.subr.mxu0 %v352
        %555 = vmatpush1.msra.mxu0 %v351
        %556 = vmatprep.subr.mxu0 %v387
        %557 = vmatpush1.msra.mxu0 %v386
        %558 = vmatprep.subr.mxu0 %v422
        %559 = vmatpush1.msra.mxu0 %v421
        %560 = vmatprep.subr.mxu0 %v457
        %561 = vmatpush1.msra.mxu0 %v456
        %562 = vmatprep.subr.mxu0 0.0
        %563 = vmatpush1.msra.mxu0 0.0
        %564 = vmatprep.subr.mxu0 0.0
        %565 = vmatpush1.msra.mxu0 0.0
        %566 = vmatprep.subr.mxu0 0.0
        %567 = vmatpush1.msra.mxu0 0.0
        %568 = vmatprep.subr.mxu0 0.0
        %569 = vmatpush1.msra.mxu0 0.0
        %570 = vmatprep.subr.mxu0 0.0
        %571 = vmatpush1.msra.mxu0 0.0
        %572 = vmatprep.subr.mxu0 0.0
        %573 = vmatpush1.msra.mxu0 0.0
        %574 = vmatprep.subr.mxu0 0.0
        %575 = vmatpush1.msra.mxu0 0.0
        %576 = vmatprep.subr.mxu0 0.0
        %577 = vmatpush1.msra.mxu0 0.0
        %578 = vmatprep.subr.mxu0 0.0
        %579 = vmatpush1.msra.mxu0 0.0
        %580 = vmatprep.subr.mxu0 0.0
        %581 = vmatpush1.msra.mxu0 0.0
        %582 = vmatprep.subr.mxu0 0.0
        %583 = vmatpush1.msra.mxu0 0.0
        %584 = vmatprep.subr.mxu0 0.0
        %585 = vmatpush1.msra.mxu0 0.0
        %586 = vmatprep.subr.mxu0 0.0
        %587 = vmatpush1.msra.mxu0 0.0
        %588 = vmatprep.subr.mxu0 0.0
        %589 = vmatpush1.msra.mxu0 0.0
        %590 = vmatprep.subr.mxu0 0.0
        %591 = vmatpush1.msra.mxu0 0.0
        %592 = vmatprep.subr.mxu0 0.0
        %593 = vmatpush1.msra.mxu0 0.0
        %594 = vmatprep.subr.mxu0 0.0
        %595 = vmatpush1.msra.mxu0 0.0
        %596 = vmatprep.subr.mxu0 0.0
        %597 = vmatpush1.msra.mxu0 0.0
        %598 = vmatprep.subr.mxu0 0.0
        %599 = vmatpush1.msra.mxu0 0.0
        %600 = vmatprep.subr.mxu0 0.0
        %601 = vmatpush1.msra.mxu0 0.0
        %602 = vmatprep.subr.mxu0 0.0
        %603 = vmatpush1.msra.mxu0 0.0
        %604 = vmatprep.subr.mxu0 0.0
        %605 = vmatpush1.msra.mxu0 0.0
        %606 = vmatprep.subr.mxu0 0.0
        %607 = vmatpush1.msra.mxu0 0.0
        %608 = vmatprep.subr.mxu0 0.0
        %609 = vmatpush1.msra.mxu0 0.0
        %610 = vmatprep.mubr.f32.mxu0 0.0
        %611 = vmatmul.mubr.f32.gmra.mrb[0].mxu0 %v473
        %v612 = vpop.f32.mrb[0].mxu0
        %v613 = vadd.f32 0.0, %v612
        %v614 = vpop.f32.mrb[0].mxu0
        %v615 = vadd.f32 0.0, %v614
        %616 = vdwg.mxu0
        %617 = vmatprep.subr.mxu0 %v219
        %618 = vmatpush1.msra.mxu0 %v218
        %619 = vmatprep.subr.mxu0 %v255
        %620 = vmatpush1.msra.mxu0 %v254
        %621 = vmatprep.subr.mxu0 %v287
        %622 = vmatpush1.msra.mxu0 %v286
        %623 = vmatprep.subr.mxu0 %v319
        %624 = vmatpush1.msra.mxu0 %v318
        %625 = vmatprep.subr.mxu0 %v354
        %626 = vmatpush1.msra.mxu0 %v353
        %627 = vmatprep.subr.mxu0 %v389
        %628 = vmatpush1.msra.mxu0 %v388
        %629 = vmatprep.subr.mxu0 %v424
        %630 = vmatpush1.msra.mxu0 %v423
        %631 = vmatprep.subr.mxu0 %v459
        %632 = vmatpush1.msra.mxu0 %v458
        %633 = vmatprep.subr.mxu0 0.0
        %634 = vmatpush1.msra.mxu0 0.0
        %635 = vmatprep.subr.mxu0 0.0
        %636 = vmatpush1.msra.mxu0 0.0
        %637 = vmatprep.subr.mxu0 0.0
        %638 = vmatpush1.msra.mxu0 0.0
        %639 = vmatprep.subr.mxu0 0.0
        %640 = vmatpush1.msra.mxu0 0.0
        %641 = vmatprep.subr.mxu0 0.0
        %642 = vmatpush1.msra.mxu0 0.0
        %643 = vmatprep.subr.mxu0 0.0
        %644 = vmatpush1.msra.mxu0 0.0
        %645 = vmatprep.subr.mxu0 0.0
        %646 = vmatpush1.msra.mxu0 0.0
        %647 = vmatprep.subr.mxu0 0.0
        %648 = vmatpush1.msra.mxu0 0.0
        %649 = vmatprep.subr.mxu0 0.0
        %650 = vmatpush1.msra.mxu0 0.0
        %651 = vmatprep.subr.mxu0 0.0
        %652 = vmatpush1.msra.mxu0 0.0
        %653 = vmatprep.subr.mxu0 0.0
        %654 = vmatpush1.msra.mxu0 0.0
        %655 = vmatprep.subr.mxu0 0.0
        %656 = vmatpush1.msra.mxu0 0.0
        %657 = vmatprep.subr.mxu0 0.0
        %658 = vmatpush1.msra.mxu0 0.0
        %659 = vmatprep.subr.mxu0 0.0
        %660 = vmatpush1.msra.mxu0 0.0
        %661 = vmatprep.subr.mxu0 0.0
        %662 = vmatpush1.msra.mxu0 0.0
        %663 = vmatprep.subr.mxu0 0.0
        %664 = vmatpush1.msra.mxu0 0.0
        %665 = vmatprep.subr.mxu0 0.0
        %666 = vmatpush1.msra.mxu0 0.0
        %667 = vmatprep.subr.mxu0 0.0
        %668 = vmatpush1.msra.mxu0 0.0
        %669 = vmatprep.subr.mxu0 0.0
        %670 = vmatpush1.msra.mxu0 0.0
        %671 = vmatprep.subr.mxu0 0.0
        %672 = vmatpush1.msra.mxu0 0.0
        %673 = vmatprep.subr.mxu0 0.0
        %674 = vmatpush1.msra.mxu0 0.0
        %675 = vmatprep.subr.mxu0 0.0
        %676 = vmatpush1.msra.mxu0 0.0
        %677 = vmatprep.subr.mxu0 0.0
        %678 = vmatpush1.msra.mxu0 0.0
        %679 = vmatprep.subr.mxu0 0.0
        %680 = vmatpush1.msra.mxu0 0.0
        %681 = vmatprep.mubr.f32.mxu0 0.0
        %682 = vmatmul.mubr.f32.gmra.mrb[0].mxu0 %v473
        %v683 = vpop.f32.mrb[0].mxu0
        %v684 = vadd.f32 0.0, %v683
        %v685 = vpop.f32.mrb[0].mxu0
        %v686 = vadd.f32 0.0, %v685
        %687 = vdwg.mxu0
        %688 = vmatprep.subr.mxu0 %v221
        %689 = vmatpush1.msra.mxu0 %v220
        %690 = vmatprep.subr.mxu0 %v248
        %691 = vmatpush1.msra.mxu0 %v256
        %692 = vmatprep.subr.mxu0 %v280
        %693 = vmatpush1.msra.mxu0 %v288
        %694 = vmatprep.subr.mxu0 %v312
        %695 = vmatpush1.msra.mxu0 %v320
        %696 = vmatprep.subr.mxu0 %v356
        %697 = vmatpush1.msra.mxu0 %v355
        %698 = vmatprep.subr.mxu0 %v391
        %699 = vmatpush1.msra.mxu0 %v390
        %700 = vmatprep.subr.mxu0 %v426
        %701 = vmatpush1.msra.mxu0 %v425
        %702 = vmatprep.subr.mxu0 %v461
        %703 = vmatpush1.msra.mxu0 %v460
        %704 = vmatprep.subr.mxu0 0.0
        %705 = vmatpush1.msra.mxu0 0.0
        %706 = vmatprep.subr.mxu0 0.0
        %707 = vmatpush1.msra.mxu0 0.0
        %708 = vmatprep.subr.mxu0 0.0
        %709 = vmatpush1.msra.mxu0 0.0
        %710 = vmatprep.subr.mxu0 0.0
        %711 = vmatpush1.msra.mxu0 0.0
        %712 = vmatprep.subr.mxu0 0.0
        %713 = vmatpush1.msra.mxu0 0.0
        %714 = vmatprep.subr.mxu0 0.0
        %715 = vmatpush1.msra.mxu0 0.0
        %716 = vmatprep.subr.mxu0 0.0
        %717 = vmatpush1.msra.mxu0 0.0
        %718 = vmatprep.subr.mxu0 0.0
        %719 = vmatpush1.msra.mxu0 0.0
        %720 = vmatprep.subr.mxu0 0.0
        %721 = vmatpush1.msra.mxu0 0.0
        %722 = vmatprep.subr.mxu0 0.0
        %723 = vmatpush1.msra.mxu0 0.0
        %724 = vmatprep.subr.mxu0 0.0
        %725 = vmatpush1.msra.mxu0 0.0
        %726 = vmatprep.subr.mxu0 0.0
        %727 = vmatpush1.msra.mxu0 0.0
        %728 = vmatprep.subr.mxu0 0.0
        %729 = vmatpush1.msra.mxu0 0.0
        %730 = vmatprep.subr.mxu0 0.0
        %731 = vmatpush1.msra.mxu0 0.0
        %732 = vmatprep.subr.mxu0 0.0
        %733 = vmatpush1.msra.mxu0 0.0
        %734 = vmatprep.subr.mxu0 0.0
        %735 = vmatpush1.msra.mxu0 0.0
        %736 = vmatprep.subr.mxu0 0.0
        %737 = vmatpush1.msra.mxu0 0.0
        %738 = vmatprep.subr.mxu0 0.0
        %739 = vmatpush1.msra.mxu0 0.0
        %740 = vmatprep.subr.mxu0 0.0
        %741 = vmatpush1.msra.mxu0 0.0
        %742 = vmatprep.subr.mxu0 0.0
        %743 = vmatpush1.msra.mxu0 0.0
        %744 = vmatprep.subr.mxu0 0.0
        %745 = vmatpush1.msra.mxu0 0.0
        %746 = vmatprep.subr.mxu0 0.0
        %747 = vmatpush1.msra.mxu0 0.0
        %748 = vmatprep.subr.mxu0 0.0
        %749 = vmatpush1.msra.mxu0 0.0
        %750 = vmatprep.subr.mxu0 0.0
        %751 = vmatpush1.msra.mxu0 0.0
        %752 = vmatprep.mubr.f32.mxu0 0.0
        %753 = vmatmul.mubr.f32.gmra.mrb[0].mxu0 %v473
        %v754 = vpop.f32.mrb[0].mxu0
        %v755 = vadd.f32 0.0, %v754
        %v756 = vpop.f32.mrb[0].mxu0
        %v757 = vadd.f32 0.0, %v756
        %758 = vdwg.mxu0
        %v760 = vlaneseq
        %v761 = vshrl.u32 %v760, 7
        %v762 = vsub.s32 0, %v761
        %v763 = vrot.slane %v224, %v762
        %v764 = vlaneseq
        %v765 = vshrl.u32 %v764, 7
        %v766 = vsub.s32 1, %v765
        %v767 = vrot.slane %v224, %v766
        %v768 = vlaneseq
        %v769 = vshrl.u32 %v768, 7
        %v770 = vsub.s32 2, %v769
        %v771 = vrot.slane %v224, %v770
        %v772 = vlaneseq
        %v773 = vshrl.u32 %v772, 7
        %v774 = vsub.s32 3, %v773
        %v775 = vrot.slane %v224, %v774
        %v776 = vlaneseq
        %v777 = vshrl.u32 %v776, 7
        %v778 = vsub.s32 4, %v777
        %v779 = vrot.slane %v224, %v778
        %v780 = vlaneseq
        %v781 = vshrl.u32 %v780, 7
        %v782 = vsub.s32 5, %v781
        %v783 = vrot.slane %v224, %v782
        %v784 = vlaneseq
        %v785 = vshrl.u32 %v784, 7
        %v786 = vsub.s32 6, %v785
        %v787 = vrot.slane %v224, %v786
        %v788 = vlaneseq
        %v789 = vshrl.u32 %v788, 7
        %v790 = vsub.s32 7, %v789
        %v791 = vrot.slane %v224, %v790
        %v800 = vmul.f32 %v542, %v763
        %v801 = vmul.f32 %v544, %v767
        %v802 = vmul.f32 %v613, %v771
        %v803 = vmul.f32 %v615, %v775
        %v804 = vmul.f32 %v684, %v779
        %v805 = vmul.f32 %v686, %v783
        %v806 = vmul.f32 %v755, %v787
        %v807 = vmul.f32 %v757, %v791
        %v808 = vadd.f32 %v800, %v801
        %v809 = vadd.f32 %v808, %v802
        %v810 = vadd.f32 %v809, %v803
        %v811 = vadd.f32 %v810, %v804
        %v812 = vadd.f32 %v811, %v805
        %v813 = vadd.f32 %v812, %v806
        %vm814 = vcmask 850944
        %v815 = vsel %vm814, %v807, 0.0
        %v816 = vadd.f32 %v813, %v815
        %817 = vadd.xlane.f32.xlu0 %v816
        %v818 = vpop.xlane.xlu0 %817
        %v819 = vadd.f32 %v818, 0.0
        %v820 = vmul.f32 %v800, %v542
        %v821 = vmul.f32 %v801, %v544
        %v822 = vmul.f32 %v802, %v613
        %v823 = vmul.f32 %v803, %v615
        %v824 = vmul.f32 %v804, %v684
        %v825 = vmul.f32 %v805, %v686
        %v826 = vmul.f32 %v806, %v755
        %v827 = vmul.f32 %v807, %v757
        %v828 = vadd.f32 %v820, %v821
        %v829 = vadd.f32 %v828, %v822
        %v830 = vadd.f32 %v829, %v823
        %v831 = vadd.f32 %v830, %v824
        %v832 = vadd.f32 %v831, %v825
        %v833 = vadd.f32 %v832, %v826
        %v834 = vsel %vm814, %v827, 0.0
        %v835 = vadd.f32 %v833, %v834
        %836 = vadd.xlane.f32.xlu0 %v835
        %v837 = vpop.xlane.xlu0 %836
        %v838 = vadd.f32 %v837, 0.0
        %839 = vst [vmem:[%s213] sm:$0xff] %v542
        %840 = vst [vmem:[%s213 + $0x8] sm:$0xff] %v544
        %841 = vst [vmem:[%s213 + $0x10] sm:$0xff] %v613
        %842 = vst [vmem:[%s213 + $0x18] sm:$0xff] %v615
        %843 = vst [vmem:[%s213 + $0x20] sm:$0xff] %v684
        %844 = vst [vmem:[%s213 + $0x28] sm:$0xff] %v686
        %845 = vst [vmem:[%s213 + $0x30] sm:$0xff] %v755
        %846 = vst.msk [vmem:[%s213 + $0x38] sm:$0xff] %vm814, %v757
        %s847 = scalar_lea.vmem [#allocation5], 8
        %v848 = vld [vmem:[%s847] sm:$0xff]
        %849 = vrot.lane.b32.xlu0 %v250, 127
        %v850 = vpop.permute.xlu0 %849
        %851 = vrot.lane.b32.xlu0 %v251, 127
        %v852 = vpop.permute.xlu0 %851
        %853 = vrot.lane.b32.xlu0 %v252, 127
        %v854 = vpop.permute.xlu0 %853
        %855 = vrot.lane.b32.xlu0 %v253, 127
        %v856 = vpop.permute.xlu0 %855
        %857 = vrot.lane.b32.xlu0 %v254, 127
        %v858 = vpop.permute.xlu0 %857
        %859 = vrot.lane.b32.xlu0 %v255, 127
        %v860 = vpop.permute.xlu0 %859
        %861 = vrot.lane.b32.xlu0 %v256, 127
        %v862 = vpop.permute.xlu0 %861
        %863 = vrot.lane.b32.xlu0 %v248, 127
        %v864 = vpop.permute.xlu0 %863
        %865 = vrot.lane.b32.xlu0 %v282, 127
        %v866 = vpop.permute.xlu0 %865
        %867 = vrot.lane.b32.xlu0 %v283, 127
        %v868 = vpop.permute.xlu0 %867
        %869 = vrot.lane.b32.xlu0 %v284, 127
        %v870 = vpop.permute.xlu0 %869
        %871 = vrot.lane.b32.xlu0 %v285, 127
        %v872 = vpop.permute.xlu0 %871
        %873 = vrot.lane.b32.xlu0 %v286, 127
        %v874 = vpop.permute.xlu0 %873
        %875 = vrot.lane.b32.xlu0 %v287, 127
        %v876 = vpop.permute.xlu0 %875
        %877 = vrot.lane.b32.xlu0 %v288, 127
        %v878 = vpop.permute.xlu0 %877
        %879 = vrot.lane.b32.xlu0 %v280, 127
        %v880 = vpop.permute.xlu0 %879
        %881 = vrot.lane.b32.xlu0 %v314, 127
        %v882 = vpop.permute.xlu0 %881
        %883 = vrot.lane.b32.xlu0 %v315, 127
        %v884 = vpop.permute.xlu0 %883
        %885 = vrot.lane.b32.xlu0 %v316, 127
        %v886 = vpop.permute.xlu0 %885
        %887 = vrot.lane.b32.xlu0 %v317, 127
        %v888 = vpop.permute.xlu0 %887
        %889 = vrot.lane.b32.xlu0 %v318, 127
        %v890 = vpop.permute.xlu0 %889
        %891 = vrot.lane.b32.xlu0 %v319, 127
        %v892 = vpop.permute.xlu0 %891
        %893 = vrot.lane.b32.xlu0 %v320, 127
        %v894 = vpop.permute.xlu0 %893
        %895 = vrot.lane.b32.xlu0 %v312, 127
        %v896 = vpop.permute.xlu0 %895
        %897 = vrot.lane.b32.xlu0 %v349, 127
        %v898 = vpop.permute.xlu0 %897
        %899 = vrot.lane.b32.xlu0 %v350, 127
        %v900 = vpop.permute.xlu0 %899
        %901 = vrot.lane.b32.xlu0 %v351, 127
        %v902 = vpop.permute.xlu0 %901
        %903 = vrot.lane.b32.xlu0 %v352, 127
        %v904 = vpop.permute.xlu0 %903
        %905 = vrot.lane.b32.xlu0 %v353, 127
        %v906 = vpop.permute.xlu0 %905
        %907 = vrot.lane.b32.xlu0 %v354, 127
        %v908 = vpop.permute.xlu0 %907
        %909 = vrot.lane.b32.xlu0 %v355, 127
        %v910 = vpop.permute.xlu0 %909
        %911 = vrot.lane.b32.xlu0 %v356, 127
        %v912 = vpop.permute.xlu0 %911
        %913 = vrot.lane.b32.xlu0 %v384, 127
        %v914 = vpop.permute.xlu0 %913
        %915 = vrot.lane.b32.xlu0 %v385, 127
        %v916 = vpop.permute.xlu0 %915
        %917 = vrot.lane.b32.xlu0 %v386, 127
        %v918 = vpop.permute.xlu0 %917
        %919 = vrot.lane.b32.xlu0 %v387, 127
        %v920 = vpop.permute.xlu0 %919
        %921 = vrot.lane.b32.xlu0 %v388, 127
        %v922 = vpop.permute.xlu0 %921
        %923 = vrot.lane.b32.xlu0 %v389, 127
        %v924 = vpop.permute.xlu0 %923
        %925 = vrot.lane.b32.xlu0 %v390, 127
        %v926 = vpop.permute.xlu0 %925
        %927 = vrot.lane.b32.xlu0 %v391, 127
        %v928 = vpop.permute.xlu0 %927
        %929 = vrot.lane.b32.xlu0 %v419, 127
        %v930 = vpop.permute.xlu0 %929
        %931 = vrot.lane.b32.xlu0 %v420, 127
        %v932 = vpop.permute.xlu0 %931
        %933 = vrot.lane.b32.xlu0 %v421, 127
        %v934 = vpop.permute.xlu0 %933
        %935 = vrot.lane.b32.xlu0 %v422, 127
        %v936 = vpop.permute.xlu0 %935
        %937 = vrot.lane.b32.xlu0 %v423, 127
        %v938 = vpop.permute.xlu0 %937
        %939 = vrot.lane.b32.xlu0 %v424, 127
        %v940 = vpop.permute.xlu0 %939
        %941 = vrot.lane.b32.xlu0 %v425, 127
        %v942 = vpop.permute.xlu0 %941
        %943 = vrot.lane.b32.xlu0 %v426, 127
        %v944 = vpop.permute.xlu0 %943
        %945 = vrot.lane.b32.xlu0 %v454, 127
        %v946 = vpop.permute.xlu0 %945
        %947 = vrot.lane.b32.xlu0 %v455, 127
        %v948 = vpop.permute.xlu0 %947
        %949 = vrot.lane.b32.xlu0 %v456, 127
        %v950 = vpop.permute.xlu0 %949
        %951 = vrot.lane.b32.xlu0 %v457, 127
        %v952 = vpop.permute.xlu0 %951
        %953 = vrot.lane.b32.xlu0 %v458, 127
        %v954 = vpop.permute.xlu0 %953
        %955 = vrot.lane.b32.xlu0 %v459, 127
        %v956 = vpop.permute.xlu0 %955
        %957 = vrot.lane.b32.xlu0 %v460, 127
        %v958 = vpop.permute.xlu0 %957
        %959 = vrot.lane.b32.xlu0 %v461, 127
        %v960 = vpop.permute.xlu0 %959
        %v961 = vsel %vm249, %v850, %v852
        %v962 = vsel %vm249, %v852, %v854
        %v963 = vsel %vm249, %v854, %v856
        %v964 = vsel %vm249, %v856, %v858
        %v965 = vsel %vm249, %v858, %v860
        %v966 = vsel %vm249, %v860, %v862
        %v967 = vsel %vm249, %v862, %v864
        %v968 = vsel %vm249, %v866, %v868
        %v969 = vsel %vm249, %v868, %v870
        %v970 = vsel %vm249, %v870, %v872
        %v971 = vsel %vm249, %v872, %v874
        %v972 = vsel %vm249, %v874, %v876
        %v973 = vsel %vm249, %v876, %v878
        %v974 = vsel %vm249, %v878, %v880
        %v975 = vsel %vm249, %v882, %v884
        %v976 = vsel %vm249, %v884, %v886
        %v977 = vsel %vm249, %v886, %v888
        %v978 = vsel %vm249, %v888, %v890
        %v979 = vsel %vm249, %v890, %v892
        %v980 = vsel %vm249, %v892, %v894
        %v981 = vsel %vm249, %v894, %v896
        %v982 = vsel %vm249, %v898, %v900
        %v983 = vsel %vm249, %v900, %v902
        %v984 = vsel %vm249, %v902, %v904
        %v985 = vsel %vm249, %v904, %v906
        %v986 = vsel %vm249, %v906, %v908
        %v987 = vsel %vm249, %v908, %v910
        %v988 = vsel %vm249, %v910, %v912
        %v989 = vsel %vm249, %v914, %v916
        %v990 = vsel %vm249, %v916, %v918
        %v991 = vsel %vm249, %v918, %v920
        %v992 = vsel %vm249, %v920, %v922
        %v993 = vsel %vm249, %v922, %v924
        %v994 = vsel %vm249, %v924, %v926
        %v995 = vsel %vm249, %v926, %v928
        %v996 = vsel %vm249, %v930, %v932
        %v997 = vsel %vm249, %v932, %v934
        %v998 = vsel %vm249, %v934, %v936
        %v999 = vsel %vm249, %v936, %v938
        %v1000 = vsel %vm249, %v938, %v940
        %v1001 = vsel %vm249, %v940, %v942
        %v1002 = vsel %vm249, %v942, %v944
        %v1003 = vsel %vm249, %v946, %v948
        %v1004 = vsel %vm249, %v948, %v950
        %v1005 = vsel %vm249, %v950, %v952
        %v1006 = vsel %vm249, %v952, %v954
        %v1007 = vsel %vm249, %v954, %v956
        %v1008 = vsel %vm249, %v956, %v958
        %v1009 = vsel %vm249, %v958, %v960
        %v1067 = vsel %vm471, %v848, 0
        %1069 = vmatprep.subr.mxu0 %v251
        %1070 = vmatpush1.msra.mxu0 %v250
        %1071 = vmatprep.subr.mxu0 %v962
        %1072 = vmatpush1.msra.mxu0 %v961
        %1073 = vmatprep.subr.mxu0 %v969
        %1074 = vmatpush1.msra.mxu0 %v968
        %1075 = vmatprep.subr.mxu0 %v976
        %1076 = vmatpush1.msra.mxu0 %v975
        %1077 = vmatprep.subr.mxu0 %v983
        %1078 = vmatpush1.msra.mxu0 %v982
        %1079 = vmatprep.subr.mxu0 %v990
        %1080 = vmatpush1.msra.mxu0 %v989
        %1081 = vmatprep.subr.mxu0 %v997
        %1082 = vmatpush1.msra.mxu0 %v996
        %1083 = vmatprep.subr.mxu0 %v1004
        %1084 = vmatpush1.msra.mxu0 %v1003
        %1085 = vmatprep.subr.mxu0 0.0
        %1086 = vmatpush1.msra.mxu0 0.0
        %1087 = vmatprep.subr.mxu0 0.0
        %1088 = vmatpush1.msra.mxu0 0.0
        %1089 = vmatprep.subr.mxu0 0.0
        %1090 = vmatpush1.msra.mxu0 0.0
        %1091 = vmatprep.subr.mxu0 0.0
        %1092 = vmatpush1.msra.mxu0 0.0
        %1093 = vmatprep.subr.mxu0 0.0
        %1094 = vmatpush1.msra.mxu0 0.0
        %1095 = vmatprep.subr.mxu0 0.0
        %1096 = vmatpush1.msra.mxu0 0.0
        %1097 = vmatprep.subr.mxu0 0.0
        %1098 = vmatpush1.msra.mxu0 0.0
        %1099 = vmatprep.subr.mxu0 0.0
        %1100 = vmatpush1.msra.mxu0 0.0
        %1101 = vmatprep.subr.mxu0 0.0
        %1102 = vmatpush1.msra.mxu0 0.0
        %1103 = vmatprep.subr.mxu0 0.0
        %1104 = vmatpush1.msra.mxu0 0.0
        %1105 = vmatprep.subr.mxu0 0.0
        %1106 = vmatpush1.msra.mxu0 0.0
        %1107 = vmatprep.subr.mxu0 0.0
        %1108 = vmatpush1.msra.mxu0 0.0
        %1109 = vmatprep.subr.mxu0 0.0
        %1110 = vmatpush1.msra.mxu0 0.0
        %1111 = vmatprep.subr.mxu0 0.0
        %1112 = vmatpush1.msra.mxu0 0.0
        %1113 = vmatprep.subr.mxu0 0.0
        %1114 = vmatpush1.msra.mxu0 0.0
        %1115 = vmatprep.subr.mxu0 0.0
        %1116 = vmatpush1.msra.mxu0 0.0
        %1117 = vmatprep.subr.mxu0 0.0
        %1118 = vmatpush1.msra.mxu0 0.0
        %1119 = vmatprep.subr.mxu0 0.0
        %1120 = vmatpush1.msra.mxu0 0.0
        %1121 = vmatprep.subr.mxu0 0.0
        %1122 = vmatpush1.msra.mxu0 0.0
        %1123 = vmatprep.subr.mxu0 0.0
        %1124 = vmatpush1.msra.mxu0 0.0
        %1125 = vmatprep.subr.mxu0 0.0
        %1126 = vmatpush1.msra.mxu0 0.0
        %1127 = vmatprep.subr.mxu0 0.0
        %1128 = vmatpush1.msra.mxu0 0.0
        %1129 = vmatprep.subr.mxu0 0.0
        %1130 = vmatpush1.msra.mxu0 0.0
        %1131 = vmatprep.subr.mxu0 0.0
        %1132 = vmatpush1.msra.mxu0 0.0
        %1133 = vmatprep.mubr.f32.mxu0 0.0
        %1134 = vmatmul.mubr.f32.gmra.mrb[0].mxu0 %v1067
        %v1135 = vpop.f32.mrb[0].mxu0
        %v1136 = vadd.f32 0.0, %v1135
        %v1137 = vpop.f32.mrb[0].mxu0
        %v1138 = vadd.f32 0.0, %v1137
        %1139 = vdwg.mxu0
        %1140 = vmatprep.subr.mxu0 %v253
        %1141 = vmatpush1.msra.mxu0 %v252
        %1142 = vmatprep.subr.mxu0 %v964
        %1143 = vmatpush1.msra.mxu0 %v963
        %1144 = vmatprep.subr.mxu0 %v971
        %1145 = vmatpush1.msra.mxu0 %v970
        %1146 = vmatprep.subr.mxu0 %v978
        %1147 = vmatpush1.msra.mxu0 %v977
        %1148 = vmatprep.subr.mxu0 %v985
        %1149 = vmatpush1.msra.mxu0 %v984
        %1150 = vmatprep.subr.mxu0 %v992
        %1151 = vmatpush1.msra.mxu0 %v991
        %1152 = vmatprep.subr.mxu0 %v999
        %1153 = vmatpush1.msra.mxu0 %v998
        %1154 = vmatprep.subr.mxu0 %v1006
        %1155 = vmatpush1.msra.mxu0 %v1005
        %1156 = vmatprep.subr.mxu0 0.0
        %1157 = vmatpush1.msra.mxu0 0.0
        %1158 = vmatprep.subr.mxu0 0.0
        %1159 = vmatpush1.msra.mxu0 0.0
        %1160 = vmatprep.subr.mxu0 0.0
        %1161 = vmatpush1.msra.mxu0 0.0
        %1162 = vmatprep.subr.mxu0 0.0
        %1163 = vmatpush1.msra.mxu0 0.0
        %1164 = vmatprep.subr.mxu0 0.0
        %1165 = vmatpush1.msra.mxu0 0.0
        %1166 = vmatprep.subr.mxu0 0.0
        %1167 = vmatpush1.msra.mxu0 0.0
        %1168 = vmatprep.subr.mxu0 0.0
        %1169 = vmatpush1.msra.mxu0 0.0
        %1170 = vmatprep.subr.mxu0 0.0
        %1171 = vmatpush1.msra.mxu0 0.0
        %1172 = vmatprep.subr.mxu0 0.0
        %1173 = vmatpush1.msra.mxu0 0.0
        %1174 = vmatprep.subr.mxu0 0.0
        %1175 = vmatpush1.msra.mxu0 0.0
        %1176 = vmatprep.subr.mxu0 0.0
        %1177 = vmatpush1.msra.mxu0 0.0
        %1178 = vmatprep.subr.mxu0 0.0
        %1179 = vmatpush1.msra.mxu0 0.0
        %1180 = vmatprep.subr.mxu0 0.0
        %1181 = vmatpush1.msra.mxu0 0.0
        %1182 = vmatprep.subr.mxu0 0.0
        %1183 = vmatpush1.msra.mxu0 0.0
        %1184 = vmatprep.subr.mxu0 0.0
        %1185 = vmatpush1.msra.mxu0 0.0
        %1186 = vmatprep.subr.mxu0 0.0
        %1187 = vmatpush1.msra.mxu0 0.0
        %1188 = vmatprep.subr.mxu0 0.0
        %1189 = vmatpush1.msra.mxu0 0.0
        %1190 = vmatprep.subr.mxu0 0.0
        %1191 = vmatpush1.msra.mxu0 0.0
        %1192 = vmatprep.subr.mxu0 0.0
        %1193 = vmatpush1.msra.mxu0 0.0
        %1194 = vmatprep.subr.mxu0 0.0
        %1195 = vmatpush1.msra.mxu0 0.0
        %1196 = vmatprep.subr.mxu0 0.0
        %1197 = vmatpush1.msra.mxu0 0.0
        %1198 = vmatprep.subr.mxu0 0.0
        %1199 = vmatpush1.msra.mxu0 0.0
        %1200 = vmatprep.subr.mxu0 0.0
        %1201 = vmatpush1.msra.mxu0 0.0
        %1202 = vmatprep.subr.mxu0 0.0
        %1203 = vmatpush1.msra.mxu0 0.0
        %1204 = vmatprep.mubr.f32.mxu0 0.0
        %1205 = vmatmul.mubr.f32.gmra.mrb[0].mxu0 %v1067
        %v1206 = vpop.f32.mrb[0].mxu0
        %v1207 = vadd.f32 0.0, %v1206
        %v1208 = vpop.f32.mrb[0].mxu0
        %v1209 = vadd.f32 0.0, %v1208
        %1210 = vdwg.mxu0
        %1211 = vmatprep.subr.mxu0 %v255
        %1212 = vmatpush1.msra.mxu0 %v254
        %1213 = vmatprep.subr.mxu0 %v966
        %1214 = vmatpush1.msra.mxu0 %v965
        %1215 = vmatprep.subr.mxu0 %v973
        %1216 = vmatpush1.msra.mxu0 %v972
        %1217 = vmatprep.subr.mxu0 %v980
        %1218 = vmatpush1.msra.mxu0 %v979
        %1219 = vmatprep.subr.mxu0 %v987
        %1220 = vmatpush1.msra.mxu0 %v986
        %1221 = vmatprep.subr.mxu0 %v994
        %1222 = vmatpush1.msra.mxu0 %v993
        %1223 = vmatprep.subr.mxu0 %v1001
        %1224 = vmatpush1.msra.mxu0 %v1000
        %1225 = vmatprep.subr.mxu0 %v1008
        %1226 = vmatpush1.msra.mxu0 %v1007
        %1227 = vmatprep.subr.mxu0 0.0
        %1228 = vmatpush1.msra.mxu0 0.0
        %1229 = vmatprep.subr.mxu0 0.0
        %1230 = vmatpush1.msra.mxu0 0.0
        %1231 = vmatprep.subr.mxu0 0.0
        %1232 = vmatpush1.msra.mxu0 0.0
        %1233 = vmatprep.subr.mxu0 0.0
        %1234 = vmatpush1.msra.mxu0 0.0
        %1235 = vmatprep.subr.mxu0 0.0
        %1236 = vmatpush1.msra.mxu0 0.0
        %1237 = vmatprep.subr.mxu0 0.0
        %1238 = vmatpush1.msra.mxu0 0.0
        %1239 = vmatprep.subr.mxu0 0.0
        %1240 = vmatpush1.msra.mxu0 0.0
        %1241 = vmatprep.subr.mxu0 0.0
        %1242 = vmatpush1.msra.mxu0 0.0
        %1243 = vmatprep.subr.mxu0 0.0
        %1244 = vmatpush1.msra.mxu0 0.0
        %1245 = vmatprep.subr.mxu0 0.0
        %1246 = vmatpush1.msra.mxu0 0.0
        %1247 = vmatprep.subr.mxu0 0.0
        %1248 = vmatpush1.msra.mxu0 0.0
        %1249 = vmatprep.subr.mxu0 0.0
        %1250 = vmatpush1.msra.mxu0 0.0
        %1251 = vmatprep.subr.mxu0 0.0
        %1252 = vmatpush1.msra.mxu0 0.0
        %1253 = vmatprep.subr.mxu0 0.0
        %1254 = vmatpush1.msra.mxu0 0.0
        %1255 = vmatprep.subr.mxu0 0.0
        %1256 = vmatpush1.msra.mxu0 0.0
        %1257 = vmatprep.subr.mxu0 0.0
        %1258 = vmatpush1.msra.mxu0 0.0
        %1259 = vmatprep.subr.mxu0 0.0
        %1260 = vmatpush1.msra.mxu0 0.0
        %1261 = vmatprep.subr.mxu0 0.0
        %1262 = vmatpush1.msra.mxu0 0.0
        %1263 = vmatprep.subr.mxu0 0.0
        %1264 = vmatpush1.msra.mxu0 0.0
        %1265 = vmatprep.subr.mxu0 0.0
        %1266 = vmatpush1.msra.mxu0 0.0
        %1267 = vmatprep.subr.mxu0 0.0
        %1268 = vmatpush1.msra.mxu0 0.0
        %1269 = vmatprep.subr.mxu0 0.0
        %1270 = vmatpush1.msra.mxu0 0.0
        %1271 = vmatprep.subr.mxu0 0.0
        %1272 = vmatpush1.msra.mxu0 0.0
        %1273 = vmatprep.subr.mxu0 0.0
        %1274 = vmatpush1.msra.mxu0 0.0
        %1275 = vmatprep.mubr.f32.mxu0 0.0
        %1276 = vmatmul.mubr.f32.gmra.mrb[0].mxu0 %v1067
        %v1277 = vpop.f32.mrb[0].mxu0
        %v1278 = vadd.f32 0.0, %v1277
        %v1279 = vpop.f32.mrb[0].mxu0
        %v1280 = vadd.f32 0.0, %v1279
        %1281 = vdwg.mxu0
        %1282 = vmatprep.subr.mxu0 %v248
        %1283 = vmatpush1.msra.mxu0 %v256
        %1284 = vmatprep.subr.mxu0 %v864
        %1285 = vmatpush1.msra.mxu0 %v967
        %1286 = vmatprep.subr.mxu0 %v880
        %1287 = vmatpush1.msra.mxu0 %v974
        %1288 = vmatprep.subr.mxu0 %v896
        %1289 = vmatpush1.msra.mxu0 %v981
        %1290 = vmatprep.subr.mxu0 %v912
        %1291 = vmatpush1.msra.mxu0 %v988
        %1292 = vmatprep.subr.mxu0 %v928
        %1293 = vmatpush1.msra.mxu0 %v995
        %1294 = vmatprep.subr.mxu0 %v944
        %1295 = vmatpush1.msra.mxu0 %v1002
        %1296 = vmatprep.subr.mxu0 %v960
        %1297 = vmatpush1.msra.mxu0 %v1009
        %1298 = vmatprep.subr.mxu0 0.0
        %1299 = vmatpush1.msra.mxu0 0.0
        %1300 = vmatprep.subr.mxu0 0.0
        %1301 = vmatpush1.msra.mxu0 0.0
        %1302 = vmatprep.subr.mxu0 0.0
        %1303 = vmatpush1.msra.mxu0 0.0
        %1304 = vmatprep.subr.mxu0 0.0
        %1305 = vmatpush1.msra.mxu0 0.0
        %1306 = vmatprep.subr.mxu0 0.0
        %1307 = vmatpush1.msra.mxu0 0.0
        %1308 = vmatprep.subr.mxu0 0.0
        %1309 = vmatpush1.msra.mxu0 0.0
        %1310 = vmatprep.subr.mxu0 0.0
        %1311 = vmatpush1.msra.mxu0 0.0
        %1312 = vmatprep.subr.mxu0 0.0
        %1313 = vmatpush1.msra.mxu0 0.0
        %1314 = vmatprep.subr.mxu0 0.0
        %1315 = vmatpush1.msra.mxu0 0.0
        %1316 = vmatprep.subr.mxu0 0.0
        %1317 = vmatpush1.msra.mxu0 0.0
        %1318 = vmatprep.subr.mxu0 0.0
        %1319 = vmatpush1.msra.mxu0 0.0
        %1320 = vmatprep.subr.mxu0 0.0
        %1321 = vmatpush1.msra.mxu0 0.0
        %1322 = vmatprep.subr.mxu0 0.0
        %1323 = vmatpush1.msra.mxu0 0.0
        %1324 = vmatprep.subr.mxu0 0.0
        %1325 = vmatpush1.msra.mxu0 0.0
        %1326 = vmatprep.subr.mxu0 0.0
        %1327 = vmatpush1.msra.mxu0 0.0
        %1328 = vmatprep.subr.mxu0 0.0
        %1329 = vmatpush1.msra.mxu0 0.0
        %1330 = vmatprep.subr.mxu0 0.0
        %1331 = vmatpush1.msra.mxu0 0.0
        %1332 = vmatprep.subr.mxu0 0.0
        %1333 = vmatpush1.msra.mxu0 0.0
        %1334 = vmatprep.subr.mxu0 0.0
        %1335 = vmatpush1.msra.mxu0 0.0
        %1336 = vmatprep.subr.mxu0 0.0
        %1337 = vmatpush1.msra.mxu0 0.0
        %1338 = vmatprep.subr.mxu0 0.0
        %1339 = vmatpush1.msra.mxu0 0.0
        %1340 = vmatprep.subr.mxu0 0.0
        %1341 = vmatpush1.msra.mxu0 0.0
        %1342 = vmatprep.subr.mxu0 0.0
        %1343 = vmatpush1.msra.mxu0 0.0
        %1344 = vmatprep.subr.mxu0 0.0
        %1345 = vmatpush1.msra.mxu0 0.0
        %1346 = vmatprep.mubr.f32.mxu0 0.0
        %1347 = vmatmul.mubr.f32.gmra.mrb[0].mxu0 %v1067
        %v1348 = vpop.f32.mrb[0].mxu0
        %v1349 = vadd.f32 0.0, %v1348
        %v1350 = vpop.f32.mrb[0].mxu0
        %v1351 = vadd.f32 0.0, %v1350
        %1352 = vdwg.mxu0
        %v1353 = vmul.f32 %v1136, %v763
        %v1354 = vmul.f32 %v1138, %v767
        %v1355 = vmul.f32 %v1207, %v771
        %v1356 = vmul.f32 %v1209, %v775
        %v1357 = vmul.f32 %v1278, %v779
        %v1358 = vmul.f32 %v1280, %v783
        %v1359 = vmul.f32 %v1349, %v787
        %v1360 = vmul.f32 %v1351, %v791
        %v1361 = vadd.f32 %v1353, %v1354
        %v1362 = vadd.f32 %v1361, %v1355
        %v1363 = vadd.f32 %v1362, %v1356
        %v1364 = vadd.f32 %v1363, %v1357
        %v1365 = vadd.f32 %v1364, %v1358
        %v1366 = vadd.f32 %v1365, %v1359
        %v1367 = vsel %vm814, %v1360, 0.0
        %v1368 = vadd.f32 %v1366, %v1367
        %1369 = vadd.xlane.f32.xlu0 %v1368
        %v1370 = vpop.xlane.xlu0 %1369
        %v1371 = vadd.f32 %v819, %v1370
        %v1372 = vmul.f32 %v1353, %v1136
        %v1373 = vmul.f32 %v1354, %v1138
        %v1374 = vmul.f32 %v1355, %v1207
        %v1375 = vmul.f32 %v1356, %v1209
        %v1376 = vmul.f32 %v1357, %v1278
        %v1377 = vmul.f32 %v1358, %v1280
        %v1378 = vmul.f32 %v1359, %v1349
        %v1379 = vmul.f32 %v1360, %v1351
        %v1380 = vadd.f32 %v1372, %v1373
        %v1381 = vadd.f32 %v1380, %v1374
        %v1382 = vadd.f32 %v1381, %v1375
        %v1383 = vadd.f32 %v1382, %v1376
        %v1384 = vadd.f32 %v1383, %v1377
        %v1385 = vadd.f32 %v1384, %v1378
        %v1386 = vsel %vm814, %v1379, 0.0
        %v1387 = vadd.f32 %v1385, %v1386
        %1388 = vadd.xlane.f32.xlu0 %v1387
        %v1389 = vpop.xlane.xlu0 %1388
        %v1390 = vadd.f32 %v838, %v1389
        %s1391 = scalar_lea.vmem %s213, 64 [#allocation8]
        %1392 = vst [vmem:[%s1391] sm:$0xff] %v1136
        %1393 = vst [vmem:[%s1391 + $0x8] sm:$0xff] %v1138
        %1394 = vst [vmem:[%s1391 + $0x10] sm:$0xff] %v1207
        %1395 = vst [vmem:[%s1391 + $0x18] sm:$0xff] %v1209
        %1396 = vst [vmem:[%s1391 + $0x20] sm:$0xff] %v1278
        %1397 = vst [vmem:[%s1391 + $0x28] sm:$0xff] %v1280
        %1398 = vst [vmem:[%s1391 + $0x30] sm:$0xff] %v1349
        %1399 = vst.msk [vmem:[%s1391 + $0x38] sm:$0xff] %vm814, %v1351
        %s1400 = scalar_lea.vmem [#allocation5], 16
        %v1401 = vld [vmem:[%s1400] sm:$0xff]
        %1402 = vrot.lane.b32.xlu0 %v250, 118
        %v1403 = vpop.permute.xlu0 %1402
        %1404 = vrot.lane.b32.xlu0 %v251, 118
        %v1405 = vpop.permute.xlu0 %1404
        %1406 = vrot.lane.b32.xlu0 %v252, 118
        %v1407 = vpop.permute.xlu0 %1406
        %1408 = vrot.lane.b32.xlu0 %v253, 118
        %v1409 = vpop.permute.xlu0 %1408
        %1410 = vrot.lane.b32.xlu0 %v254, 118
        %v1411 = vpop.permute.xlu0 %1410
        %1412 = vrot.lane.b32.xlu0 %v255, 118
        %v1413 = vpop.permute.xlu0 %1412
        %1414 = vrot.lane.b32.xlu0 %v256, 118
        %v1415 = vpop.permute.xlu0 %1414
        %1416 = vrot.lane.b32.xlu0 %v248, 118
        %v1417 = vpop.permute.xlu0 %1416
        %1418 = vrot.lane.b32.xlu0 %v282, 118
        %v1419 = vpop.permute.xlu0 %1418
        %1420 = vrot.lane.b32.xlu0 %v283, 118
        %v1421 = vpop.permute.xlu0 %1420
        %1422 = vrot.lane.b32.xlu0 %v284, 118
        %v1423 = vpop.permute.xlu0 %1422
        %1424 = vrot.lane.b32.xlu0 %v285, 118
        %v1425 = vpop.permute.xlu0 %1424
        %1426 = vrot.lane.b32.xlu0 %v286, 118
        %v1427 = vpop.permute.xlu0 %1426
        %1428 = vrot.lane.b32.xlu0 %v287, 118
        %v1429 = vpop.permute.xlu0 %1428
        %1430 = vrot.lane.b32.xlu0 %v288, 118
        %v1431 = vpop.permute.xlu0 %1430
        %1432 = vrot.lane.b32.xlu0 %v280, 118
        %v1433 = vpop.permute.xlu0 %1432
        %1434 = vrot.lane.b32.xlu0 %v314, 118
        %v1435 = vpop.permute.xlu0 %1434
        %1436 = vrot.lane.b32.xlu0 %v315, 118
        %v1437 = vpop.permute.xlu0 %1436
        %1438 = vrot.lane.b32.xlu0 %v316, 118
        %v1439 = vpop.permute.xlu0 %1438
        %1440 = vrot.lane.b32.xlu0 %v317, 118
        %v1441 = vpop.permute.xlu0 %1440
        %1442 = vrot.lane.b32.xlu0 %v318, 118
        %v1443 = vpop.permute.xlu0 %1442
        %1444 = vrot.lane.b32.xlu0 %v319, 118
        %v1445 = vpop.permute.xlu0 %1444
        %1446 = vrot.lane.b32.xlu0 %v320, 118
        %v1447 = vpop.permute.xlu0 %1446
        %1448 = vrot.lane.b32.xlu0 %v312, 118
        %v1449 = vpop.permute.xlu0 %1448
        %1450 = vrot.lane.b32.xlu0 %v349, 118
        %v1451 = vpop.permute.xlu0 %1450
        %1452 = vrot.lane.b32.xlu0 %v350, 118
        %v1453 = vpop.permute.xlu0 %1452
        %1454 = vrot.lane.b32.xlu0 %v351, 118
        %v1455 = vpop.permute.xlu0 %1454
        %1456 = vrot.lane.b32.xlu0 %v352, 118
        %v1457 = vpop.permute.xlu0 %1456
        %1458 = vrot.lane.b32.xlu0 %v353, 118
        %v1459 = vpop.permute.xlu0 %1458
        %1460 = vrot.lane.b32.xlu0 %v354, 118
        %v1461 = vpop.permute.xlu0 %1460
        %1462 = vrot.lane.b32.xlu0 %v355, 118
        %v1463 = vpop.permute.xlu0 %1462
        %1464 = vrot.lane.b32.xlu0 %v356, 118
        %v1465 = vpop.permute.xlu0 %1464
        %1466 = vrot.lane.b32.xlu0 %v384, 118
        %v1467 = vpop.permute.xlu0 %1466
        %1468 = vrot.lane.b32.xlu0 %v385, 118
        %v1469 = vpop.permute.xlu0 %1468
        %1470 = vrot.lane.b32.xlu0 %v386, 118
        %v1471 = vpop.permute.xlu0 %1470
        %1472 = vrot.lane.b32.xlu0 %v387, 118
        %v1473 = vpop.permute.xlu0 %1472
        %1474 = vrot.lane.b32.xlu0 %v388, 118
        %v1475 = vpop.permute.xlu0 %1474
        %1476 = vrot.lane.b32.xlu0 %v389, 118
        %v1477 = vpop.permute.xlu0 %1476
        %1478 = vrot.lane.b32.xlu0 %v390, 118
        %v1479 = vpop.permute.xlu0 %1478
        %1480 = vrot.lane.b32.xlu0 %v391, 118
        %v1481 = vpop.permute.xlu0 %1480
        %1482 = vrot.lane.b32.xlu0 %v419, 118
        %v1483 = vpop.permute.xlu0 %1482
        %1484 = vrot.lane.b32.xlu0 %v420, 118
        %v1485 = vpop.permute.xlu0 %1484
        %1486 = vrot.lane.b32.xlu0 %v421, 118
        %v1487 = vpop.permute.xlu0 %1486
        %1488 = vrot.lane.b32.xlu0 %v422, 118
        %v1489 = vpop.permute.xlu0 %1488
        %1490 = vrot.lane.b32.xlu0 %v423, 118
        %v1491 = vpop.permute.xlu0 %1490
        %1492 = vrot.lane.b32.xlu0 %v424, 118
        %v1493 = vpop.permute.xlu0 %1492
        %1494 = vrot.lane.b32.xlu0 %v425, 118
        %v1495 = vpop.permute.xlu0 %1494
        %1496 = vrot.lane.b32.xlu0 %v426, 118
        %v1497 = vpop.permute.xlu0 %1496
        %1498 = vrot.lane.b32.xlu0 %v454, 118
        %v1499 = vpop.permute.xlu0 %1498
        %1500 = vrot.lane.b32.xlu0 %v455, 118
        %v1501 = vpop.permute.xlu0 %1500
        %1502 = vrot.lane.b32.xlu0 %v456, 118
        %v1503 = vpop.permute.xlu0 %1502
        %1504 = vrot.lane.b32.xlu0 %v457, 118
        %v1505 = vpop.permute.xlu0 %1504
        %1506 = vrot.lane.b32.xlu0 %v458, 118
        %v1507 = vpop.permute.xlu0 %1506
        %1508 = vrot.lane.b32.xlu0 %v459, 118
        %v1509 = vpop.permute.xlu0 %1508
        %1510 = vrot.lane.b32.xlu0 %v460, 118
        %v1511 = vpop.permute.xlu0 %1510
        %1512 = vrot.lane.b32.xlu0 %v461, 118
        %v1513 = vpop.permute.xlu0 %1512
        %v1514 = vsel %vm281, %v1403, %v1405
        %v1515 = vsel %vm281, %v1405, %v1407
        %v1516 = vsel %vm281, %v1407, %v1409
        %v1517 = vsel %vm281, %v1409, %v1411
        %v1518 = vsel %vm281, %v1411, %v1413
        %v1519 = vsel %vm281, %v1413, %v1415
        %v1520 = vsel %vm281, %v1415, %v1417
        %v1521 = vsel %vm281, %v1419, %v1421
        %v1522 = vsel %vm281, %v1421, %v1423
        %v1523 = vsel %vm281, %v1423, %v1425
        %v1524 = vsel %vm281, %v1425, %v1427
        %v1525 = vsel %vm281, %v1427, %v1429
        %v1526 = vsel %vm281, %v1429, %v1431
        %v1527 = vsel %vm281, %v1431, %v1433
        %v1528 = vsel %vm281, %v1435, %v1437
        %v1529 = vsel %vm281, %v1437, %v1439
        %v1530 = vsel %vm281, %v1439, %v1441
        %v1531 = vsel %vm281, %v1441, %v1443
        %v1532 = vsel %vm281, %v1443, %v1445
        %v1533 = vsel %vm281, %v1445, %v1447
        %v1534 = vsel %vm281, %v1447, %v1449
        %v1535 = vsel %vm281, %v1451, %v1453
        %v1536 = vsel %vm281, %v1453, %v1455
        %v1537 = vsel %vm281, %v1455, %v1457
        %v1538 = vsel %vm281, %v1457, %v1459
        %v1539 = vsel %vm281, %v1459, %v1461
        %v1540 = vsel %vm281, %v1461, %v1463
        %v1541 = vsel %vm281, %v1463, %v1465
        %v1542 = vsel %vm281, %v1467, %v1469
        %v1543 = vsel %vm281, %v1469, %v1471
        %v1544 = vsel %vm281, %v1471, %v1473
        %v1545 = vsel %vm281, %v1473, %v1475
        %v1546 = vsel %vm281, %v1475, %v1477
        %v1547 = vsel %vm281, %v1477, %v1479
        %v1548 = vsel %vm281, %v1479, %v1481
        %v1549 = vsel %vm281, %v1483, %v1485
        %v1550 = vsel %vm281, %v1485, %v1487
        %v1551 = vsel %vm281, %v1487, %v1489
        %v1552 = vsel %vm281, %v1489, %v1491
        %v1553 = vsel %vm281, %v1491, %v1493
        %v1554 = vsel %vm281, %v1493, %v1495
        %v1555 = vsel %vm281, %v1495, %v1497
        %v1556 = vsel %vm281, %v1499, %v1501
        %v1557 = vsel %vm281, %v1501, %v1503
        %v1558 = vsel %vm281, %v1503, %v1505
        %v1559 = vsel %vm281, %v1505, %v1507
        %v1560 = vsel %vm281, %v1507, %v1509
        %v1561 = vsel %vm281, %v1509, %v1511
        %v1562 = vsel %vm281, %v1511, %v1513
        %v1620 = vsel %vm471, %v1401, 0
        %1622 = vmatprep.subr.mxu0 %v283
        %1623 = vmatpush1.msra.mxu0 %v282
        %1624 = vmatprep.subr.mxu0 %v1515
        %1625 = vmatpush1.msra.mxu0 %v1514
        %1626 = vmatprep.subr.mxu0 %v1522
        %1627 = vmatpush1.msra.mxu0 %v1521
        %1628 = vmatprep.subr.mxu0 %v1529
        %1629 = vmatpush1.msra.mxu0 %v1528
        %1630 = vmatprep.subr.mxu0 %v1536
        %1631 = vmatpush1.msra.mxu0 %v1535
        %1632 = vmatprep.subr.mxu0 %v1543
        %1633 = vmatpush1.msra.mxu0 %v1542
        %1634 = vmatprep.subr.mxu0 %v1550
        %1635 = vmatpush1.msra.mxu0 %v1549
        %1636 = vmatprep.subr.mxu0 %v1557
        %1637 = vmatpush1.msra.mxu0 %v1556
        %1638 = vmatprep.subr.mxu0 0.0
        %1639 = vmatpush1.msra.mxu0 0.0
        %1640 = vmatprep.subr.mxu0 0.0
        %1641 = vmatpush1.msra.mxu0 0.0
        %1642 = vmatprep.subr.mxu0 0.0
        %1643 = vmatpush1.msra.mxu0 0.0
        %1644 = vmatprep.subr.mxu0 0.0
        %1645 = vmatpush1.msra.mxu0 0.0
        %1646 = vmatprep.subr.mxu0 0.0
        %1647 = vmatpush1.msra.mxu0 0.0
        %1648 = vmatprep.subr.mxu0 0.0
        %1649 = vmatpush1.msra.mxu0 0.0
        %1650 = vmatprep.subr.mxu0 0.0
        %1651 = vmatpush1.msra.mxu0 0.0
        %1652 = vmatprep.subr.mxu0 0.0
        %1653 = vmatpush1.msra.mxu0 0.0
        %1654 = vmatprep.subr.mxu0 0.0
        %1655 = vmatpush1.msra.mxu0 0.0
        %1656 = vmatprep.subr.mxu0 0.0
        %1657 = vmatpush1.msra.mxu0 0.0
        %1658 = vmatprep.subr.mxu0 0.0
        %1659 = vmatpush1.msra.mxu0 0.0
        %1660 = vmatprep.subr.mxu0 0.0
        %1661 = vmatpush1.msra.mxu0 0.0
        %1662 = vmatprep.subr.mxu0 0.0
        %1663 = vmatpush1.msra.mxu0 0.0
        %1664 = vmatprep.subr.mxu0 0.0
        %1665 = vmatpush1.msra.mxu0 0.0
        %1666 = vmatprep.subr.mxu0 0.0
        %1667 = vmatpush1.msra.mxu0 0.0
        %1668 = vmatprep.subr.mxu0 0.0
        %1669 = vmatpush1.msra.mxu0 0.0
        %1670 = vmatprep.subr.mxu0 0.0
        %1671 = vmatpush1.msra.mxu0 0.0
        %1672 = vmatprep.subr.mxu0 0.0
        %1673 = vmatpush1.msra.mxu0 0.0
        %1674 = vmatprep.subr.mxu0 0.0
        %1675 = vmatpush1.msra.mxu0 0.0
        %1676 = vmatprep.subr.mxu0 0.0
        %1677 = vmatpush1.msra.mxu0 0.0
        %1678 = vmatprep.subr.mxu0 0.0
        %1679 = vmatpush1.msra.mxu0 0.0
        %1680 = vmatprep.subr.mxu0 0.0
        %1681 = vmatpush1.msra.mxu0 0.0
        %1682 = vmatprep.subr.mxu0 0.0
        %1683 = vmatpush1.msra.mxu0 0.0
        %1684 = vmatprep.subr.mxu0 0.0
        %1685 = vmatpush1.msra.mxu0 0.0
        %1686 = vmatprep.mubr.f32.mxu0 0.0
        %1687 = vmatmul.mubr.f32.gmra.mrb[0].mxu0 %v1620
        %v1688 = vpop.f32.mrb[0].mxu0
        %v1689 = vadd.f32 0.0, %v1688
        %v1690 = vpop.f32.mrb[0].mxu0
        %v1691 = vadd.f32 0.0, %v1690
        %1692 = vdwg.mxu0
        %1693 = vmatprep.subr.mxu0 %v285
        %1694 = vmatpush1.msra.mxu0 %v284
        %1695 = vmatprep.subr.mxu0 %v1517
        %1696 = vmatpush1.msra.mxu0 %v1516
        %1697 = vmatprep.subr.mxu0 %v1524
        %1698 = vmatpush1.msra.mxu0 %v1523
        %1699 = vmatprep.subr.mxu0 %v1531
        %1700 = vmatpush1.msra.mxu0 %v1530
        %1701 = vmatprep.subr.mxu0 %v1538
        %1702 = vmatpush1.msra.mxu0 %v1537
        %1703 = vmatprep.subr.mxu0 %v1545
        %1704 = vmatpush1.msra.mxu0 %v1544
        %1705 = vmatprep.subr.mxu0 %v1552
        %1706 = vmatpush1.msra.mxu0 %v1551
        %1707 = vmatprep.subr.mxu0 %v1559
        %1708 = vmatpush1.msra.mxu0 %v1558
        %1709 = vmatprep.subr.mxu0 0.0
        %1710 = vmatpush1.msra.mxu0 0.0
        %1711 = vmatprep.subr.mxu0 0.0
        %1712 = vmatpush1.msra.mxu0 0.0
        %1713 = vmatprep.subr.mxu0 0.0
        %1714 = vmatpush1.msra.mxu0 0.0
        %1715 = vmatprep.subr.mxu0 0.0
        %1716 = vmatpush1.msra.mxu0 0.0
        %1717 = vmatprep.subr.mxu0 0.0
        %1718 = vmatpush1.msra.mxu0 0.0
        %1719 = vmatprep.subr.mxu0 0.0
        %1720 = vmatpush1.msra.mxu0 0.0
        %1721 = vmatprep.subr.mxu0 0.0
        %1722 = vmatpush1.msra.mxu0 0.0
        %1723 = vmatprep.subr.mxu0 0.0
        %1724 = vmatpush1.msra.mxu0 0.0
        %1725 = vmatprep.subr.mxu0 0.0
        %1726 = vmatpush1.msra.mxu0 0.0
        %1727 = vmatprep.subr.mxu0 0.0
        %1728 = vmatpush1.msra.mxu0 0.0
        %1729 = vmatprep.subr.mxu0 0.0
        %1730 = vmatpush1.msra.mxu0 0.0
        %1731 = vmatprep.subr.mxu0 0.0
        %1732 = vmatpush1.msra.mxu0 0.0
        %1733 = vmatprep.subr.mxu0 0.0
        %1734 = vmatpush1.msra.mxu0 0.0
        %1735 = vmatprep.subr.mxu0 0.0
        %1736 = vmatpush1.msra.mxu0 0.0
        %1737 = vmatprep.subr.mxu0 0.0
        %1738 = vmatpush1.msra.mxu0 0.0
        %1739 = vmatprep.subr.mxu0 0.0
        %1740 = vmatpush1.msra.mxu0 0.0
        %1741 = vmatprep.subr.mxu0 0.0
        %1742 = vmatpush1.msra.mxu0 0.0
        %1743 = vmatprep.subr.mxu0 0.0
        %1744 = vmatpush1.msra.mxu0 0.0
        %1745 = vmatprep.subr.mxu0 0.0
        %1746 = vmatpush1.msra.mxu0 0.0
        %1747 = vmatprep.subr.mxu0 0.0
        %1748 = vmatpush1.msra.mxu0 0.0
        %1749 = vmatprep.subr.mxu0 0.0
        %1750 = vmatpush1.msra.mxu0 0.0
        %1751 = vmatprep.subr.mxu0 0.0
        %1752 = vmatpush1.msra.mxu0 0.0
        %1753 = vmatprep.subr.mxu0 0.0
        %1754 = vmatpush1.msra.mxu0 0.0
        %1755 = vmatprep.subr.mxu0 0.0
        %1756 = vmatpush1.msra.mxu0 0.0
        %1757 = vmatprep.mubr.f32.mxu0 0.0
        %1758 = vmatmul.mubr.f32.gmra.mrb[0].mxu0 %v1620
        %v1759 = vpop.f32.mrb[0].mxu0
        %v1760 = vadd.f32 0.0, %v1759
        %v1761 = vpop.f32.mrb[0].mxu0
        %v1762 = vadd.f32 0.0, %v1761
        %1763 = vdwg.mxu0
        %1764 = vmatprep.subr.mxu0 %v287
        %1765 = vmatpush1.msra.mxu0 %v286
        %1766 = vmatprep.subr.mxu0 %v1519
        %1767 = vmatpush1.msra.mxu0 %v1518
        %1768 = vmatprep.subr.mxu0 %v1526
        %1769 = vmatpush1.msra.mxu0 %v1525
        %1770 = vmatprep.subr.mxu0 %v1533
        %1771 = vmatpush1.msra.mxu0 %v1532
        %1772 = vmatprep.subr.mxu0 %v1540
        %1773 = vmatpush1.msra.mxu0 %v1539
        %1774 = vmatprep.subr.mxu0 %v1547
        %1775 = vmatpush1.msra.mxu0 %v1546
        %1776 = vmatprep.subr.mxu0 %v1554
        %1777 = vmatpush1.msra.mxu0 %v1553
        %1778 = vmatprep.subr.mxu0 %v1561
        %1779 = vmatpush1.msra.mxu0 %v1560
        %1780 = vmatprep.subr.mxu0 0.0
        %1781 = vmatpush1.msra.mxu0 0.0
        %1782 = vmatprep.subr.mxu0 0.0
        %1783 = vmatpush1.msra.mxu0 0.0
        %1784 = vmatprep.subr.mxu0 0.0
        %1785 = vmatpush1.msra.mxu0 0.0
        %1786 = vmatprep.subr.mxu0 0.0
        %1787 = vmatpush1.msra.mxu0 0.0
        %1788 = vmatprep.subr.mxu0 0.0
        %1789 = vmatpush1.msra.mxu0 0.0
        %1790 = vmatprep.subr.mxu0 0.0
        %1791 = vmatpush1.msra.mxu0 0.0
        %1792 = vmatprep.subr.mxu0 0.0
        %1793 = vmatpush1.msra.mxu0 0.0
        %1794 = vmatprep.subr.mxu0 0.0
        %1795 = vmatpush1.msra.mxu0 0.0
        %1796 = vmatprep.subr.mxu0 0.0
        %1797 = vmatpush1.msra.mxu0 0.0
        %1798 = vmatprep.subr.mxu0 0.0
        %1799 = vmatpush1.msra.mxu0 0.0
        %1800 = vmatprep.subr.mxu0 0.0
        %1801 = vmatpush1.msra.mxu0 0.0
        %1802 = vmatprep.subr.mxu0 0.0
        %1803 = vmatpush1.msra.mxu0 0.0
        %1804 = vmatprep.subr.mxu0 0.0
        %1805 = vmatpush1.msra.mxu0 0.0
        %1806 = vmatprep.subr.mxu0 0.0
        %1807 = vmatpush1.msra.mxu0 0.0
        %1808 = vmatprep.subr.mxu0 0.0
        %1809 = vmatpush1.msra.mxu0 0.0
        %1810 = vmatprep.subr.mxu0 0.0
        %1811 = vmatpush1.msra.mxu0 0.0
        %1812 = vmatprep.subr.mxu0 0.0
        %1813 = vmatpush1.msra.mxu0 0.0
        %1814 = vmatprep.subr.mxu0 0.0
        %1815 = vmatpush1.msra.mxu0 0.0
        %1816 = vmatprep.subr.mxu0 0.0
        %1817 = vmatpush1.msra.mxu0 0.0
        %1818 = vmatprep.subr.mxu0 0.0
        %1819 = vmatpush1.msra.mxu0 0.0
        %1820 = vmatprep.subr.mxu0 0.0
        %1821 = vmatpush1.msra.mxu0 0.0
        %1822 = vmatprep.subr.mxu0 0.0
        %1823 = vmatpush1.msra.mxu0 0.0
        %1824 = vmatprep.subr.mxu0 0.0
        %1825 = vmatpush1.msra.mxu0 0.0
        %1826 = vmatprep.subr.mxu0 0.0
        %1827 = vmatpush1.msra.mxu0 0.0
        %1828 = vmatprep.mubr.f32.mxu0 0.0
        %1829 = vmatmul.mubr.f32.gmra.mrb[0].mxu0 %v1620
        %v1830 = vpop.f32.mrb[0].mxu0
        %v1831 = vadd.f32 0.0, %v1830
        %v1832 = vpop.f32.mrb[0].mxu0
        %v1833 = vadd.f32 0.0, %v1832
        %1834 = vdwg.mxu0
        %1835 = vmatprep.subr.mxu0 %v280
        %1836 = vmatpush1.msra.mxu0 %v288
        %1837 = vmatprep.subr.mxu0 %v1417
        %1838 = vmatpush1.msra.mxu0 %v1520
        %1839 = vmatprep.subr.mxu0 %v1433
        %1840 = vmatpush1.msra.mxu0 %v1527
        %1841 = vmatprep.subr.mxu0 %v1449
        %1842 = vmatpush1.msra.mxu0 %v1534
        %1843 = vmatprep.subr.mxu0 %v1465
        %1844 = vmatpush1.msra.mxu0 %v1541
        %1845 = vmatprep.subr.mxu0 %v1481
        %1846 = vmatpush1.msra.mxu0 %v1548
        %1847 = vmatprep.subr.mxu0 %v1497
        %1848 = vmatpush1.msra.mxu0 %v1555
        %1849 = vmatprep.subr.mxu0 %v1513
        %1850 = vmatpush1.msra.mxu0 %v1562
        %1851 = vmatprep.subr.mxu0 0.0
        %1852 = vmatpush1.msra.mxu0 0.0
        %1853 = vmatprep.subr.mxu0 0.0
        %1854 = vmatpush1.msra.mxu0 0.0
        %1855 = vmatprep.subr.mxu0 0.0
        %1856 = vmatpush1.msra.mxu0 0.0
        %1857 = vmatprep.subr.mxu0 0.0
        %1858 = vmatpush1.msra.mxu0 0.0
        %1859 = vmatprep.subr.mxu0 0.0
        %1860 = vmatpush1.msra.mxu0 0.0
        %1861 = vmatprep.subr.mxu0 0.0
        %1862 = vmatpush1.msra.mxu0 0.0
        %1863 = vmatprep.subr.mxu0 0.0
        %1864 = vmatpush1.msra.mxu0 0.0
        %1865 = vmatprep.subr.mxu0 0.0
        %1866 = vmatpush1.msra.mxu0 0.0
        %1867 = vmatprep.subr.mxu0 0.0
        %1868 = vmatpush1.msra.mxu0 0.0
        %1869 = vmatprep.subr.mxu0 0.0
        %1870 = vmatpush1.msra.mxu0 0.0
        %1871 = vmatprep.subr.mxu0 0.0
        %1872 = vmatpush1.msra.mxu0 0.0
        %1873 = vmatprep.subr.mxu0 0.0
        %1874 = vmatpush1.msra.mxu0 0.0
        %1875 = vmatprep.subr.mxu0 0.0
        %1876 = vmatpush1.msra.mxu0 0.0
        %1877 = vmatprep.subr.mxu0 0.0
        %1878 = vmatpush1.msra.mxu0 0.0
        %1879 = vmatprep.subr.mxu0 0.0
        %1880 = vmatpush1.msra.mxu0 0.0
        %1881 = vmatprep.subr.mxu0 0.0
        %1882 = vmatpush1.msra.mxu0 0.0
        %1883 = vmatprep.subr.mxu0 0.0
        %1884 = vmatpush1.msra.mxu0 0.0
        %1885 = vmatprep.subr.mxu0 0.0
        %1886 = vmatpush1.msra.mxu0 0.0
        %1887 = vmatprep.subr.mxu0 0.0
        %1888 = vmatpush1.msra.mxu0 0.0
        %1889 = vmatprep.subr.mxu0 0.0
        %1890 = vmatpush1.msra.mxu0 0.0
        %1891 = vmatprep.subr.mxu0 0.0
        %1892 = vmatpush1.msra.mxu0 0.0
        %1893 = vmatprep.subr.mxu0 0.0
        %1894 = vmatpush1.msra.mxu0 0.0
        %1895 = vmatprep.subr.mxu0 0.0
        %1896 = vmatpush1.msra.mxu0 0.0
        %1897 = vmatprep.subr.mxu0 0.0
        %1898 = vmatpush1.msra.mxu0 0.0
        %1899 = vmatprep.mubr.f32.mxu0 0.0
        %1900 = vmatmul.mubr.f32.gmra.mrb[0].mxu0 %v1620
        %v1901 = vpop.f32.mrb[0].mxu0
        %v1902 = vadd.f32 0.0, %v1901
        %v1903 = vpop.f32.mrb[0].mxu0
        %v1904 = vadd.f32 0.0, %v1903
        %1905 = vdwg.mxu0
        %v1906 = vmul.f32 %v1689, %v763
        %v1907 = vmul.f32 %v1691, %v767
        %v1908 = vmul.f32 %v1760, %v771
        %v1909 = vmul.f32 %v1762, %v775
        %v1910 = vmul.f32 %v1831, %v779
        %v1911 = vmul.f32 %v1833, %v783
        %v1912 = vmul.f32 %v1902, %v787
        %v1913 = vmul.f32 %v1904, %v791
        %v1914 = vadd.f32 %v1906, %v1907
        %v1915 = vadd.f32 %v1914, %v1908
        %v1916 = vadd.f32 %v1915, %v1909
        %v1917 = vadd.f32 %v1916, %v1910
        %v1918 = vadd.f32 %v1917, %v1911
        %v1919 = vadd.f32 %v1918, %v1912
        %v1920 = vsel %vm814, %v1913, 0.0
        %v1921 = vadd.f32 %v1919, %v1920
        %1922 = vadd.xlane.f32.xlu0 %v1921
        %v1923 = vpop.xlane.xlu0 %1922
        %v1924 = vadd.f32 %v1371, %v1923
        %v1925 = vmul.f32 %v1906, %v1689
        %v1926 = vmul.f32 %v1907, %v1691
        %v1927 = vmul.f32 %v1908, %v1760
        %v1928 = vmul.f32 %v1909, %v1762
        %v1929 = vmul.f32 %v1910, %v1831
        %v1930 = vmul.f32 %v1911, %v1833
        %v1931 = vmul.f32 %v1912, %v1902
        %v1932 = vmul.f32 %v1913, %v1904
        %v1933 = vadd.f32 %v1925, %v1926
        %v1934 = vadd.f32 %v1933, %v1927
        %v1935 = vadd.f32 %v1934, %v1928
        %v1936 = vadd.f32 %v1935, %v1929
        %v1937 = vadd.f32 %v1936, %v1930
        %v1938 = vadd.f32 %v1937, %v1931
        %v1939 = vsel %vm814, %v1932, 0.0
        %v1940 = vadd.f32 %v1938, %v1939
        %1941 = vadd.xlane.f32.xlu0 %v1940
        %v1942 = vpop.xlane.xlu0 %1941
        %v1943 = vadd.f32 %v1390, %v1942
        %s1944 = scalar_lea.vmem %s213, 128 [#allocation8]
        %1945 = vst [vmem:[%s1944] sm:$0xff] %v1689
        %1946 = vst [vmem:[%s1944 + $0x8] sm:$0xff] %v1691
        %1947 = vst [vmem:[%s1944 + $0x10] sm:$0xff] %v1760
        %1948 = vst [vmem:[%s1944 + $0x18] sm:$0xff] %v1762
        %1949 = vst [vmem:[%s1944 + $0x20] sm:$0xff] %v1831
        %1950 = vst [vmem:[%s1944 + $0x28] sm:$0xff] %v1833
        %1951 = vst [vmem:[%s1944 + $0x30] sm:$0xff] %v1902
        %1952 = vst.msk [vmem:[%s1944 + $0x38] sm:$0xff] %vm814, %v1904
        %s1953 = scalar_lea.vmem [#allocation5], 24
        %v1954 = vld [vmem:[%s1953] sm:$0xff]
        %1955 = vrot.lane.b32.xlu0 %v250, 117
        %v1956 = vpop.permute.xlu0 %1955
        %1957 = vrot.lane.b32.xlu0 %v251, 117
        %v1958 = vpop.permute.xlu0 %1957
        %1959 = vrot.lane.b32.xlu0 %v252, 117
        %v1960 = vpop.permute.xlu0 %1959
        %1961 = vrot.lane.b32.xlu0 %v253, 117
        %v1962 = vpop.permute.xlu0 %1961
        %1963 = vrot.lane.b32.xlu0 %v254, 117
        %v1964 = vpop.permute.xlu0 %1963
        %1965 = vrot.lane.b32.xlu0 %v255, 117
        %v1966 = vpop.permute.xlu0 %1965
        %1967 = vrot.lane.b32.xlu0 %v256, 117
        %v1968 = vpop.permute.xlu0 %1967
        %1969 = vrot.lane.b32.xlu0 %v248, 117
        %v1970 = vpop.permute.xlu0 %1969
        %1971 = vrot.lane.b32.xlu0 %v282, 117
        %v1972 = vpop.permute.xlu0 %1971
        %1973 = vrot.lane.b32.xlu0 %v283, 117
        %v1974 = vpop.permute.xlu0 %1973
        %1975 = vrot.lane.b32.xlu0 %v284, 117
        %v1976 = vpop.permute.xlu0 %1975
        %1977 = vrot.lane.b32.xlu0 %v285, 117
        %v1978 = vpop.permute.xlu0 %1977
        %1979 = vrot.lane.b32.xlu0 %v286, 117
        %v1980 = vpop.permute.xlu0 %1979
        %1981 = vrot.lane.b32.xlu0 %v287, 117
        %v1982 = vpop.permute.xlu0 %1981
        %1983 = vrot.lane.b32.xlu0 %v288, 117
        %v1984 = vpop.permute.xlu0 %1983
        %1985 = vrot.lane.b32.xlu0 %v280, 117
        %v1986 = vpop.permute.xlu0 %1985
        %1987 = vrot.lane.b32.xlu0 %v314, 117
        %v1988 = vpop.permute.xlu0 %1987
        %1989 = vrot.lane.b32.xlu0 %v315, 117
        %v1990 = vpop.permute.xlu0 %1989
        %1991 = vrot.lane.b32.xlu0 %v316, 117
        %v1992 = vpop.permute.xlu0 %1991
        %1993 = vrot.lane.b32.xlu0 %v317, 117
        %v1994 = vpop.permute.xlu0 %1993
        %1995 = vrot.lane.b32.xlu0 %v318, 117
        %v1996 = vpop.permute.xlu0 %1995
        %1997 = vrot.lane.b32.xlu0 %v319, 117
        %v1998 = vpop.permute.xlu0 %1997
        %1999 = vrot.lane.b32.xlu0 %v320, 117
        %v2000 = vpop.permute.xlu0 %1999
        %2001 = vrot.lane.b32.xlu0 %v312, 117
        %v2002 = vpop.permute.xlu0 %2001
        %2003 = vrot.lane.b32.xlu0 %v349, 117
        %v2004 = vpop.permute.xlu0 %2003
        %2005 = vrot.lane.b32.xlu0 %v350, 117
        %v2006 = vpop.permute.xlu0 %2005
        %2007 = vrot.lane.b32.xlu0 %v351, 117
        %v2008 = vpop.permute.xlu0 %2007
        %2009 = vrot.lane.b32.xlu0 %v352, 117
        %v2010 = vpop.permute.xlu0 %2009
        %2011 = vrot.lane.b32.xlu0 %v353, 117
        %v2012 = vpop.permute.xlu0 %2011
        %2013 = vrot.lane.b32.xlu0 %v354, 117
        %v2014 = vpop.permute.xlu0 %2013
        %2015 = vrot.lane.b32.xlu0 %v355, 117
        %v2016 = vpop.permute.xlu0 %2015
        %2017 = vrot.lane.b32.xlu0 %v356, 117
        %v2018 = vpop.permute.xlu0 %2017
        %2019 = vrot.lane.b32.xlu0 %v384, 117
        %v2020 = vpop.permute.xlu0 %2019
        %2021 = vrot.lane.b32.xlu0 %v385, 117
        %v2022 = vpop.permute.xlu0 %2021
        %2023 = vrot.lane.b32.xlu0 %v386, 117
        %v2024 = vpop.permute.xlu0 %2023
        %2025 = vrot.lane.b32.xlu0 %v387, 117
        %v2026 = vpop.permute.xlu0 %2025
        %2027 = vrot.lane.b32.xlu0 %v388, 117
        %v2028 = vpop.permute.xlu0 %2027
        %2029 = vrot.lane.b32.xlu0 %v389, 117
        %v2030 = vpop.permute.xlu0 %2029
        %2031 = vrot.lane.b32.xlu0 %v390, 117
        %v2032 = vpop.permute.xlu0 %2031
        %2033 = vrot.lane.b32.xlu0 %v391, 117
        %v2034 = vpop.permute.xlu0 %2033
        %2035 = vrot.lane.b32.xlu0 %v419, 117
        %v2036 = vpop.permute.xlu0 %2035
        %2037 = vrot.lane.b32.xlu0 %v420, 117
        %v2038 = vpop.permute.xlu0 %2037
        %2039 = vrot.lane.b32.xlu0 %v421, 117
        %v2040 = vpop.permute.xlu0 %2039
        %2041 = vrot.lane.b32.xlu0 %v422, 117
        %v2042 = vpop.permute.xlu0 %2041
        %2043 = vrot.lane.b32.xlu0 %v423, 117
        %v2044 = vpop.permute.xlu0 %2043
        %2045 = vrot.lane.b32.xlu0 %v424, 117
        %v2046 = vpop.permute.xlu0 %2045
        %2047 = vrot.lane.b32.xlu0 %v425, 117
        %v2048 = vpop.permute.xlu0 %2047
        %2049 = vrot.lane.b32.xlu0 %v426, 117
        %v2050 = vpop.permute.xlu0 %2049
        %2051 = vrot.lane.b32.xlu0 %v454, 117
        %v2052 = vpop.permute.xlu0 %2051
        %2053 = vrot.lane.b32.xlu0 %v455, 117
        %v2054 = vpop.permute.xlu0 %2053
        %2055 = vrot.lane.b32.xlu0 %v456, 117
        %v2056 = vpop.permute.xlu0 %2055
        %2057 = vrot.lane.b32.xlu0 %v457, 117
        %v2058 = vpop.permute.xlu0 %2057
        %2059 = vrot.lane.b32.xlu0 %v458, 117
        %v2060 = vpop.permute.xlu0 %2059
        %2061 = vrot.lane.b32.xlu0 %v459, 117
        %v2062 = vpop.permute.xlu0 %2061
        %2063 = vrot.lane.b32.xlu0 %v460, 117
        %v2064 = vpop.permute.xlu0 %2063
        %2065 = vrot.lane.b32.xlu0 %v461, 117
        %v2066 = vpop.permute.xlu0 %2065
        %v2067 = vsel %vm313, %v1956, %v1958
        %v2068 = vsel %vm313, %v1958, %v1960
        %v2069 = vsel %vm313, %v1960, %v1962
        %v2070 = vsel %vm313, %v1962, %v1964
        %v2071 = vsel %vm313, %v1964, %v1966
        %v2072 = vsel %vm313, %v1966, %v1968
        %v2073 = vsel %vm313, %v1968, %v1970
        %v2074 = vsel %vm313, %v1972, %v1974
        %v2075 = vsel %vm313, %v1974, %v1976
        %v2076 = vsel %vm313, %v1976, %v1978
        %v2077 = vsel %vm313, %v1978, %v1980
        %v2078 = vsel %vm313, %v1980, %v1982
        %v2079 = vsel %vm313, %v1982, %v1984
        %v2080 = vsel %vm313, %v1984, %v1986
        %v2081 = vsel %vm313, %v1988, %v1990
        %v2082 = vsel %vm313, %v1990, %v1992
        %v2083 = vsel %vm313, %v1992, %v1994
        %v2084 = vsel %vm313, %v1994, %v1996
        %v2085 = vsel %vm313, %v1996, %v1998
        %v2086 = vsel %vm313, %v1998, %v2000
        %v2087 = vsel %vm313, %v2000, %v2002
        %v2088 = vsel %vm313, %v2004, %v2006
        %v2089 = vsel %vm313, %v2006, %v2008
        %v2090 = vsel %vm313, %v2008, %v2010
        %v2091 = vsel %vm313, %v2010, %v2012
        %v2092 = vsel %vm313, %v2012, %v2014
        %v2093 = vsel %vm313, %v2014, %v2016
        %v2094 = vsel %vm313, %v2016, %v2018
        %v2095 = vsel %vm313, %v2020, %v2022
        %v2096 = vsel %vm313, %v2022, %v2024
        %v2097 = vsel %vm313, %v2024, %v2026
        %v2098 = vsel %vm313, %v2026, %v2028
        %v2099 = vsel %vm313, %v2028, %v2030
        %v2100 = vsel %vm313, %v2030, %v2032
        %v2101 = vsel %vm313, %v2032, %v2034
        %v2102 = vsel %vm313, %v2036, %v2038
        %v2103 = vsel %vm313, %v2038, %v2040
        %v2104 = vsel %vm313, %v2040, %v2042
        %v2105 = vsel %vm313, %v2042, %v2044
        %v2106 = vsel %vm313, %v2044, %v2046
        %v2107 = vsel %vm313, %v2046, %v2048
        %v2108 = vsel %vm313, %v2048, %v2050
        %v2109 = vsel %vm313, %v2052, %v2054
        %v2110 = vsel %vm313, %v2054, %v2056
        %v2111 = vsel %vm313, %v2056, %v2058
        %v2112 = vsel %vm313, %v2058, %v2060
        %v2113 = vsel %vm313, %v2060, %v2062
        %v2114 = vsel %vm313, %v2062, %v2064
        %v2115 = vsel %vm313, %v2064, %v2066
        %v2173 = vsel %vm471, %v1954, 0
        %2175 = vmatprep.subr.mxu0 %v315
        %2176 = vmatpush1.msra.mxu0 %v314
        %2177 = vmatprep.subr.mxu0 %v2068
        %2178 = vmatpush1.msra.mxu0 %v2067
        %2179 = vmatprep.subr.mxu0 %v2075
        %2180 = vmatpush1.msra.mxu0 %v2074
        %2181 = vmatprep.subr.mxu0 %v2082
        %2182 = vmatpush1.msra.mxu0 %v2081
        %2183 = vmatprep.subr.mxu0 %v2089
        %2184 = vmatpush1.msra.mxu0 %v2088
        %2185 = vmatprep.subr.mxu0 %v2096
        %2186 = vmatpush1.msra.mxu0 %v2095
        %2187 = vmatprep.subr.mxu0 %v2103
        %2188 = vmatpush1.msra.mxu0 %v2102
        %2189 = vmatprep.subr.mxu0 %v2110
        %2190 = vmatpush1.msra.mxu0 %v2109
        %2191 = vmatprep.subr.mxu0 0.0
        %2192 = vmatpush1.msra.mxu0 0.0
        %2193 = vmatprep.subr.mxu0 0.0
        %2194 = vmatpush1.msra.mxu0 0.0
        %2195 = vmatprep.subr.mxu0 0.0
        %2196 = vmatpush1.msra.mxu0 0.0
        %2197 = vmatprep.subr.mxu0 0.0
        %2198 = vmatpush1.msra.mxu0 0.0
        %2199 = vmatprep.subr.mxu0 0.0
        %2200 = vmatpush1.msra.mxu0 0.0
        %2201 = vmatprep.subr.mxu0 0.0
        %2202 = vmatpush1.msra.mxu0 0.0
        %2203 = vmatprep.subr.mxu0 0.0
        %2204 = vmatpush1.msra.mxu0 0.0
        %2205 = vmatprep.subr.mxu0 0.0
        %2206 = vmatpush1.msra.mxu0 0.0
        %2207 = vmatprep.subr.mxu0 0.0
        %2208 = vmatpush1.msra.mxu0 0.0
        %2209 = vmatprep.subr.mxu0 0.0
        %2210 = vmatpush1.msra.mxu0 0.0
        %2211 = vmatprep.subr.mxu0 0.0
        %2212 = vmatpush1.msra.mxu0 0.0
        %2213 = vmatprep.subr.mxu0 0.0
        %2214 = vmatpush1.msra.mxu0 0.0
        %2215 = vmatprep.subr.mxu0 0.0
        %2216 = vmatpush1.msra.mxu0 0.0
        %2217 = vmatprep.subr.mxu0 0.0
        %2218 = vmatpush1.msra.mxu0 0.0
        %2219 = vmatprep.subr.mxu0 0.0
        %2220 = vmatpush1.msra.mxu0 0.0
        %2221 = vmatprep.subr.mxu0 0.0
        %2222 = vmatpush1.msra.mxu0 0.0
        %2223 = vmatprep.subr.mxu0 0.0
        %2224 = vmatpush1.msra.mxu0 0.0
        %2225 = vmatprep.subr.mxu0 0.0
        %2226 = vmatpush1.msra.mxu0 0.0
        %2227 = vmatprep.subr.mxu0 0.0
        %2228 = vmatpush1.msra.mxu0 0.0
        %2229 = vmatprep.subr.mxu0 0.0
        %2230 = vmatpush1.msra.mxu0 0.0
        %2231 = vmatprep.subr.mxu0 0.0
        %2232 = vmatpush1.msra.mxu0 0.0
        %2233 = vmatprep.subr.mxu0 0.0
        %2234 = vmatpush1.msra.mxu0 0.0
        %2235 = vmatprep.subr.mxu0 0.0
        %2236 = vmatpush1.msra.mxu0 0.0
        %2237 = vmatprep.subr.mxu0 0.0
        %2238 = vmatpush1.msra.mxu0 0.0
        %2239 = vmatprep.mubr.f32.mxu0 0.0
        %2240 = vmatmul.mubr.f32.gmra.mrb[0].mxu0 %v2173
        %v2241 = vpop.f32.mrb[0].mxu0
        %v2242 = vadd.f32 0.0, %v2241
        %v2243 = vpop.f32.mrb[0].mxu0
        %v2244 = vadd.f32 0.0, %v2243
        %2245 = vdwg.mxu0
        %2246 = vmatprep.subr.mxu0 %v317
        %2247 = vmatpush1.msra.mxu0 %v316
        %2248 = vmatprep.subr.mxu0 %v2070
        %2249 = vmatpush1.msra.mxu0 %v2069
        %2250 = vmatprep.subr.mxu0 %v2077
        %2251 = vmatpush1.msra.mxu0 %v2076
        %2252 = vmatprep.subr.mxu0 %v2084
        %2253 = vmatpush1.msra.mxu0 %v2083
        %2254 = vmatprep.subr.mxu0 %v2091
        %2255 = vmatpush1.msra.mxu0 %v2090
        %2256 = vmatprep.subr.mxu0 %v2098
        %2257 = vmatpush1.msra.mxu0 %v2097
        %2258 = vmatprep.subr.mxu0 %v2105
        %2259 = vmatpush1.msra.mxu0 %v2104
        %2260 = vmatprep.subr.mxu0 %v2112
        %2261 = vmatpush1.msra.mxu0 %v2111
        %2262 = vmatprep.subr.mxu0 0.0
        %2263 = vmatpush1.msra.mxu0 0.0
        %2264 = vmatprep.subr.mxu0 0.0
        %2265 = vmatpush1.msra.mxu0 0.0
        %2266 = vmatprep.subr.mxu0 0.0
        %2267 = vmatpush1.msra.mxu0 0.0
        %2268 = vmatprep.subr.mxu0 0.0
        %2269 = vmatpush1.msra.mxu0 0.0
        %2270 = vmatprep.subr.mxu0 0.0
        %2271 = vmatpush1.msra.mxu0 0.0
        %2272 = vmatprep.subr.mxu0 0.0
        %2273 = vmatpush1.msra.mxu0 0.0
        %2274 = vmatprep.subr.mxu0 0.0
        %2275 = vmatpush1.msra.mxu0 0.0
        %2276 = vmatprep.subr.mxu0 0.0
        %2277 = vmatpush1.msra.mxu0 0.0
        %2278 = vmatprep.subr.mxu0 0.0
        %2279 = vmatpush1.msra.mxu0 0.0
        %2280 = vmatprep.subr.mxu0 0.0
        %2281 = vmatpush1.msra.mxu0 0.0
        %2282 = vmatprep.subr.mxu0 0.0
        %2283 = vmatpush1.msra.mxu0 0.0
        %2284 = vmatprep.subr.mxu0 0.0
        %2285 = vmatpush1.msra.mxu0 0.0
        %2286 = vmatprep.subr.mxu0 0.0
        %2287 = vmatpush1.msra.mxu0 0.0
        %2288 = vmatprep.subr.mxu0 0.0
        %2289 = vmatpush1.msra.mxu0 0.0
        %2290 = vmatprep.subr.mxu0 0.0
        %2291 = vmatpush1.msra.mxu0 0.0
        %2292 = vmatprep.subr.mxu0 0.0
        %2293 = vmatpush1.msra.mxu0 0.0
        %2294 = vmatprep.subr.mxu0 0.0
        %2295 = vmatpush1.msra.mxu0 0.0
        %2296 = vmatprep.subr.mxu0 0.0
        %2297 = vmatpush1.msra.mxu0 0.0
        %2298 = vmatprep.subr.mxu0 0.0
        %2299 = vmatpush1.msra.mxu0 0.0
        %2300 = vmatprep.subr.mxu0 0.0
        %2301 = vmatpush1.msra.mxu0 0.0
        %2302 = vmatprep.subr.mxu0 0.0
        %2303 = vmatpush1.msra.mxu0 0.0
        %2304 = vmatprep.subr.mxu0 0.0
        %2305 = vmatpush1.msra.mxu0 0.0
        %2306 = vmatprep.subr.mxu0 0.0
        %2307 = vmatpush1.msra.mxu0 0.0
        %2308 = vmatprep.subr.mxu0 0.0
        %2309 = vmatpush1.msra.mxu0 0.0
        %2310 = vmatprep.mubr.f32.mxu0 0.0
        %2311 = vmatmul.mubr.f32.gmra.mrb[0].mxu0 %v2173
        %v2312 = vpop.f32.mrb[0].mxu0
        %v2313 = vadd.f32 0.0, %v2312
        %v2314 = vpop.f32.mrb[0].mxu0
        %v2315 = vadd.f32 0.0, %v2314
        %2316 = vdwg.mxu0
        %2317 = vmatprep.subr.mxu0 %v319
        %2318 = vmatpush1.msra.mxu0 %v318
        %2319 = vmatprep.subr.mxu0 %v2072
        %2320 = vmatpush1.msra.mxu0 %v2071
        %2321 = vmatprep.subr.mxu0 %v2079
        %2322 = vmatpush1.msra.mxu0 %v2078
        %2323 = vmatprep.subr.mxu0 %v2086
        %2324 = vmatpush1.msra.mxu0 %v2085
        %2325 = vmatprep.subr.mxu0 %v2093
        %2326 = vmatpush1.msra.mxu0 %v2092
        %2327 = vmatprep.subr.mxu0 %v2100
        %2328 = vmatpush1.msra.mxu0 %v2099
        %2329 = vmatprep.subr.mxu0 %v2107
        %2330 = vmatpush1.msra.mxu0 %v2106
        %2331 = vmatprep.subr.mxu0 %v2114
        %2332 = vmatpush1.msra.mxu0 %v2113
        %2333 = vmatprep.subr.mxu0 0.0
        %2334 = vmatpush1.msra.mxu0 0.0
        %2335 = vmatprep.subr.mxu0 0.0
        %2336 = vmatpush1.msra.mxu0 0.0
        %2337 = vmatprep.subr.mxu0 0.0
        %2338 = vmatpush1.msra.mxu0 0.0
        %2339 = vmatprep.subr.mxu0 0.0
        %2340 = vmatpush1.msra.mxu0 0.0
        %2341 = vmatprep.subr.mxu0 0.0
        %2342 = vmatpush1.msra.mxu0 0.0
        %2343 = vmatprep.subr.mxu0 0.0
        %2344 = vmatpush1.msra.mxu0 0.0
        %2345 = vmatprep.subr.mxu0 0.0
        %2346 = vmatpush1.msra.mxu0 0.0
        %2347 = vmatprep.subr.mxu0 0.0
        %2348 = vmatpush1.msra.mxu0 0.0
        %2349 = vmatprep.subr.mxu0 0.0
        %2350 = vmatpush1.msra.mxu0 0.0
        %2351 = vmatprep.subr.mxu0 0.0
        %2352 = vmatpush1.msra.mxu0 0.0
        %2353 = vmatprep.subr.mxu0 0.0
        %2354 = vmatpush1.msra.mxu0 0.0
        %2355 = vmatprep.subr.mxu0 0.0
        %2356 = vmatpush1.msra.mxu0 0.0
        %2357 = vmatprep.subr.mxu0 0.0
        %2358 = vmatpush1.msra.mxu0 0.0
        %2359 = vmatprep.subr.mxu0 0.0
        %2360 = vmatpush1.msra.mxu0 0.0
        %2361 = vmatprep.subr.mxu0 0.0
        %2362 = vmatpush1.msra.mxu0 0.0
        %2363 = vmatprep.subr.mxu0 0.0
        %2364 = vmatpush1.msra.mxu0 0.0
        %2365 = vmatprep.subr.mxu0 0.0
        %2366 = vmatpush1.msra.mxu0 0.0
        %2367 = vmatprep.subr.mxu0 0.0
        %2368 = vmatpush1.msra.mxu0 0.0
        %2369 = vmatprep.subr.mxu0 0.0
        %2370 = vmatpush1.msra.mxu0 0.0
        %2371 = vmatprep.subr.mxu0 0.0
        %2372 = vmatpush1.msra.mxu0 0.0
        %2373 = vmatprep.subr.mxu0 0.0
        %2374 = vmatpush1.msra.mxu0 0.0
        %2375 = vmatprep.subr.mxu0 0.0
        %2376 = vmatpush1.msra.mxu0 0.0
        %2377 = vmatprep.subr.mxu0 0.0
        %2378 = vmatpush1.msra.mxu0 0.0
        %2379 = vmatprep.subr.mxu0 0.0
        %2380 = vmatpush1.msra.mxu0 0.0
        %2381 = vmatprep.mubr.f32.mxu0 0.0
        %2382 = vmatmul.mubr.f32.gmra.mrb[0].mxu0 %v2173
        %v2383 = vpop.f32.mrb[0].mxu0
        %v2384 = vadd.f32 0.0, %v2383
        %v2385 = vpop.f32.mrb[0].mxu0
        %v2386 = vadd.f32 0.0, %v2385
        %2387 = vdwg.mxu0
        %2388 = vmatprep.subr.mxu0 %v312
        %2389 = vmatpush1.msra.mxu0 %v320
        %2390 = vmatprep.subr.mxu0 %v1970
        %2391 = vmatpush1.msra.mxu0 %v2073
        %2392 = vmatprep.subr.mxu0 %v1986
        %2393 = vmatpush1.msra.mxu0 %v2080
        %2394 = vmatprep.subr.mxu0 %v2002
        %2395 = vmatpush1.msra.mxu0 %v2087
        %2396 = vmatprep.subr.mxu0 %v2018
        %2397 = vmatpush1.msra.mxu0 %v2094
        %2398 = vmatprep.subr.mxu0 %v2034
        %2399 = vmatpush1.msra.mxu0 %v2101
        %2400 = vmatprep.subr.mxu0 %v2050
        %2401 = vmatpush1.msra.mxu0 %v2108
        %2402 = vmatprep.subr.mxu0 %v2066
        %2403 = vmatpush1.msra.mxu0 %v2115
        %2404 = vmatprep.subr.mxu0 0.0
        %2405 = vmatpush1.msra.mxu0 0.0
        %2406 = vmatprep.subr.mxu0 0.0
        %2407 = vmatpush1.msra.mxu0 0.0
        %2408 = vmatprep.subr.mxu0 0.0
        %2409 = vmatpush1.msra.mxu0 0.0
        %2410 = vmatprep.subr.mxu0 0.0
        %2411 = vmatpush1.msra.mxu0 0.0
        %2412 = vmatprep.subr.mxu0 0.0
        %2413 = vmatpush1.msra.mxu0 0.0
        %2414 = vmatprep.subr.mxu0 0.0
        %2415 = vmatpush1.msra.mxu0 0.0
        %2416 = vmatprep.subr.mxu0 0.0
        %2417 = vmatpush1.msra.mxu0 0.0
        %2418 = vmatprep.subr.mxu0 0.0
        %2419 = vmatpush1.msra.mxu0 0.0
        %2420 = vmatprep.subr.mxu0 0.0
        %2421 = vmatpush1.msra.mxu0 0.0
        %2422 = vmatprep.subr.mxu0 0.0
        %2423 = vmatpush1.msra.mxu0 0.0
        %2424 = vmatprep.subr.mxu0 0.0
        %2425 = vmatpush1.msra.mxu0 0.0
        %2426 = vmatprep.subr.mxu0 0.0
        %2427 = vmatpush1.msra.mxu0 0.0
        %2428 = vmatprep.subr.mxu0 0.0
        %2429 = vmatpush1.msra.mxu0 0.0
        %2430 = vmatprep.subr.mxu0 0.0
        %2431 = vmatpush1.msra.mxu0 0.0
        %2432 = vmatprep.subr.mxu0 0.0
        %2433 = vmatpush1.msra.mxu0 0.0
        %2434 = vmatprep.subr.mxu0 0.0
        %2435 = vmatpush1.msra.mxu0 0.0
        %2436 = vmatprep.subr.mxu0 0.0
        %2437 = vmatpush1.msra.mxu0 0.0
        %2438 = vmatprep.subr.mxu0 0.0
        %2439 = vmatpush1.msra.mxu0 0.0
        %2440 = vmatprep.subr.mxu0 0.0
        %2441 = vmatpush1.msra.mxu0 0.0
        %2442 = vmatprep.subr.mxu0 0.0
        %2443 = vmatpush1.msra.mxu0 0.0
        %2444 = vmatprep.subr.mxu0 0.0
        %2445 = vmatpush1.msra.mxu0 0.0
        %2446 = vmatprep.subr.mxu0 0.0
        %2447 = vmatpush1.msra.mxu0 0.0
        %2448 = vmatprep.subr.mxu0 0.0
        %2449 = vmatpush1.msra.mxu0 0.0
        %2450 = vmatprep.subr.mxu0 0.0
        %2451 = vmatpush1.msra.mxu0 0.0
        %2452 = vmatprep.mubr.f32.mxu0 0.0
        %2453 = vmatmul.mubr.f32.gmra.mrb[0].mxu0 %v2173
        %v2454 = vpop.f32.mrb[0].mxu0
        %v2455 = vadd.f32 0.0, %v2454
        %v2456 = vpop.f32.mrb[0].mxu0
        %v2457 = vadd.f32 0.0, %v2456
        %2458 = vdwg.mxu0
        %v2459 = vmul.f32 %v2242, %v763
        %v2460 = vmul.f32 %v2244, %v767
        %v2461 = vmul.f32 %v2313, %v771
        %v2462 = vmul.f32 %v2315, %v775
        %v2463 = vmul.f32 %v2384, %v779
        %v2464 = vmul.f32 %v2386, %v783
        %v2465 = vmul.f32 %v2455, %v787
        %v2466 = vmul.f32 %v2457, %v791
        %v2467 = vadd.f32 %v2459, %v2460
        %v2468 = vadd.f32 %v2467, %v2461
        %v2469 = vadd.f32 %v2468, %v2462
        %v2470 = vadd.f32 %v2469, %v2463
        %v2471 = vadd.f32 %v2470, %v2464
        %v2472 = vadd.f32 %v2471, %v2465
        %v2473 = vsel %vm814, %v2466, 0.0
        %v2474 = vadd.f32 %v2472, %v2473
        %2475 = vadd.xlane.f32.xlu0 %v2474
        %v2476 = vpop.xlane.xlu0 %2475
        %v2477 = vadd.f32 %v1924, %v2476
        %v2478 = vmul.f32 %v2459, %v2242
        %v2479 = vmul.f32 %v2460, %v2244
        %v2480 = vmul.f32 %v2461, %v2313
        %v2481 = vmul.f32 %v2462, %v2315
        %v2482 = vmul.f32 %v2463, %v2384
        %v2483 = vmul.f32 %v2464, %v2386
        %v2484 = vmul.f32 %v2465, %v2455
        %v2485 = vmul.f32 %v2466, %v2457
        %v2486 = vadd.f32 %v2478, %v2479
        %v2487 = vadd.f32 %v2486, %v2480
        %v2488 = vadd.f32 %v2487, %v2481
        %v2489 = vadd.f32 %v2488, %v2482
        %v2490 = vadd.f32 %v2489, %v2483
        %v2491 = vadd.f32 %v2490, %v2484
        %v2492 = vsel %vm814, %v2485, 0.0
        %v2493 = vadd.f32 %v2491, %v2492
        %2494 = vadd.xlane.f32.xlu0 %v2493
        %v2495 = vpop.xlane.xlu0 %2494
        %v2496 = vadd.f32 %v1943, %v2495
        %s2497 = scalar_lea.vmem %s213, 192 [#allocation8]
        %2498 = vst [vmem:[%s2497] sm:$0xff] %v2242
        %2499 = vst [vmem:[%s2497 + $0x8] sm:$0xff] %v2244
        %2500 = vst [vmem:[%s2497 + $0x10] sm:$0xff] %v2313
        %2501 = vst [vmem:[%s2497 + $0x18] sm:$0xff] %v2315
        %2502 = vst [vmem:[%s2497 + $0x20] sm:$0xff] %v2384
        %2503 = vst [vmem:[%s2497 + $0x28] sm:$0xff] %v2386
        %2504 = vst [vmem:[%s2497 + $0x30] sm:$0xff] %v2455
        %2505 = vst.msk [vmem:[%s2497 + $0x38] sm:$0xff] %vm814, %v2457
        %2506 = vrot.lane.b32.xlu0 %v222, 127
        %v2507 = vpop.permute.xlu0 %2506
        %v2508 = vsel %vm249, %v248, %v2507
        %2509 = vrot.lane.b32.xlu0 %v222, 118
        %v2510 = vpop.permute.xlu0 %2509
        %v2511 = vsel %vm281, %v280, %v2510
        %2512 = vrot.lane.b32.xlu0 %v222, 117
        %v2513 = vpop.permute.xlu0 %2512
        %v2514 = vsel %vm313, %v312, %v2513
        %2516 = vrot.lane.b32.xlu0 %v223, 28
        %v2517 = vpop.permute.xlu0 %2516
        %v2518 = vsel %vm348, %v347, %v2517
        %2519 = vrot.lane.b32.xlu0 %v223, 27
        %v2520 = vpop.permute.xlu0 %2519
        %v2521 = vsel %vm383, %v382, %v2520
        %2522 = vrot.lane.b32.xlu0 %v223, 18
        %v2523 = vpop.permute.xlu0 %2522
        %v2524 = vsel %vm418, %v417, %v2523
        %2525 = vrot.lane.b32.xlu0 %v223, 17
        %v2526 = vpop.permute.xlu0 %2525
        %v2527 = vsel %vm453, %v452, %v2526
        %s2528 = scalar_lea.vmem [#allocation5], 32
        %v2529 = vld [vmem:[%s2528] sm:$0xff]
        %2530 = vrot.lane.b32.xlu0 %v250, 28
        %v2531 = vpop.permute.xlu0 %2530
        %2532 = vrot.lane.b32.xlu0 %v251, 28
        %v2533 = vpop.permute.xlu0 %2532
        %2534 = vrot.lane.b32.xlu0 %v252, 28
        %v2535 = vpop.permute.xlu0 %2534
        %2536 = vrot.lane.b32.xlu0 %v253, 28
        %v2537 = vpop.permute.xlu0 %2536
        %2538 = vrot.lane.b32.xlu0 %v254, 28
        %v2539 = vpop.permute.xlu0 %2538
        %2540 = vrot.lane.b32.xlu0 %v255, 28
        %v2541 = vpop.permute.xlu0 %2540
        %2542 = vrot.lane.b32.xlu0 %v256, 28
        %v2543 = vpop.permute.xlu0 %2542
        %2544 = vrot.lane.b32.xlu0 %v2508, 28
        %v2545 = vpop.permute.xlu0 %2544
        %2546 = vrot.lane.b32.xlu0 %v2507, 28
        %v2547 = vpop.permute.xlu0 %2546
        %2548 = vrot.lane.b32.xlu0 %v282, 28
        %v2549 = vpop.permute.xlu0 %2548
        %2550 = vrot.lane.b32.xlu0 %v283, 28
        %v2551 = vpop.permute.xlu0 %2550
        %2552 = vrot.lane.b32.xlu0 %v284, 28
        %v2553 = vpop.permute.xlu0 %2552
        %2554 = vrot.lane.b32.xlu0 %v285, 28
        %v2555 = vpop.permute.xlu0 %2554
        %2556 = vrot.lane.b32.xlu0 %v286, 28
        %v2557 = vpop.permute.xlu0 %2556
        %2558 = vrot.lane.b32.xlu0 %v287, 28
        %v2559 = vpop.permute.xlu0 %2558
        %2560 = vrot.lane.b32.xlu0 %v288, 28
        %v2561 = vpop.permute.xlu0 %2560
        %2562 = vrot.lane.b32.xlu0 %v2511, 28
        %v2563 = vpop.permute.xlu0 %2562
        %2564 = vrot.lane.b32.xlu0 %v2510, 28
        %v2565 = vpop.permute.xlu0 %2564
        %2566 = vrot.lane.b32.xlu0 %v314, 28
        %v2567 = vpop.permute.xlu0 %2566
        %2568 = vrot.lane.b32.xlu0 %v315, 28
        %v2569 = vpop.permute.xlu0 %2568
        %2570 = vrot.lane.b32.xlu0 %v316, 28
        %v2571 = vpop.permute.xlu0 %2570
        %2572 = vrot.lane.b32.xlu0 %v317, 28
        %v2573 = vpop.permute.xlu0 %2572
        %2574 = vrot.lane.b32.xlu0 %v318, 28
        %v2575 = vpop.permute.xlu0 %2574
        %2576 = vrot.lane.b32.xlu0 %v319, 28
        %v2577 = vpop.permute.xlu0 %2576
        %2578 = vrot.lane.b32.xlu0 %v320, 28
        %v2579 = vpop.permute.xlu0 %2578
        %2580 = vrot.lane.b32.xlu0 %v2514, 28
        %v2581 = vpop.permute.xlu0 %2580
        %2582 = vrot.lane.b32.xlu0 %v2513, 28
        %v2583 = vpop.permute.xlu0 %2582
        %2584 = vrot.lane.b32.xlu0 %v333, 28
        %v2585 = vpop.permute.xlu0 %2584
        %2586 = vrot.lane.b32.xlu0 %v350, 28
        %v2587 = vpop.permute.xlu0 %2586
        %2588 = vrot.lane.b32.xlu0 %v351, 28
        %v2589 = vpop.permute.xlu0 %2588
        %2590 = vrot.lane.b32.xlu0 %v352, 28
        %v2591 = vpop.permute.xlu0 %2590
        %2592 = vrot.lane.b32.xlu0 %v353, 28
        %v2593 = vpop.permute.xlu0 %2592
        %2594 = vrot.lane.b32.xlu0 %v354, 28
        %v2595 = vpop.permute.xlu0 %2594
        %2596 = vrot.lane.b32.xlu0 %v355, 28
        %v2597 = vpop.permute.xlu0 %2596
        %2598 = vrot.lane.b32.xlu0 %v356, 28
        %v2599 = vpop.permute.xlu0 %2598
        %2600 = vrot.lane.b32.xlu0 %v2518, 28
        %v2601 = vpop.permute.xlu0 %2600
        %2602 = vrot.lane.b32.xlu0 %v368, 28
        %v2603 = vpop.permute.xlu0 %2602
        %2604 = vrot.lane.b32.xlu0 %v385, 28
        %v2605 = vpop.permute.xlu0 %2604
        %2606 = vrot.lane.b32.xlu0 %v386, 28
        %v2607 = vpop.permute.xlu0 %2606
        %2608 = vrot.lane.b32.xlu0 %v387, 28
        %v2609 = vpop.permute.xlu0 %2608
        %2610 = vrot.lane.b32.xlu0 %v388, 28
        %v2611 = vpop.permute.xlu0 %2610
        %2612 = vrot.lane.b32.xlu0 %v389, 28
        %v2613 = vpop.permute.xlu0 %2612
        %2614 = vrot.lane.b32.xlu0 %v390, 28
        %v2615 = vpop.permute.xlu0 %2614
        %2616 = vrot.lane.b32.xlu0 %v391, 28
        %v2617 = vpop.permute.xlu0 %2616
        %2618 = vrot.lane.b32.xlu0 %v2521, 28
        %v2619 = vpop.permute.xlu0 %2618
        %2620 = vrot.lane.b32.xlu0 %v403, 28
        %v2621 = vpop.permute.xlu0 %2620
        %2622 = vrot.lane.b32.xlu0 %v420, 28
        %v2623 = vpop.permute.xlu0 %2622
        %2624 = vrot.lane.b32.xlu0 %v421, 28
        %v2625 = vpop.permute.xlu0 %2624
        %2626 = vrot.lane.b32.xlu0 %v422, 28
        %v2627 = vpop.permute.xlu0 %2626
        %2628 = vrot.lane.b32.xlu0 %v423, 28
        %v2629 = vpop.permute.xlu0 %2628
        %2630 = vrot.lane.b32.xlu0 %v424, 28
        %v2631 = vpop.permute.xlu0 %2630
        %2632 = vrot.lane.b32.xlu0 %v425, 28
        %v2633 = vpop.permute.xlu0 %2632
        %2634 = vrot.lane.b32.xlu0 %v426, 28
        %v2635 = vpop.permute.xlu0 %2634
        %2636 = vrot.lane.b32.xlu0 %v2524, 28
        %v2637 = vpop.permute.xlu0 %2636
        %2638 = vrot.lane.b32.xlu0 %v438, 28
        %v2639 = vpop.permute.xlu0 %2638
        %2640 = vrot.lane.b32.xlu0 %v455, 28
        %v2641 = vpop.permute.xlu0 %2640
        %2642 = vrot.lane.b32.xlu0 %v456, 28
        %v2643 = vpop.permute.xlu0 %2642
        %2644 = vrot.lane.b32.xlu0 %v457, 28
        %v2645 = vpop.permute.xlu0 %2644
        %2646 = vrot.lane.b32.xlu0 %v458, 28
        %v2647 = vpop.permute.xlu0 %2646
        %2648 = vrot.lane.b32.xlu0 %v459, 28
        %v2649 = vpop.permute.xlu0 %2648
        %2650 = vrot.lane.b32.xlu0 %v460, 28
        %v2651 = vpop.permute.xlu0 %2650
        %2652 = vrot.lane.b32.xlu0 %v461, 28
        %v2653 = vpop.permute.xlu0 %2652
        %2654 = vrot.lane.b32.xlu0 %v2527, 28
        %v2655 = vpop.permute.xlu0 %2654
        %v2656 = vsel %vm348, %v2531, %v2533
        %v2657 = vsel %vm348, %v2533, %v2535
        %v2658 = vsel %vm348, %v2535, %v2537
        %v2659 = vsel %vm348, %v2537, %v2539
        %v2660 = vsel %vm348, %v2539, %v2541
        %v2661 = vsel %vm348, %v2541, %v2543
        %v2662 = vsel %vm348, %v2543, %v2545
        %v2663 = vsel %vm348, %v2545, %v2547
        %v2664 = vsel %vm348, %v2549, %v2551
        %v2665 = vsel %vm348, %v2551, %v2553
        %v2666 = vsel %vm348, %v2553, %v2555
        %v2667 = vsel %vm348, %v2555, %v2557
        %v2668 = vsel %vm348, %v2557, %v2559
        %v2669 = vsel %vm348, %v2559, %v2561
        %v2670 = vsel %vm348, %v2561, %v2563
        %v2671 = vsel %vm348, %v2563, %v2565
        %v2672 = vsel %vm348, %v2567, %v2569
        %v2673 = vsel %vm348, %v2569, %v2571
        %v2674 = vsel %vm348, %v2571, %v2573
        %v2675 = vsel %vm348, %v2573, %v2575
        %v2676 = vsel %vm348, %v2575, %v2577
        %v2677 = vsel %vm348, %v2577, %v2579
        %v2678 = vsel %vm348, %v2579, %v2581
        %v2679 = vsel %vm348, %v2581, %v2583
        %v2680 = vsel %vm348, %v2585, %v2587
        %v2681 = vsel %vm348, %v2587, %v2589
        %v2682 = vsel %vm348, %v2589, %v2591
        %v2683 = vsel %vm348, %v2591, %v2593
        %v2684 = vsel %vm348, %v2593, %v2595
        %v2685 = vsel %vm348, %v2595, %v2597
        %v2686 = vsel %vm348, %v2597, %v2599
        %v2687 = vsel %vm348, %v2599, %v2601
        %v2688 = vsel %vm348, %v2603, %v2605
        %v2689 = vsel %vm348, %v2605, %v2607
        %v2690 = vsel %vm348, %v2607, %v2609
        %v2691 = vsel %vm348, %v2609, %v2611
        %v2692 = vsel %vm348, %v2611, %v2613
        %v2693 = vsel %vm348, %v2613, %v2615
        %v2694 = vsel %vm348, %v2615, %v2617
        %v2695 = vsel %vm348, %v2617, %v2619
        %v2696 = vsel %vm348, %v2621, %v2623
        %v2697 = vsel %vm348, %v2623, %v2625
        %v2698 = vsel %vm348, %v2625, %v2627
        %v2699 = vsel %vm348, %v2627, %v2629
        %v2700 = vsel %vm348, %v2629, %v2631
        %v2701 = vsel %vm348, %v2631, %v2633
        %v2702 = vsel %vm348, %v2633, %v2635
        %v2703 = vsel %vm348, %v2635, %v2637
        %v2704 = vsel %vm348, %v2639, %v2641
        %v2705 = vsel %vm348, %v2641, %v2643
        %v2706 = vsel %vm348, %v2643, %v2645
        %v2707 = vsel %vm348, %v2645, %v2647
        %v2708 = vsel %vm348, %v2647, %v2649
        %v2709 = vsel %vm348, %v2649, %v2651
        %v2710 = vsel %vm348, %v2651, %v2653
        %v2711 = vsel %vm348, %v2653, %v2655
        %v2769 = vsel %vm471, %v2529, 0
        %2771 = vmatprep.subr.mxu0 %v350
        %2772 = vmatpush1.msra.mxu0 %v349
        %2773 = vmatprep.subr.mxu0 %v2657
        %2774 = vmatpush1.msra.mxu0 %v2656
        %2775 = vmatprep.subr.mxu0 %v2665
        %2776 = vmatpush1.msra.mxu0 %v2664
        %2777 = vmatprep.subr.mxu0 %v2673
        %2778 = vmatpush1.msra.mxu0 %v2672
        %2779 = vmatprep.subr.mxu0 %v2681
        %2780 = vmatpush1.msra.mxu0 %v2680
        %2781 = vmatprep.subr.mxu0 %v2689
        %2782 = vmatpush1.msra.mxu0 %v2688
        %2783 = vmatprep.subr.mxu0 %v2697
        %2784 = vmatpush1.msra.mxu0 %v2696
        %2785 = vmatprep.subr.mxu0 %v2705
        %2786 = vmatpush1.msra.mxu0 %v2704
        %2787 = vmatprep.subr.mxu0 0.0
        %2788 = vmatpush1.msra.mxu0 0.0
        %2789 = vmatprep.subr.mxu0 0.0
        %2790 = vmatpush1.msra.mxu0 0.0
        %2791 = vmatprep.subr.mxu0 0.0
        %2792 = vmatpush1.msra.mxu0 0.0
        %2793 = vmatprep.subr.mxu0 0.0
        %2794 = vmatpush1.msra.mxu0 0.0
        %2795 = vmatprep.subr.mxu0 0.0
        %2796 = vmatpush1.msra.mxu0 0.0
        %2797 = vmatprep.subr.mxu0 0.0
        %2798 = vmatpush1.msra.mxu0 0.0
        %2799 = vmatprep.subr.mxu0 0.0
        %2800 = vmatpush1.msra.mxu0 0.0
        %2801 = vmatprep.subr.mxu0 0.0
        %2802 = vmatpush1.msra.mxu0 0.0
        %2803 = vmatprep.subr.mxu0 0.0
        %2804 = vmatpush1.msra.mxu0 0.0
        %2805 = vmatprep.subr.mxu0 0.0
        %2806 = vmatpush1.msra.mxu0 0.0
        %2807 = vmatprep.subr.mxu0 0.0
        %2808 = vmatpush1.msra.mxu0 0.0
        %2809 = vmatprep.subr.mxu0 0.0
        %2810 = vmatpush1.msra.mxu0 0.0
        %2811 = vmatprep.subr.mxu0 0.0
        %2812 = vmatpush1.msra.mxu0 0.0
        %2813 = vmatprep.subr.mxu0 0.0
        %2814 = vmatpush1.msra.mxu0 0.0
        %2815 = vmatprep.subr.mxu0 0.0
        %2816 = vmatpush1.msra.mxu0 0.0
        %2817 = vmatprep.subr.mxu0 0.0
        %2818 = vmatpush1.msra.mxu0 0.0
        %2819 = vmatprep.subr.mxu0 0.0
        %2820 = vmatpush1.msra.mxu0 0.0
        %2821 = vmatprep.subr.mxu0 0.0
        %2822 = vmatpush1.msra.mxu0 0.0
        %2823 = vmatprep.subr.mxu0 0.0
        %2824 = vmatpush1.msra.mxu0 0.0
        %2825 = vmatprep.subr.mxu0 0.0
        %2826 = vmatpush1.msra.mxu0 0.0
        %2827 = vmatprep.subr.mxu0 0.0
        %2828 = vmatpush1.msra.mxu0 0.0
        %2829 = vmatprep.subr.mxu0 0.0
        %2830 = vmatpush1.msra.mxu0 0.0
        %2831 = vmatprep.subr.mxu0 0.0
        %2832 = vmatpush1.msra.mxu0 0.0
        %2833 = vmatprep.subr.mxu0 0.0
        %2834 = vmatpush1.msra.mxu0 0.0
        %2835 = vmatprep.mubr.f32.mxu0 0.0
        %2836 = vmatmul.mubr.f32.gmra.mrb[0].mxu0 %v2769
        %v2837 = vpop.f32.mrb[0].mxu0
        %v2838 = vadd.f32 0.0, %v2837
        %v2839 = vpop.f32.mrb[0].mxu0
        %v2840 = vadd.f32 0.0, %v2839
        %2841 = vdwg.mxu0
        %2842 = vmatprep.subr.mxu0 %v352
        %2843 = vmatpush1.msra.mxu0 %v351
        %2844 = vmatprep.subr.mxu0 %v2659
        %2845 = vmatpush1.msra.mxu0 %v2658
        %2846 = vmatprep.subr.mxu0 %v2667
        %2847 = vmatpush1.msra.mxu0 %v2666
        %2848 = vmatprep.subr.mxu0 %v2675
        %2849 = vmatpush1.msra.mxu0 %v2674
        %2850 = vmatprep.subr.mxu0 %v2683
        %2851 = vmatpush1.msra.mxu0 %v2682
        %2852 = vmatprep.subr.mxu0 %v2691
        %2853 = vmatpush1.msra.mxu0 %v2690
        %2854 = vmatprep.subr.mxu0 %v2699
        %2855 = vmatpush1.msra.mxu0 %v2698
        %2856 = vmatprep.subr.mxu0 %v2707
        %2857 = vmatpush1.msra.mxu0 %v2706
        %2858 = vmatprep.subr.mxu0 0.0
        %2859 = vmatpush1.msra.mxu0 0.0
        %2860 = vmatprep.subr.mxu0 0.0
        %2861 = vmatpush1.msra.mxu0 0.0
        %2862 = vmatprep.subr.mxu0 0.0
        %2863 = vmatpush1.msra.mxu0 0.0
        %2864 = vmatprep.subr.mxu0 0.0
        %2865 = vmatpush1.msra.mxu0 0.0
        %2866 = vmatprep.subr.mxu0 0.0
        %2867 = vmatpush1.msra.mxu0 0.0
        %2868 = vmatprep.subr.mxu0 0.0
        %2869 = vmatpush1.msra.mxu0 0.0
        %2870 = vmatprep.subr.mxu0 0.0
        %2871 = vmatpush1.msra.mxu0 0.0
        %2872 = vmatprep.subr.mxu0 0.0
        %2873 = vmatpush1.msra.mxu0 0.0
        %2874 = vmatprep.subr.mxu0 0.0
        %2875 = vmatpush1.msra.mxu0 0.0
        %2876 = vmatprep.subr.mxu0 0.0
        %2877 = vmatpush1.msra.mxu0 0.0
        %2878 = vmatprep.subr.mxu0 0.0
        %2879 = vmatpush1.msra.mxu0 0.0
        %2880 = vmatprep.subr.mxu0 0.0
        %2881 = vmatpush1.msra.mxu0 0.0
        %2882 = vmatprep.subr.mxu0 0.0
        %2883 = vmatpush1.msra.mxu0 0.0
        %2884 = vmatprep.subr.mxu0 0.0
        %2885 = vmatpush1.msra.mxu0 0.0
        %2886 = vmatprep.subr.mxu0 0.0
        %2887 = vmatpush1.msra.mxu0 0.0
        %2888 = vmatprep.subr.mxu0 0.0
        %2889 = vmatpush1.msra.mxu0 0.0
        %2890 = vmatprep.subr.mxu0 0.0
        %2891 = vmatpush1.msra.mxu0 0.0
        %2892 = vmatprep.subr.mxu0 0.0
        %2893 = vmatpush1.msra.mxu0 0.0
        %2894 = vmatprep.subr.mxu0 0.0
        %2895 = vmatpush1.msra.mxu0 0.0
        %2896 = vmatprep.subr.mxu0 0.0
        %2897 = vmatpush1.msra.mxu0 0.0
        %2898 = vmatprep.subr.mxu0 0.0
        %2899 = vmatpush1.msra.mxu0 0.0
        %2900 = vmatprep.subr.mxu0 0.0
        %2901 = vmatpush1.msra.mxu0 0.0
        %2902 = vmatprep.subr.mxu0 0.0
        %2903 = vmatpush1.msra.mxu0 0.0
        %2904 = vmatprep.subr.mxu0 0.0
        %2905 = vmatpush1.msra.mxu0 0.0
        %2906 = vmatprep.mubr.f32.mxu0 0.0
        %2907 = vmatmul.mubr.f32.gmra.mrb[0].mxu0 %v2769
        %v2908 = vpop.f32.mrb[0].mxu0
        %v2909 = vadd.f32 0.0, %v2908
        %v2910 = vpop.f32.mrb[0].mxu0
        %v2911 = vadd.f32 0.0, %v2910
        %2912 = vdwg.mxu0
        %2913 = vmatprep.subr.mxu0 %v354
        %2914 = vmatpush1.msra.mxu0 %v353
        %2915 = vmatprep.subr.mxu0 %v2661
        %2916 = vmatpush1.msra.mxu0 %v2660
        %2917 = vmatprep.subr.mxu0 %v2669
        %2918 = vmatpush1.msra.mxu0 %v2668
        %2919 = vmatprep.subr.mxu0 %v2677
        %2920 = vmatpush1.msra.mxu0 %v2676
        %2921 = vmatprep.subr.mxu0 %v2685
        %2922 = vmatpush1.msra.mxu0 %v2684
        %2923 = vmatprep.subr.mxu0 %v2693
        %2924 = vmatpush1.msra.mxu0 %v2692
        %2925 = vmatprep.subr.mxu0 %v2701
        %2926 = vmatpush1.msra.mxu0 %v2700
        %2927 = vmatprep.subr.mxu0 %v2709
        %2928 = vmatpush1.msra.mxu0 %v2708
        %2929 = vmatprep.subr.mxu0 0.0
        %2930 = vmatpush1.msra.mxu0 0.0
        %2931 = vmatprep.subr.mxu0 0.0
        %2932 = vmatpush1.msra.mxu0 0.0
        %2933 = vmatprep.subr.mxu0 0.0
        %2934 = vmatpush1.msra.mxu0 0.0
        %2935 = vmatprep.subr.mxu0 0.0
        %2936 = vmatpush1.msra.mxu0 0.0
        %2937 = vmatprep.subr.mxu0 0.0
        %2938 = vmatpush1.msra.mxu0 0.0
        %2939 = vmatprep.subr.mxu0 0.0
        %2940 = vmatpush1.msra.mxu0 0.0
        %2941 = vmatprep.subr.mxu0 0.0
        %2942 = vmatpush1.msra.mxu0 0.0
        %2943 = vmatprep.subr.mxu0 0.0
        %2944 = vmatpush1.msra.mxu0 0.0
        %2945 = vmatprep.subr.mxu0 0.0
        %2946 = vmatpush1.msra.mxu0 0.0
        %2947 = vmatprep.subr.mxu0 0.0
        %2948 = vmatpush1.msra.mxu0 0.0
        %2949 = vmatprep.subr.mxu0 0.0
        %2950 = vmatpush1.msra.mxu0 0.0
        %2951 = vmatprep.subr.mxu0 0.0
        %2952 = vmatpush1.msra.mxu0 0.0
        %2953 = vmatprep.subr.mxu0 0.0
        %2954 = vmatpush1.msra.mxu0 0.0
        %2955 = vmatprep.subr.mxu0 0.0
        %2956 = vmatpush1.msra.mxu0 0.0
        %2957 = vmatprep.subr.mxu0 0.0
        %2958 = vmatpush1.msra.mxu0 0.0
        %2959 = vmatprep.subr.mxu0 0.0
        %2960 = vmatpush1.msra.mxu0 0.0
        %2961 = vmatprep.subr.mxu0 0.0
        %2962 = vmatpush1.msra.mxu0 0.0
        %2963 = vmatprep.subr.mxu0 0.0
        %2964 = vmatpush1.msra.mxu0 0.0
        %2965 = vmatprep.subr.mxu0 0.0
        %2966 = vmatpush1.msra.mxu0 0.0
        %2967 = vmatprep.subr.mxu0 0.0
        %2968 = vmatpush1.msra.mxu0 0.0
        %2969 = vmatprep.subr.mxu0 0.0
        %2970 = vmatpush1.msra.mxu0 0.0
        %2971 = vmatprep.subr.mxu0 0.0
        %2972 = vmatpush1.msra.mxu0 0.0
        %2973 = vmatprep.subr.mxu0 0.0
        %2974 = vmatpush1.msra.mxu0 0.0
        %2975 = vmatprep.subr.mxu0 0.0
        %2976 = vmatpush1.msra.mxu0 0.0
        %2977 = vmatprep.mubr.f32.mxu0 0.0
        %2978 = vmatmul.mubr.f32.gmra.mrb[0].mxu0 %v2769
        %v2979 = vpop.f32.mrb[0].mxu0
        %v2980 = vadd.f32 0.0, %v2979
        %v2981 = vpop.f32.mrb[0].mxu0
        %v2982 = vadd.f32 0.0, %v2981
        %2983 = vdwg.mxu0
        %2984 = vmatprep.subr.mxu0 %v356
        %2985 = vmatpush1.msra.mxu0 %v355
        %2986 = vmatprep.subr.mxu0 %v2663
        %2987 = vmatpush1.msra.mxu0 %v2662
        %2988 = vmatprep.subr.mxu0 %v2671
        %2989 = vmatpush1.msra.mxu0 %v2670
        %2990 = vmatprep.subr.mxu0 %v2679
        %2991 = vmatpush1.msra.mxu0 %v2678
        %2992 = vmatprep.subr.mxu0 %v2687
        %2993 = vmatpush1.msra.mxu0 %v2686
        %2994 = vmatprep.subr.mxu0 %v2695
        %2995 = vmatpush1.msra.mxu0 %v2694
        %2996 = vmatprep.subr.mxu0 %v2703
        %2997 = vmatpush1.msra.mxu0 %v2702
        %2998 = vmatprep.subr.mxu0 %v2711
        %2999 = vmatpush1.msra.mxu0 %v2710
        %3000 = vmatprep.subr.mxu0 0.0
        %3001 = vmatpush1.msra.mxu0 0.0
        %3002 = vmatprep.subr.mxu0 0.0
        %3003 = vmatpush1.msra.mxu0 0.0
        %3004 = vmatprep.subr.mxu0 0.0
        %3005 = vmatpush1.msra.mxu0 0.0
        %3006 = vmatprep.subr.mxu0 0.0
        %3007 = vmatpush1.msra.mxu0 0.0
        %3008 = vmatprep.subr.mxu0 0.0
        %3009 = vmatpush1.msra.mxu0 0.0
        %3010 = vmatprep.subr.mxu0 0.0
        %3011 = vmatpush1.msra.mxu0 0.0
        %3012 = vmatprep.subr.mxu0 0.0
        %3013 = vmatpush1.msra.mxu0 0.0
        %3014 = vmatprep.subr.mxu0 0.0
        %3015 = vmatpush1.msra.mxu0 0.0
        %3016 = vmatprep.subr.mxu0 0.0
        %3017 = vmatpush1.msra.mxu0 0.0
        %3018 = vmatprep.subr.mxu0 0.0
        %3019 = vmatpush1.msra.mxu0 0.0
        %3020 = vmatprep.subr.mxu0 0.0
        %3021 = vmatpush1.msra.mxu0 0.0
        %3022 = vmatprep.subr.mxu0 0.0
        %3023 = vmatpush1.msra.mxu0 0.0
        %3024 = vmatprep.subr.mxu0 0.0
        %3025 = vmatpush1.msra.mxu0 0.0
        %3026 = vmatprep.subr.mxu0 0.0
        %3027 = vmatpush1.msra.mxu0 0.0
        %3028 = vmatprep.subr.mxu0 0.0
        %3029 = vmatpush1.msra.mxu0 0.0
        %3030 = vmatprep.subr.mxu0 0.0
        %3031 = vmatpush1.msra.mxu0 0.0
        %3032 = vmatprep.subr.mxu0 0.0
        %3033 = vmatpush1.msra.mxu0 0.0
        %3034 = vmatprep.subr.mxu0 0.0
        %3035 = vmatpush1.msra.mxu0 0.0
        %3036 = vmatprep.subr.mxu0 0.0
        %3037 = vmatpush1.msra.mxu0 0.0
        %3038 = vmatprep.subr.mxu0 0.0
        %3039 = vmatpush1.msra.mxu0 0.0
        %3040 = vmatprep.subr.mxu0 0.0
        %3041 = vmatpush1.msra.mxu0 0.0
        %3042 = vmatprep.subr.mxu0 0.0
        %3043 = vmatpush1.msra.mxu0 0.0
        %3044 = vmatprep.subr.mxu0 0.0
        %3045 = vmatpush1.msra.mxu0 0.0
        %3046 = vmatprep.subr.mxu0 0.0
        %3047 = vmatpush1.msra.mxu0 0.0
        %3048 = vmatprep.mubr.f32.mxu0 0.0
        %3049 = vmatmul.mubr.f32.gmra.mrb[0].mxu0 %v2769
        %v3050 = vpop.f32.mrb[0].mxu0
        %v3051 = vadd.f32 0.0, %v3050
        %v3052 = vpop.f32.mrb[0].mxu0
        %v3053 = vadd.f32 0.0, %v3052
        %3054 = vdwg.mxu0
        %v3055 = vmul.f32 %v2838, %v763
        %v3056 = vmul.f32 %v2840, %v767
        %v3057 = vmul.f32 %v2909, %v771
        %v3058 = vmul.f32 %v2911, %v775
        %v3059 = vmul.f32 %v2980, %v779
        %v3060 = vmul.f32 %v2982, %v783
        %v3061 = vmul.f32 %v3051, %v787
        %v3062 = vmul.f32 %v3053, %v791
        %v3063 = vadd.f32 %v3055, %v3056
        %v3064 = vadd.f32 %v3063, %v3057
        %v3065 = vadd.f32 %v3064, %v3058
        %v3066 = vadd.f32 %v3065, %v3059
        %v3067 = vadd.f32 %v3066, %v3060
        %v3068 = vadd.f32 %v3067, %v3061
        %v3069 = vsel %vm814, %v3062, 0.0
        %v3070 = vadd.f32 %v3068, %v3069
        %3071 = vadd.xlane.f32.xlu0 %v3070
        %v3072 = vpop.xlane.xlu0 %3071
        %v3073 = vadd.f32 %v2477, %v3072
        %v3074 = vmul.f32 %v3055, %v2838
        %v3075 = vmul.f32 %v3056, %v2840
        %v3076 = vmul.f32 %v3057, %v2909
        %v3077 = vmul.f32 %v3058, %v2911
        %v3078 = vmul.f32 %v3059, %v2980
        %v3079 = vmul.f32 %v3060, %v2982
        %v3080 = vmul.f32 %v3061, %v3051
        %v3081 = vmul.f32 %v3062, %v3053
        %v3082 = vadd.f32 %v3074, %v3075
        %v3083 = vadd.f32 %v3082, %v3076
        %v3084 = vadd.f32 %v3083, %v3077
        %v3085 = vadd.f32 %v3084, %v3078
        %v3086 = vadd.f32 %v3085, %v3079
        %v3087 = vadd.f32 %v3086, %v3080
        %v3088 = vsel %vm814, %v3081, 0.0
        %v3089 = vadd.f32 %v3087, %v3088
        %3090 = vadd.xlane.f32.xlu0 %v3089
        %v3091 = vpop.xlane.xlu0 %3090
        %v3092 = vadd.f32 %v2496, %v3091
        %s3093 = scalar_lea.vmem %s213, 256 [#allocation8]
        %3094 = vst [vmem:[%s3093] sm:$0xff] %v2838
        %3095 = vst [vmem:[%s3093 + $0x8] sm:$0xff] %v2840
        %3096 = vst [vmem:[%s3093 + $0x10] sm:$0xff] %v2909
        %3097 = vst [vmem:[%s3093 + $0x18] sm:$0xff] %v2911
        %3098 = vst [vmem:[%s3093 + $0x20] sm:$0xff] %v2980
        %3099 = vst [vmem:[%s3093 + $0x28] sm:$0xff] %v2982
        %3100 = vst [vmem:[%s3093 + $0x30] sm:$0xff] %v3051
        %3101 = vst.msk [vmem:[%s3093 + $0x38] sm:$0xff] %vm814, %v3053
        %s3102 = scalar_lea.vmem [#allocation5], 40
        %v3103 = vld [vmem:[%s3102] sm:$0xff]
        %3104 = vrot.lane.b32.xlu0 %v250, 27
        %v3105 = vpop.permute.xlu0 %3104
        %3106 = vrot.lane.b32.xlu0 %v251, 27
        %v3107 = vpop.permute.xlu0 %3106
        %3108 = vrot.lane.b32.xlu0 %v252, 27
        %v3109 = vpop.permute.xlu0 %3108
        %3110 = vrot.lane.b32.xlu0 %v253, 27
        %v3111 = vpop.permute.xlu0 %3110
        %3112 = vrot.lane.b32.xlu0 %v254, 27
        %v3113 = vpop.permute.xlu0 %3112
        %3114 = vrot.lane.b32.xlu0 %v255, 27
        %v3115 = vpop.permute.xlu0 %3114
        %3116 = vrot.lane.b32.xlu0 %v256, 27
        %v3117 = vpop.permute.xlu0 %3116
        %3118 = vrot.lane.b32.xlu0 %v2508, 27
        %v3119 = vpop.permute.xlu0 %3118
        %3120 = vrot.lane.b32.xlu0 %v2507, 27
        %v3121 = vpop.permute.xlu0 %3120
        %3122 = vrot.lane.b32.xlu0 %v282, 27
        %v3123 = vpop.permute.xlu0 %3122
        %3124 = vrot.lane.b32.xlu0 %v283, 27
        %v3125 = vpop.permute.xlu0 %3124
        %3126 = vrot.lane.b32.xlu0 %v284, 27
        %v3127 = vpop.permute.xlu0 %3126
        %3128 = vrot.lane.b32.xlu0 %v285, 27
        %v3129 = vpop.permute.xlu0 %3128
        %3130 = vrot.lane.b32.xlu0 %v286, 27
        %v3131 = vpop.permute.xlu0 %3130
        %3132 = vrot.lane.b32.xlu0 %v287, 27
        %v3133 = vpop.permute.xlu0 %3132
        %3134 = vrot.lane.b32.xlu0 %v288, 27
        %v3135 = vpop.permute.xlu0 %3134
        %3136 = vrot.lane.b32.xlu0 %v2511, 27
        %v3137 = vpop.permute.xlu0 %3136
        %3138 = vrot.lane.b32.xlu0 %v2510, 27
        %v3139 = vpop.permute.xlu0 %3138
        %3140 = vrot.lane.b32.xlu0 %v314, 27
        %v3141 = vpop.permute.xlu0 %3140
        %3142 = vrot.lane.b32.xlu0 %v315, 27
        %v3143 = vpop.permute.xlu0 %3142
        %3144 = vrot.lane.b32.xlu0 %v316, 27
        %v3145 = vpop.permute.xlu0 %3144
        %3146 = vrot.lane.b32.xlu0 %v317, 27
        %v3147 = vpop.permute.xlu0 %3146
        %3148 = vrot.lane.b32.xlu0 %v318, 27
        %v3149 = vpop.permute.xlu0 %3148
        %3150 = vrot.lane.b32.xlu0 %v319, 27
        %v3151 = vpop.permute.xlu0 %3150
        %3152 = vrot.lane.b32.xlu0 %v320, 27
        %v3153 = vpop.permute.xlu0 %3152
        %3154 = vrot.lane.b32.xlu0 %v2514, 27
        %v3155 = vpop.permute.xlu0 %3154
        %3156 = vrot.lane.b32.xlu0 %v2513, 27
        %v3157 = vpop.permute.xlu0 %3156
        %3158 = vrot.lane.b32.xlu0 %v333, 27
        %v3159 = vpop.permute.xlu0 %3158
        %3160 = vrot.lane.b32.xlu0 %v350, 27
        %v3161 = vpop.permute.xlu0 %3160
        %3162 = vrot.lane.b32.xlu0 %v351, 27
        %v3163 = vpop.permute.xlu0 %3162
        %3164 = vrot.lane.b32.xlu0 %v352, 27
        %v3165 = vpop.permute.xlu0 %3164
        %3166 = vrot.lane.b32.xlu0 %v353, 27
        %v3167 = vpop.permute.xlu0 %3166
        %3168 = vrot.lane.b32.xlu0 %v354, 27
        %v3169 = vpop.permute.xlu0 %3168
        %3170 = vrot.lane.b32.xlu0 %v355, 27
        %v3171 = vpop.permute.xlu0 %3170
        %3172 = vrot.lane.b32.xlu0 %v356, 27
        %v3173 = vpop.permute.xlu0 %3172
        %3174 = vrot.lane.b32.xlu0 %v2518, 27
        %v3175 = vpop.permute.xlu0 %3174
        %3176 = vrot.lane.b32.xlu0 %v368, 27
        %v3177 = vpop.permute.xlu0 %3176
        %3178 = vrot.lane.b32.xlu0 %v385, 27
        %v3179 = vpop.permute.xlu0 %3178
        %3180 = vrot.lane.b32.xlu0 %v386, 27
        %v3181 = vpop.permute.xlu0 %3180
        %3182 = vrot.lane.b32.xlu0 %v387, 27
        %v3183 = vpop.permute.xlu0 %3182
        %3184 = vrot.lane.b32.xlu0 %v388, 27
        %v3185 = vpop.permute.xlu0 %3184
        %3186 = vrot.lane.b32.xlu0 %v389, 27
        %v3187 = vpop.permute.xlu0 %3186
        %3188 = vrot.lane.b32.xlu0 %v390, 27
        %v3189 = vpop.permute.xlu0 %3188
        %3190 = vrot.lane.b32.xlu0 %v391, 27
        %v3191 = vpop.permute.xlu0 %3190
        %3192 = vrot.lane.b32.xlu0 %v2521, 27
        %v3193 = vpop.permute.xlu0 %3192
        %3194 = vrot.lane.b32.xlu0 %v403, 27
        %v3195 = vpop.permute.xlu0 %3194
        %3196 = vrot.lane.b32.xlu0 %v420, 27
        %v3197 = vpop.permute.xlu0 %3196
        %3198 = vrot.lane.b32.xlu0 %v421, 27
        %v3199 = vpop.permute.xlu0 %3198
        %3200 = vrot.lane.b32.xlu0 %v422, 27
        %v3201 = vpop.permute.xlu0 %3200
        %3202 = vrot.lane.b32.xlu0 %v423, 27
        %v3203 = vpop.permute.xlu0 %3202
        %3204 = vrot.lane.b32.xlu0 %v424, 27
        %v3205 = vpop.permute.xlu0 %3204
        %3206 = vrot.lane.b32.xlu0 %v425, 27
        %v3207 = vpop.permute.xlu0 %3206
        %3208 = vrot.lane.b32.xlu0 %v426, 27
        %v3209 = vpop.permute.xlu0 %3208
        %3210 = vrot.lane.b32.xlu0 %v2524, 27
        %v3211 = vpop.permute.xlu0 %3210
        %3212 = vrot.lane.b32.xlu0 %v438, 27
        %v3213 = vpop.permute.xlu0 %3212
        %3214 = vrot.lane.b32.xlu0 %v455, 27
        %v3215 = vpop.permute.xlu0 %3214
        %3216 = vrot.lane.b32.xlu0 %v456, 27
        %v3217 = vpop.permute.xlu0 %3216
        %3218 = vrot.lane.b32.xlu0 %v457, 27
        %v3219 = vpop.permute.xlu0 %3218
        %3220 = vrot.lane.b32.xlu0 %v458, 27
        %v3221 = vpop.permute.xlu0 %3220
        %3222 = vrot.lane.b32.xlu0 %v459, 27
        %v3223 = vpop.permute.xlu0 %3222
        %3224 = vrot.lane.b32.xlu0 %v460, 27
        %v3225 = vpop.permute.xlu0 %3224
        %3226 = vrot.lane.b32.xlu0 %v461, 27
        %v3227 = vpop.permute.xlu0 %3226
        %3228 = vrot.lane.b32.xlu0 %v2527, 27
        %v3229 = vpop.permute.xlu0 %3228
        %v3230 = vsel %vm383, %v3105, %v3107
        %v3231 = vsel %vm383, %v3107, %v3109
        %v3232 = vsel %vm383, %v3109, %v3111
        %v3233 = vsel %vm383, %v3111, %v3113
        %v3234 = vsel %vm383, %v3113, %v3115
        %v3235 = vsel %vm383, %v3115, %v3117
        %v3236 = vsel %vm383, %v3117, %v3119
        %v3237 = vsel %vm383, %v3119, %v3121
        %v3238 = vsel %vm383, %v3123, %v3125
        %v3239 = vsel %vm383, %v3125, %v3127
        %v3240 = vsel %vm383, %v3127, %v3129
        %v3241 = vsel %vm383, %v3129, %v3131
        %v3242 = vsel %vm383, %v3131, %v3133
        %v3243 = vsel %vm383, %v3133, %v3135
        %v3244 = vsel %vm383, %v3135, %v3137
        %v3245 = vsel %vm383, %v3137, %v3139
        %v3246 = vsel %vm383, %v3141, %v3143
        %v3247 = vsel %vm383, %v3143, %v3145
        %v3248 = vsel %vm383, %v3145, %v3147
        %v3249 = vsel %vm383, %v3147, %v3149
        %v3250 = vsel %vm383, %v3149, %v3151
        %v3251 = vsel %vm383, %v3151, %v3153
        %v3252 = vsel %vm383, %v3153, %v3155
        %v3253 = vsel %vm383, %v3155, %v3157
        %v3254 = vsel %vm383, %v3159, %v3161
        %v3255 = vsel %vm383, %v3161, %v3163
        %v3256 = vsel %vm383, %v3163, %v3165
        %v3257 = vsel %vm383, %v3165, %v3167
        %v3258 = vsel %vm383, %v3167, %v3169
        %v3259 = vsel %vm383, %v3169, %v3171
        %v3260 = vsel %vm383, %v3171, %v3173
        %v3261 = vsel %vm383, %v3173, %v3175
        %v3262 = vsel %vm383, %v3177, %v3179
        %v3263 = vsel %vm383, %v3179, %v3181
        %v3264 = vsel %vm383, %v3181, %v3183
        %v3265 = vsel %vm383, %v3183, %v3185
        %v3266 = vsel %vm383, %v3185, %v3187
        %v3267 = vsel %vm383, %v3187, %v3189
        %v3268 = vsel %vm383, %v3189, %v3191
        %v3269 = vsel %vm383, %v3191, %v3193
        %v3270 = vsel %vm383, %v3195, %v3197
        %v3271 = vsel %vm383, %v3197, %v3199
        %v3272 = vsel %vm383, %v3199, %v3201
        %v3273 = vsel %vm383, %v3201, %v3203
        %v3274 = vsel %vm383, %v3203, %v3205
        %v3275 = vsel %vm383, %v3205, %v3207
        %v3276 = vsel %vm383, %v3207, %v3209
        %v3277 = vsel %vm383, %v3209, %v3211
        %v3278 = vsel %vm383, %v3213, %v3215
        %v3279 = vsel %vm383, %v3215, %v3217
        %v3280 = vsel %vm383, %v3217, %v3219
        %v3281 = vsel %vm383, %v3219, %v3221
        %v3282 = vsel %vm383, %v3221, %v3223
        %v3283 = vsel %vm383, %v3223, %v3225
        %v3284 = vsel %vm383, %v3225, %v3227
        %v3285 = vsel %vm383, %v3227, %v3229
        %v3343 = vsel %vm471, %v3103, 0
        %3345 = vmatprep.subr.mxu0 %v385
        %3346 = vmatpush1.msra.mxu0 %v384
        %3347 = vmatprep.subr.mxu0 %v3231
        %3348 = vmatpush1.msra.mxu0 %v3230
        %3349 = vmatprep.subr.mxu0 %v3239
        %3350 = vmatpush1.msra.mxu0 %v3238
        %3351 = vmatprep.subr.mxu0 %v3247
        %3352 = vmatpush1.msra.mxu0 %v3246
        %3353 = vmatprep.subr.mxu0 %v3255
        %3354 = vmatpush1.msra.mxu0 %v3254
        %3355 = vmatprep.subr.mxu0 %v3263
        %3356 = vmatpush1.msra.mxu0 %v3262
        %3357 = vmatprep.subr.mxu0 %v3271
        %3358 = vmatpush1.msra.mxu0 %v3270
        %3359 = vmatprep.subr.mxu0 %v3279
        %3360 = vmatpush1.msra.mxu0 %v3278
        %3361 = vmatprep.subr.mxu0 0.0
        %3362 = vmatpush1.msra.mxu0 0.0
        %3363 = vmatprep.subr.mxu0 0.0
        %3364 = vmatpush1.msra.mxu0 0.0
        %3365 = vmatprep.subr.mxu0 0.0
        %3366 = vmatpush1.msra.mxu0 0.0
        %3367 = vmatprep.subr.mxu0 0.0
        %3368 = vmatpush1.msra.mxu0 0.0
        %3369 = vmatprep.subr.mxu0 0.0
        %3370 = vmatpush1.msra.mxu0 0.0
        %3371 = vmatprep.subr.mxu0 0.0
        %3372 = vmatpush1.msra.mxu0 0.0
        %3373 = vmatprep.subr.mxu0 0.0
        %3374 = vmatpush1.msra.mxu0 0.0
        %3375 = vmatprep.subr.mxu0 0.0
        %3376 = vmatpush1.msra.mxu0 0.0
        %3377 = vmatprep.subr.mxu0 0.0
        %3378 = vmatpush1.msra.mxu0 0.0
        %3379 = vmatprep.subr.mxu0 0.0
        %3380 = vmatpush1.msra.mxu0 0.0
        %3381 = vmatprep.subr.mxu0 0.0
        %3382 = vmatpush1.msra.mxu0 0.0
        %3383 = vmatprep.subr.mxu0 0.0
        %3384 = vmatpush1.msra.mxu0 0.0
        %3385 = vmatprep.subr.mxu0 0.0
        %3386 = vmatpush1.msra.mxu0 0.0
        %3387 = vmatprep.subr.mxu0 0.0
        %3388 = vmatpush1.msra.mxu0 0.0
        %3389 = vmatprep.subr.mxu0 0.0
        %3390 = vmatpush1.msra.mxu0 0.0
        %3391 = vmatprep.subr.mxu0 0.0
        %3392 = vmatpush1.msra.mxu0 0.0
        %3393 = vmatprep.subr.mxu0 0.0
        %3394 = vmatpush1.msra.mxu0 0.0
        %3395 = vmatprep.subr.mxu0 0.0
        %3396 = vmatpush1.msra.mxu0 0.0
        %3397 = vmatprep.subr.mxu0 0.0
        %3398 = vmatpush1.msra.mxu0 0.0
        %3399 = vmatprep.subr.mxu0 0.0
        %3400 = vmatpush1.msra.mxu0 0.0
        %3401 = vmatprep.subr.mxu0 0.0
        %3402 = vmatpush1.msra.mxu0 0.0
        %3403 = vmatprep.subr.mxu0 0.0
        %3404 = vmatpush1.msra.mxu0 0.0
        %3405 = vmatprep.subr.mxu0 0.0
        %3406 = vmatpush1.msra.mxu0 0.0
        %3407 = vmatprep.subr.mxu0 0.0
        %3408 = vmatpush1.msra.mxu0 0.0
        %3409 = vmatprep.mubr.f32.mxu0 0.0
        %3410 = vmatmul.mubr.f32.gmra.mrb[0].mxu0 %v3343
        %v3411 = vpop.f32.mrb[0].mxu0
        %v3412 = vadd.f32 0.0, %v3411
        %v3413 = vpop.f32.mrb[0].mxu0
        %v3414 = vadd.f32 0.0, %v3413
        %3415 = vdwg.mxu0
        %3416 = vmatprep.subr.mxu0 %v387
        %3417 = vmatpush1.msra.mxu0 %v386
        %3418 = vmatprep.subr.mxu0 %v3233
        %3419 = vmatpush1.msra.mxu0 %v3232
        %3420 = vmatprep.subr.mxu0 %v3241
        %3421 = vmatpush1.msra.mxu0 %v3240
        %3422 = vmatprep.subr.mxu0 %v3249
        %3423 = vmatpush1.msra.mxu0 %v3248
        %3424 = vmatprep.subr.mxu0 %v3257
        %3425 = vmatpush1.msra.mxu0 %v3256
        %3426 = vmatprep.subr.mxu0 %v3265
        %3427 = vmatpush1.msra.mxu0 %v3264
        %3428 = vmatprep.subr.mxu0 %v3273
        %3429 = vmatpush1.msra.mxu0 %v3272
        %3430 = vmatprep.subr.mxu0 %v3281
        %3431 = vmatpush1.msra.mxu0 %v3280
        %3432 = vmatprep.subr.mxu0 0.0
        %3433 = vmatpush1.msra.mxu0 0.0
        %3434 = vmatprep.subr.mxu0 0.0
        %3435 = vmatpush1.msra.mxu0 0.0
        %3436 = vmatprep.subr.mxu0 0.0
        %3437 = vmatpush1.msra.mxu0 0.0
        %3438 = vmatprep.subr.mxu0 0.0
        %3439 = vmatpush1.msra.mxu0 0.0
        %3440 = vmatprep.subr.mxu0 0.0
        %3441 = vmatpush1.msra.mxu0 0.0
        %3442 = vmatprep.subr.mxu0 0.0
        %3443 = vmatpush1.msra.mxu0 0.0
        %3444 = vmatprep.subr.mxu0 0.0
        %3445 = vmatpush1.msra.mxu0 0.0
        %3446 = vmatprep.subr.mxu0 0.0
        %3447 = vmatpush1.msra.mxu0 0.0
        %3448 = vmatprep.subr.mxu0 0.0
        %3449 = vmatpush1.msra.mxu0 0.0
        %3450 = vmatprep.subr.mxu0 0.0
        %3451 = vmatpush1.msra.mxu0 0.0
        %3452 = vmatprep.subr.mxu0 0.0
        %3453 = vmatpush1.msra.mxu0 0.0
        %3454 = vmatprep.subr.mxu0 0.0
        %3455 = vmatpush1.msra.mxu0 0.0
        %3456 = vmatprep.subr.mxu0 0.0
        %3457 = vmatpush1.msra.mxu0 0.0
        %3458 = vmatprep.subr.mxu0 0.0
        %3459 = vmatpush1.msra.mxu0 0.0
        %3460 = vmatprep.subr.mxu0 0.0
        %3461 = vmatpush1.msra.mxu0 0.0
        %3462 = vmatprep.subr.mxu0 0.0
        %3463 = vmatpush1.msra.mxu0 0.0
        %3464 = vmatprep.subr.mxu0 0.0
        %3465 = vmatpush1.msra.mxu0 0.0
        %3466 = vmatprep.subr.mxu0 0.0
        %3467 = vmatpush1.msra.mxu0 0.0
        %3468 = vmatprep.subr.mxu0 0.0
        %3469 = vmatpush1.msra.mxu0 0.0
        %3470 = vmatprep.subr.mxu0 0.0
        %3471 = vmatpush1.msra.mxu0 0.0
        %3472 = vmatprep.subr.mxu0 0.0
        %3473 = vmatpush1.msra.mxu0 0.0
        %3474 = vmatprep.subr.mxu0 0.0
        %3475 = vmatpush1.msra.mxu0 0.0
        %3476 = vmatprep.subr.mxu0 0.0
        %3477 = vmatpush1.msra.mxu0 0.0
        %3478 = vmatprep.subr.mxu0 0.0
        %3479 = vmatpush1.msra.mxu0 0.0
        %3480 = vmatprep.mubr.f32.mxu0 0.0
        %3481 = vmatmul.mubr.f32.gmra.mrb[0].mxu0 %v3343
        %v3482 = vpop.f32.mrb[0].mxu0
        %v3483 = vadd.f32 0.0, %v3482
        %v3484 = vpop.f32.mrb[0].mxu0
        %v3485 = vadd.f32 0.0, %v3484
        %3486 = vdwg.mxu0
        %3487 = vmatprep.subr.mxu0 %v389
        %3488 = vmatpush1.msra.mxu0 %v388
        %3489 = vmatprep.subr.mxu0 %v3235
        %3490 = vmatpush1.msra.mxu0 %v3234
        %3491 = vmatprep.subr.mxu0 %v3243
        %3492 = vmatpush1.msra.mxu0 %v3242
        %3493 = vmatprep.subr.mxu0 %v3251
        %3494 = vmatpush1.msra.mxu0 %v3250
        %3495 = vmatprep.subr.mxu0 %v3259
        %3496 = vmatpush1.msra.mxu0 %v3258
        %3497 = vmatprep.subr.mxu0 %v3267
        %3498 = vmatpush1.msra.mxu0 %v3266
        %3499 = vmatprep.subr.mxu0 %v3275
        %3500 = vmatpush1.msra.mxu0 %v3274
        %3501 = vmatprep.subr.mxu0 %v3283
        %3502 = vmatpush1.msra.mxu0 %v3282
        %3503 = vmatprep.subr.mxu0 0.0
        %3504 = vmatpush1.msra.mxu0 0.0
        %3505 = vmatprep.subr.mxu0 0.0
        %3506 = vmatpush1.msra.mxu0 0.0
        %3507 = vmatprep.subr.mxu0 0.0
        %3508 = vmatpush1.msra.mxu0 0.0
        %3509 = vmatprep.subr.mxu0 0.0
        %3510 = vmatpush1.msra.mxu0 0.0
        %3511 = vmatprep.subr.mxu0 0.0
        %3512 = vmatpush1.msra.mxu0 0.0
        %3513 = vmatprep.subr.mxu0 0.0
        %3514 = vmatpush1.msra.mxu0 0.0
        %3515 = vmatprep.subr.mxu0 0.0
        %3516 = vmatpush1.msra.mxu0 0.0
        %3517 = vmatprep.subr.mxu0 0.0
        %3518 = vmatpush1.msra.mxu0 0.0
        %3519 = vmatprep.subr.mxu0 0.0
        %3520 = vmatpush1.msra.mxu0 0.0
        %3521 = vmatprep.subr.mxu0 0.0
        %3522 = vmatpush1.msra.mxu0 0.0
        %3523 = vmatprep.subr.mxu0 0.0
        %3524 = vmatpush1.msra.mxu0 0.0
        %3525 = vmatprep.subr.mxu0 0.0
        %3526 = vmatpush1.msra.mxu0 0.0
        %3527 = vmatprep.subr.mxu0 0.0
        %3528 = vmatpush1.msra.mxu0 0.0
        %3529 = vmatprep.subr.mxu0 0.0
        %3530 = vmatpush1.msra.mxu0 0.0
        %3531 = vmatprep.subr.mxu0 0.0
        %3532 = vmatpush1.msra.mxu0 0.0
        %3533 = vmatprep.subr.mxu0 0.0
        %3534 = vmatpush1.msra.mxu0 0.0
        %3535 = vmatprep.subr.mxu0 0.0
        %3536 = vmatpush1.msra.mxu0 0.0
        %3537 = vmatprep.subr.mxu0 0.0
        %3538 = vmatpush1.msra.mxu0 0.0
        %3539 = vmatprep.subr.mxu0 0.0
        %3540 = vmatpush1.msra.mxu0 0.0
        %3541 = vmatprep.subr.mxu0 0.0
        %3542 = vmatpush1.msra.mxu0 0.0
        %3543 = vmatprep.subr.mxu0 0.0
        %3544 = vmatpush1.msra.mxu0 0.0
        %3545 = vmatprep.subr.mxu0 0.0
        %3546 = vmatpush1.msra.mxu0 0.0
        %3547 = vmatprep.subr.mxu0 0.0
        %3548 = vmatpush1.msra.mxu0 0.0
        %3549 = vmatprep.subr.mxu0 0.0
        %3550 = vmatpush1.msra.mxu0 0.0
        %3551 = vmatprep.mubr.f32.mxu0 0.0
        %3552 = vmatmul.mubr.f32.gmra.mrb[0].mxu0 %v3343
        %v3553 = vpop.f32.mrb[0].mxu0
        %v3554 = vadd.f32 0.0, %v3553
        %v3555 = vpop.f32.mrb[0].mxu0
        %v3556 = vadd.f32 0.0, %v3555
        %3557 = vdwg.mxu0
        %3558 = vmatprep.subr.mxu0 %v391
        %3559 = vmatpush1.msra.mxu0 %v390
        %3560 = vmatprep.subr.mxu0 %v3237
        %3561 = vmatpush1.msra.mxu0 %v3236
        %3562 = vmatprep.subr.mxu0 %v3245
        %3563 = vmatpush1.msra.mxu0 %v3244
        %3564 = vmatprep.subr.mxu0 %v3253
        %3565 = vmatpush1.msra.mxu0 %v3252
        %3566 = vmatprep.subr.mxu0 %v3261
        %3567 = vmatpush1.msra.mxu0 %v3260
        %3568 = vmatprep.subr.mxu0 %v3269
        %3569 = vmatpush1.msra.mxu0 %v3268
        %3570 = vmatprep.subr.mxu0 %v3277
        %3571 = vmatpush1.msra.mxu0 %v3276
        %3572 = vmatprep.subr.mxu0 %v3285
        %3573 = vmatpush1.msra.mxu0 %v3284
        %3574 = vmatprep.subr.mxu0 0.0
        %3575 = vmatpush1.msra.mxu0 0.0
        %3576 = vmatprep.subr.mxu0 0.0
        %3577 = vmatpush1.msra.mxu0 0.0
        %3578 = vmatprep.subr.mxu0 0.0
        %3579 = vmatpush1.msra.mxu0 0.0
        %3580 = vmatprep.subr.mxu0 0.0
        %3581 = vmatpush1.msra.mxu0 0.0
        %3582 = vmatprep.subr.mxu0 0.0
        %3583 = vmatpush1.msra.mxu0 0.0
        %3584 = vmatprep.subr.mxu0 0.0
        %3585 = vmatpush1.msra.mxu0 0.0
        %3586 = vmatprep.subr.mxu0 0.0
        %3587 = vmatpush1.msra.mxu0 0.0
        %3588 = vmatprep.subr.mxu0 0.0
        %3589 = vmatpush1.msra.mxu0 0.0
        %3590 = vmatprep.subr.mxu0 0.0
        %3591 = vmatpush1.msra.mxu0 0.0
        %3592 = vmatprep.subr.mxu0 0.0
        %3593 = vmatpush1.msra.mxu0 0.0
        %3594 = vmatprep.subr.mxu0 0.0
        %3595 = vmatpush1.msra.mxu0 0.0
        %3596 = vmatprep.subr.mxu0 0.0
        %3597 = vmatpush1.msra.mxu0 0.0
        %3598 = vmatprep.subr.mxu0 0.0
        %3599 = vmatpush1.msra.mxu0 0.0
        %3600 = vmatprep.subr.mxu0 0.0
        %3601 = vmatpush1.msra.mxu0 0.0
        %3602 = vmatprep.subr.mxu0 0.0
        %3603 = vmatpush1.msra.mxu0 0.0
        %3604 = vmatprep.subr.mxu0 0.0
        %3605 = vmatpush1.msra.mxu0 0.0
        %3606 = vmatprep.subr.mxu0 0.0
        %3607 = vmatpush1.msra.mxu0 0.0
        %3608 = vmatprep.subr.mxu0 0.0
        %3609 = vmatpush1.msra.mxu0 0.0
        %3610 = vmatprep.subr.mxu0 0.0
        %3611 = vmatpush1.msra.mxu0 0.0
        %3612 = vmatprep.subr.mxu0 0.0
        %3613 = vmatpush1.msra.mxu0 0.0
        %3614 = vmatprep.subr.mxu0 0.0
        %3615 = vmatpush1.msra.mxu0 0.0
        %3616 = vmatprep.subr.mxu0 0.0
        %3617 = vmatpush1.msra.mxu0 0.0
        %3618 = vmatprep.subr.mxu0 0.0
        %3619 = vmatpush1.msra.mxu0 0.0
        %3620 = vmatprep.subr.mxu0 0.0
        %3621 = vmatpush1.msra.mxu0 0.0
        %3622 = vmatprep.mubr.f32.mxu0 0.0
        %3623 = vmatmul.mubr.f32.gmra.mrb[0].mxu0 %v3343
        %v3624 = vpop.f32.mrb[0].mxu0
        %v3625 = vadd.f32 0.0, %v3624
        %v3626 = vpop.f32.mrb[0].mxu0
        %v3627 = vadd.f32 0.0, %v3626
        %3628 = vdwg.mxu0
        %v3629 = vmul.f32 %v3412, %v763
        %v3630 = vmul.f32 %v3414, %v767
        %v3631 = vmul.f32 %v3483, %v771
        %v3632 = vmul.f32 %v3485, %v775
        %v3633 = vmul.f32 %v3554, %v779
        %v3634 = vmul.f32 %v3556, %v783
        %v3635 = vmul.f32 %v3625, %v787
        %v3636 = vmul.f32 %v3627, %v791
        %v3637 = vadd.f32 %v3629, %v3630
        %v3638 = vadd.f32 %v3637, %v3631
        %v3639 = vadd.f32 %v3638, %v3632
        %v3640 = vadd.f32 %v3639, %v3633
        %v3641 = vadd.f32 %v3640, %v3634
        %v3642 = vadd.f32 %v3641, %v3635
        %v3643 = vsel %vm814, %v3636, 0.0
        %v3644 = vadd.f32 %v3642, %v3643
        %3645 = vadd.xlane.f32.xlu0 %v3644
        %v3646 = vpop.xlane.xlu0 %3645
        %v3647 = vadd.f32 %v3073, %v3646
        %v3648 = vmul.f32 %v3629, %v3412
        %v3649 = vmul.f32 %v3630, %v3414
        %v3650 = vmul.f32 %v3631, %v3483
        %v3651 = vmul.f32 %v3632, %v3485
        %v3652 = vmul.f32 %v3633, %v3554
        %v3653 = vmul.f32 %v3634, %v3556
        %v3654 = vmul.f32 %v3635, %v3625
        %v3655 = vmul.f32 %v3636, %v3627
        %v3656 = vadd.f32 %v3648, %v3649
        %v3657 = vadd.f32 %v3656, %v3650
        %v3658 = vadd.f32 %v3657, %v3651
        %v3659 = vadd.f32 %v3658, %v3652
        %v3660 = vadd.f32 %v3659, %v3653
        %v3661 = vadd.f32 %v3660, %v3654
        %v3662 = vsel %vm814, %v3655, 0.0
        %v3663 = vadd.f32 %v3661, %v3662
        %3664 = vadd.xlane.f32.xlu0 %v3663
        %v3665 = vpop.xlane.xlu0 %3664
        %v3666 = vadd.f32 %v3092, %v3665
        %s3667 = scalar_lea.vmem %s213, 320 [#allocation8]
        %3668 = vst [vmem:[%s3667] sm:$0xff] %v3412
        %3669 = vst [vmem:[%s3667 + $0x8] sm:$0xff] %v3414
        %3670 = vst [vmem:[%s3667 + $0x10] sm:$0xff] %v3483
        %3671 = vst [vmem:[%s3667 + $0x18] sm:$0xff] %v3485
        %3672 = vst [vmem:[%s3667 + $0x20] sm:$0xff] %v3554
        %3673 = vst [vmem:[%s3667 + $0x28] sm:$0xff] %v3556
        %3674 = vst [vmem:[%s3667 + $0x30] sm:$0xff] %v3625
        %3675 = vst.msk [vmem:[%s3667 + $0x38] sm:$0xff] %vm814, %v3627
        %s3676 = scalar_lea.vmem [#allocation5], 48
        %v3677 = vld [vmem:[%s3676] sm:$0xff]
        %3678 = vrot.lane.b32.xlu0 %v250, 18
        %v3679 = vpop.permute.xlu0 %3678
        %3680 = vrot.lane.b32.xlu0 %v251, 18
        %v3681 = vpop.permute.xlu0 %3680
        %3682 = vrot.lane.b32.xlu0 %v252, 18
        %v3683 = vpop.permute.xlu0 %3682
        %3684 = vrot.lane.b32.xlu0 %v253, 18
        %v3685 = vpop.permute.xlu0 %3684
        %3686 = vrot.lane.b32.xlu0 %v254, 18
        %v3687 = vpop.permute.xlu0 %3686
        %3688 = vrot.lane.b32.xlu0 %v255, 18
        %v3689 = vpop.permute.xlu0 %3688
        %3690 = vrot.lane.b32.xlu0 %v256, 18
        %v3691 = vpop.permute.xlu0 %3690
        %3692 = vrot.lane.b32.xlu0 %v2508, 18
        %v3693 = vpop.permute.xlu0 %3692
        %3694 = vrot.lane.b32.xlu0 %v2507, 18
        %v3695 = vpop.permute.xlu0 %3694
        %3696 = vrot.lane.b32.xlu0 %v282, 18
        %v3697 = vpop.permute.xlu0 %3696
        %3698 = vrot.lane.b32.xlu0 %v283, 18
        %v3699 = vpop.permute.xlu0 %3698
        %3700 = vrot.lane.b32.xlu0 %v284, 18
        %v3701 = vpop.permute.xlu0 %3700
        %3702 = vrot.lane.b32.xlu0 %v285, 18
        %v3703 = vpop.permute.xlu0 %3702
        %3704 = vrot.lane.b32.xlu0 %v286, 18
        %v3705 = vpop.permute.xlu0 %3704
        %3706 = vrot.lane.b32.xlu0 %v287, 18
        %v3707 = vpop.permute.xlu0 %3706
        %3708 = vrot.lane.b32.xlu0 %v288, 18
        %v3709 = vpop.permute.xlu0 %3708
        %3710 = vrot.lane.b32.xlu0 %v2511, 18
        %v3711 = vpop.permute.xlu0 %3710
        %3712 = vrot.lane.b32.xlu0 %v2510, 18
        %v3713 = vpop.permute.xlu0 %3712
        %3714 = vrot.lane.b32.xlu0 %v314, 18
        %v3715 = vpop.permute.xlu0 %3714
        %3716 = vrot.lane.b32.xlu0 %v315, 18
        %v3717 = vpop.permute.xlu0 %3716
        %3718 = vrot.lane.b32.xlu0 %v316, 18
        %v3719 = vpop.permute.xlu0 %3718
        %3720 = vrot.lane.b32.xlu0 %v317, 18
        %v3721 = vpop.permute.xlu0 %3720
        %3722 = vrot.lane.b32.xlu0 %v318, 18
        %v3723 = vpop.permute.xlu0 %3722
        %3724 = vrot.lane.b32.xlu0 %v319, 18
        %v3725 = vpop.permute.xlu0 %3724
        %3726 = vrot.lane.b32.xlu0 %v320, 18
        %v3727 = vpop.permute.xlu0 %3726
        %3728 = vrot.lane.b32.xlu0 %v2514, 18
        %v3729 = vpop.permute.xlu0 %3728
        %3730 = vrot.lane.b32.xlu0 %v2513, 18
        %v3731 = vpop.permute.xlu0 %3730
        %3732 = vrot.lane.b32.xlu0 %v333, 18
        %v3733 = vpop.permute.xlu0 %3732
        %3734 = vrot.lane.b32.xlu0 %v350, 18
        %v3735 = vpop.permute.xlu0 %3734
        %3736 = vrot.lane.b32.xlu0 %v351, 18
        %v3737 = vpop.permute.xlu0 %3736
        %3738 = vrot.lane.b32.xlu0 %v352, 18
        %v3739 = vpop.permute.xlu0 %3738
        %3740 = vrot.lane.b32.xlu0 %v353, 18
        %v3741 = vpop.permute.xlu0 %3740
        %3742 = vrot.lane.b32.xlu0 %v354, 18
        %v3743 = vpop.permute.xlu0 %3742
        %3744 = vrot.lane.b32.xlu0 %v355, 18
        %v3745 = vpop.permute.xlu0 %3744
        %3746 = vrot.lane.b32.xlu0 %v356, 18
        %v3747 = vpop.permute.xlu0 %3746
        %3748 = vrot.lane.b32.xlu0 %v2518, 18
        %v3749 = vpop.permute.xlu0 %3748
        %3750 = vrot.lane.b32.xlu0 %v368, 18
        %v3751 = vpop.permute.xlu0 %3750
        %3752 = vrot.lane.b32.xlu0 %v385, 18
        %v3753 = vpop.permute.xlu0 %3752
        %3754 = vrot.lane.b32.xlu0 %v386, 18
        %v3755 = vpop.permute.xlu0 %3754
        %3756 = vrot.lane.b32.xlu0 %v387, 18
        %v3757 = vpop.permute.xlu0 %3756
        %3758 = vrot.lane.b32.xlu0 %v388, 18
        %v3759 = vpop.permute.xlu0 %3758
        %3760 = vrot.lane.b32.xlu0 %v389, 18
        %v3761 = vpop.permute.xlu0 %3760
        %3762 = vrot.lane.b32.xlu0 %v390, 18
        %v3763 = vpop.permute.xlu0 %3762
        %3764 = vrot.lane.b32.xlu0 %v391, 18
        %v3765 = vpop.permute.xlu0 %3764
        %3766 = vrot.lane.b32.xlu0 %v2521, 18
        %v3767 = vpop.permute.xlu0 %3766
        %3768 = vrot.lane.b32.xlu0 %v403, 18
        %v3769 = vpop.permute.xlu0 %3768
        %3770 = vrot.lane.b32.xlu0 %v420, 18
        %v3771 = vpop.permute.xlu0 %3770
        %3772 = vrot.lane.b32.xlu0 %v421, 18
        %v3773 = vpop.permute.xlu0 %3772
        %3774 = vrot.lane.b32.xlu0 %v422, 18
        %v3775 = vpop.permute.xlu0 %3774
        %3776 = vrot.lane.b32.xlu0 %v423, 18
        %v3777 = vpop.permute.xlu0 %3776
        %3778 = vrot.lane.b32.xlu0 %v424, 18
        %v3779 = vpop.permute.xlu0 %3778
        %3780 = vrot.lane.b32.xlu0 %v425, 18
        %v3781 = vpop.permute.xlu0 %3780
        %3782 = vrot.lane.b32.xlu0 %v426, 18
        %v3783 = vpop.permute.xlu0 %3782
        %3784 = vrot.lane.b32.xlu0 %v2524, 18
        %v3785 = vpop.permute.xlu0 %3784
        %3786 = vrot.lane.b32.xlu0 %v438, 18
        %v3787 = vpop.permute.xlu0 %3786
        %3788 = vrot.lane.b32.xlu0 %v455, 18
        %v3789 = vpop.permute.xlu0 %3788
        %3790 = vrot.lane.b32.xlu0 %v456, 18
        %v3791 = vpop.permute.xlu0 %3790
        %3792 = vrot.lane.b32.xlu0 %v457, 18
        %v3793 = vpop.permute.xlu0 %3792
        %3794 = vrot.lane.b32.xlu0 %v458, 18
        %v3795 = vpop.permute.xlu0 %3794
        %3796 = vrot.lane.b32.xlu0 %v459, 18
        %v3797 = vpop.permute.xlu0 %3796
        %3798 = vrot.lane.b32.xlu0 %v460, 18
        %v3799 = vpop.permute.xlu0 %3798
        %3800 = vrot.lane.b32.xlu0 %v461, 18
        %v3801 = vpop.permute.xlu0 %3800
        %3802 = vrot.lane.b32.xlu0 %v2527, 18
        %v3803 = vpop.permute.xlu0 %3802
        %v3804 = vsel %vm418, %v3679, %v3681
        %v3805 = vsel %vm418, %v3681, %v3683
        %v3806 = vsel %vm418, %v3683, %v3685
        %v3807 = vsel %vm418, %v3685, %v3687
        %v3808 = vsel %vm418, %v3687, %v3689
        %v3809 = vsel %vm418, %v3689, %v3691
        %v3810 = vsel %vm418, %v3691, %v3693
        %v3811 = vsel %vm418, %v3693, %v3695
        %v3812 = vsel %vm418, %v3697, %v3699
        %v3813 = vsel %vm418, %v3699, %v3701
        %v3814 = vsel %vm418, %v3701, %v3703
        %v3815 = vsel %vm418, %v3703, %v3705
        %v3816 = vsel %vm418, %v3705, %v3707
        %v3817 = vsel %vm418, %v3707, %v3709
        %v3818 = vsel %vm418, %v3709, %v3711
        %v3819 = vsel %vm418, %v3711, %v3713
        %v3820 = vsel %vm418, %v3715, %v3717
        %v3821 = vsel %vm418, %v3717, %v3719
        %v3822 = vsel %vm418, %v3719, %v3721
        %v3823 = vsel %vm418, %v3721, %v3723
        %v3824 = vsel %vm418, %v3723, %v3725
        %v3825 = vsel %vm418, %v3725, %v3727
        %v3826 = vsel %vm418, %v3727, %v3729
        %v3827 = vsel %vm418, %v3729, %v3731
        %v3828 = vsel %vm418, %v3733, %v3735
        %v3829 = vsel %vm418, %v3735, %v3737
        %v3830 = vsel %vm418, %v3737, %v3739
        %v3831 = vsel %vm418, %v3739, %v3741
        %v3832 = vsel %vm418, %v3741, %v3743
        %v3833 = vsel %vm418, %v3743, %v3745
        %v3834 = vsel %vm418, %v3745, %v3747
        %v3835 = vsel %vm418, %v3747, %v3749
        %v3836 = vsel %vm418, %v3751, %v3753
        %v3837 = vsel %vm418, %v3753, %v3755
        %v3838 = vsel %vm418, %v3755, %v3757
        %v3839 = vsel %vm418, %v3757, %v3759
        %v3840 = vsel %vm418, %v3759, %v3761
        %v3841 = vsel %vm418, %v3761, %v3763
        %v3842 = vsel %vm418, %v3763, %v3765
        %v3843 = vsel %vm418, %v3765, %v3767
        %v3844 = vsel %vm418, %v3769, %v3771
        %v3845 = vsel %vm418, %v3771, %v3773
        %v3846 = vsel %vm418, %v3773, %v3775
        %v3847 = vsel %vm418, %v3775, %v3777
        %v3848 = vsel %vm418, %v3777, %v3779
        %v3849 = vsel %vm418, %v3779, %v3781
        %v3850 = vsel %vm418, %v3781, %v3783
        %v3851 = vsel %vm418, %v3783, %v3785
        %v3852 = vsel %vm418, %v3787, %v3789
        %v3853 = vsel %vm418, %v3789, %v3791
        %v3854 = vsel %vm418, %v3791, %v3793
        %v3855 = vsel %vm418, %v3793, %v3795
        %v3856 = vsel %vm418, %v3795, %v3797
        %v3857 = vsel %vm418, %v3797, %v3799
        %v3858 = vsel %vm418, %v3799, %v3801
        %v3859 = vsel %vm418, %v3801, %v3803
        %v3917 = vsel %vm471, %v3677, 0
        %3919 = vmatprep.subr.mxu0 %v420
        %3920 = vmatpush1.msra.mxu0 %v419
        %3921 = vmatprep.subr.mxu0 %v3805
        %3922 = vmatpush1.msra.mxu0 %v3804
        %3923 = vmatprep.subr.mxu0 %v3813
        %3924 = vmatpush1.msra.mxu0 %v3812
        %3925 = vmatprep.subr.mxu0 %v3821
        %3926 = vmatpush1.msra.mxu0 %v3820
        %3927 = vmatprep.subr.mxu0 %v3829
        %3928 = vmatpush1.msra.mxu0 %v3828
        %3929 = vmatprep.subr.mxu0 %v3837
        %3930 = vmatpush1.msra.mxu0 %v3836
        %3931 = vmatprep.subr.mxu0 %v3845
        %3932 = vmatpush1.msra.mxu0 %v3844
        %3933 = vmatprep.subr.mxu0 %v3853
        %3934 = vmatpush1.msra.mxu0 %v3852
        %3935 = vmatprep.subr.mxu0 0.0
        %3936 = vmatpush1.msra.mxu0 0.0
        %3937 = vmatprep.subr.mxu0 0.0
        %3938 = vmatpush1.msra.mxu0 0.0
        %3939 = vmatprep.subr.mxu0 0.0
        %3940 = vmatpush1.msra.mxu0 0.0
        %3941 = vmatprep.subr.mxu0 0.0
        %3942 = vmatpush1.msra.mxu0 0.0
        %3943 = vmatprep.subr.mxu0 0.0
        %3944 = vmatpush1.msra.mxu0 0.0
        %3945 = vmatprep.subr.mxu0 0.0
        %3946 = vmatpush1.msra.mxu0 0.0
        %3947 = vmatprep.subr.mxu0 0.0
        %3948 = vmatpush1.msra.mxu0 0.0
        %3949 = vmatprep.subr.mxu0 0.0
        %3950 = vmatpush1.msra.mxu0 0.0
        %3951 = vmatprep.subr.mxu0 0.0
        %3952 = vmatpush1.msra.mxu0 0.0
        %3953 = vmatprep.subr.mxu0 0.0
        %3954 = vmatpush1.msra.mxu0 0.0
        %3955 = vmatprep.subr.mxu0 0.0
        %3956 = vmatpush1.msra.mxu0 0.0
        %3957 = vmatprep.subr.mxu0 0.0
        %3958 = vmatpush1.msra.mxu0 0.0
        %3959 = vmatprep.subr.mxu0 0.0
        %3960 = vmatpush1.msra.mxu0 0.0
        %3961 = vmatprep.subr.mxu0 0.0
        %3962 = vmatpush1.msra.mxu0 0.0
        %3963 = vmatprep.subr.mxu0 0.0
        %3964 = vmatpush1.msra.mxu0 0.0
        %3965 = vmatprep.subr.mxu0 0.0
        %3966 = vmatpush1.msra.mxu0 0.0
        %3967 = vmatprep.subr.mxu0 0.0
        %3968 = vmatpush1.msra.mxu0 0.0
        %3969 = vmatprep.subr.mxu0 0.0
        %3970 = vmatpush1.msra.mxu0 0.0
        %3971 = vmatprep.subr.mxu0 0.0
        %3972 = vmatpush1.msra.mxu0 0.0
        %3973 = vmatprep.subr.mxu0 0.0
        %3974 = vmatpush1.msra.mxu0 0.0
        %3975 = vmatprep.subr.mxu0 0.0
        %3976 = vmatpush1.msra.mxu0 0.0
        %3977 = vmatprep.subr.mxu0 0.0
        %3978 = vmatpush1.msra.mxu0 0.0
        %3979 = vmatprep.subr.mxu0 0.0
        %3980 = vmatpush1.msra.mxu0 0.0
        %3981 = vmatprep.subr.mxu0 0.0
        %3982 = vmatpush1.msra.mxu0 0.0
        %3983 = vmatprep.mubr.f32.mxu0 0.0
        %3984 = vmatmul.mubr.f32.gmra.mrb[0].mxu0 %v3917
        %v3985 = vpop.f32.mrb[0].mxu0
        %v3986 = vadd.f32 0.0, %v3985
        %v3987 = vpop.f32.mrb[0].mxu0
        %v3988 = vadd.f32 0.0, %v3987
        %3989 = vdwg.mxu0
        %3990 = vmatprep.subr.mxu0 %v422
        %3991 = vmatpush1.msra.mxu0 %v421
        %3992 = vmatprep.subr.mxu0 %v3807
        %3993 = vmatpush1.msra.mxu0 %v3806
        %3994 = vmatprep.subr.mxu0 %v3815
        %3995 = vmatpush1.msra.mxu0 %v3814
        %3996 = vmatprep.subr.mxu0 %v3823
        %3997 = vmatpush1.msra.mxu0 %v3822
        %3998 = vmatprep.subr.mxu0 %v3831
        %3999 = vmatpush1.msra.mxu0 %v3830
        %4000 = vmatprep.subr.mxu0 %v3839
        %4001 = vmatpush1.msra.mxu0 %v3838
        %4002 = vmatprep.subr.mxu0 %v3847
        %4003 = vmatpush1.msra.mxu0 %v3846
        %4004 = vmatprep.subr.mxu0 %v3855
        %4005 = vmatpush1.msra.mxu0 %v3854
        %4006 = vmatprep.subr.mxu0 0.0
        %4007 = vmatpush1.msra.mxu0 0.0
        %4008 = vmatprep.subr.mxu0 0.0
        %4009 = vmatpush1.msra.mxu0 0.0
        %4010 = vmatprep.subr.mxu0 0.0
        %4011 = vmatpush1.msra.mxu0 0.0
        %4012 = vmatprep.subr.mxu0 0.0
        %4013 = vmatpush1.msra.mxu0 0.0
        %4014 = vmatprep.subr.mxu0 0.0
        %4015 = vmatpush1.msra.mxu0 0.0
        %4016 = vmatprep.subr.mxu0 0.0
        %4017 = vmatpush1.msra.mxu0 0.0
        %4018 = vmatprep.subr.mxu0 0.0
        %4019 = vmatpush1.msra.mxu0 0.0
        %4020 = vmatprep.subr.mxu0 0.0
        %4021 = vmatpush1.msra.mxu0 0.0
        %4022 = vmatprep.subr.mxu0 0.0
        %4023 = vmatpush1.msra.mxu0 0.0
        %4024 = vmatprep.subr.mxu0 0.0
        %4025 = vmatpush1.msra.mxu0 0.0
        %4026 = vmatprep.subr.mxu0 0.0
        %4027 = vmatpush1.msra.mxu0 0.0
        %4028 = vmatprep.subr.mxu0 0.0
        %4029 = vmatpush1.msra.mxu0 0.0
        %4030 = vmatprep.subr.mxu0 0.0
        %4031 = vmatpush1.msra.mxu0 0.0
        %4032 = vmatprep.subr.mxu0 0.0
        %4033 = vmatpush1.msra.mxu0 0.0
        %4034 = vmatprep.subr.mxu0 0.0
        %4035 = vmatpush1.msra.mxu0 0.0
        %4036 = vmatprep.subr.mxu0 0.0
        %4037 = vmatpush1.msra.mxu0 0.0
        %4038 = vmatprep.subr.mxu0 0.0
        %4039 = vmatpush1.msra.mxu0 0.0
        %4040 = vmatprep.subr.mxu0 0.0
        %4041 = vmatpush1.msra.mxu0 0.0
        %4042 = vmatprep.subr.mxu0 0.0
        %4043 = vmatpush1.msra.mxu0 0.0
        %4044 = vmatprep.subr.mxu0 0.0
        %4045 = vmatpush1.msra.mxu0 0.0
        %4046 = vmatprep.subr.mxu0 0.0
        %4047 = vmatpush1.msra.mxu0 0.0
        %4048 = vmatprep.subr.mxu0 0.0
        %4049 = vmatpush1.msra.mxu0 0.0
        %4050 = vmatprep.subr.mxu0 0.0
        %4051 = vmatpush1.msra.mxu0 0.0
        %4052 = vmatprep.subr.mxu0 0.0
        %4053 = vmatpush1.msra.mxu0 0.0
        %4054 = vmatprep.mubr.f32.mxu0 0.0
        %4055 = vmatmul.mubr.f32.gmra.mrb[0].mxu0 %v3917
        %v4056 = vpop.f32.mrb[0].mxu0
        %v4057 = vadd.f32 0.0, %v4056
        %v4058 = vpop.f32.mrb[0].mxu0
        %v4059 = vadd.f32 0.0, %v4058
        %4060 = vdwg.mxu0
        %4061 = vmatprep.subr.mxu0 %v424
        %4062 = vmatpush1.msra.mxu0 %v423
        %4063 = vmatprep.subr.mxu0 %v3809
        %4064 = vmatpush1.msra.mxu0 %v3808
        %4065 = vmatprep.subr.mxu0 %v3817
        %4066 = vmatpush1.msra.mxu0 %v3816
        %4067 = vmatprep.subr.mxu0 %v3825
        %4068 = vmatpush1.msra.mxu0 %v3824
        %4069 = vmatprep.subr.mxu0 %v3833
        %4070 = vmatpush1.msra.mxu0 %v3832
        %4071 = vmatprep.subr.mxu0 %v3841
        %4072 = vmatpush1.msra.mxu0 %v3840
        %4073 = vmatprep.subr.mxu0 %v3849
        %4074 = vmatpush1.msra.mxu0 %v3848
        %4075 = vmatprep.subr.mxu0 %v3857
        %4076 = vmatpush1.msra.mxu0 %v3856
        %4077 = vmatprep.subr.mxu0 0.0
        %4078 = vmatpush1.msra.mxu0 0.0
        %4079 = vmatprep.subr.mxu0 0.0
        %4080 = vmatpush1.msra.mxu0 0.0
        %4081 = vmatprep.subr.mxu0 0.0
        %4082 = vmatpush1.msra.mxu0 0.0
        %4083 = vmatprep.subr.mxu0 0.0
        %4084 = vmatpush1.msra.mxu0 0.0
        %4085 = vmatprep.subr.mxu0 0.0
        %4086 = vmatpush1.msra.mxu0 0.0
        %4087 = vmatprep.subr.mxu0 0.0
        %4088 = vmatpush1.msra.mxu0 0.0
        %4089 = vmatprep.subr.mxu0 0.0
        %4090 = vmatpush1.msra.mxu0 0.0
        %4091 = vmatprep.subr.mxu0 0.0
        %4092 = vmatpush1.msra.mxu0 0.0
        %4093 = vmatprep.subr.mxu0 0.0
        %4094 = vmatpush1.msra.mxu0 0.0
        %4095 = vmatprep.subr.mxu0 0.0
        %4096 = vmatpush1.msra.mxu0 0.0
        %4097 = vmatprep.subr.mxu0 0.0
        %4098 = vmatpush1.msra.mxu0 0.0
        %4099 = vmatprep.subr.mxu0 0.0
        %4100 = vmatpush1.msra.mxu0 0.0
        %4101 = vmatprep.subr.mxu0 0.0
        %4102 = vmatpush1.msra.mxu0 0.0
        %4103 = vmatprep.subr.mxu0 0.0
        %4104 = vmatpush1.msra.mxu0 0.0
        %4105 = vmatprep.subr.mxu0 0.0
        %4106 = vmatpush1.msra.mxu0 0.0
        %4107 = vmatprep.subr.mxu0 0.0
        %4108 = vmatpush1.msra.mxu0 0.0
        %4109 = vmatprep.subr.mxu0 0.0
        %4110 = vmatpush1.msra.mxu0 0.0
        %4111 = vmatprep.subr.mxu0 0.0
        %4112 = vmatpush1.msra.mxu0 0.0
        %4113 = vmatprep.subr.mxu0 0.0
        %4114 = vmatpush1.msra.mxu0 0.0
        %4115 = vmatprep.subr.mxu0 0.0
        %4116 = vmatpush1.msra.mxu0 0.0
        %4117 = vmatprep.subr.mxu0 0.0
        %4118 = vmatpush1.msra.mxu0 0.0
        %4119 = vmatprep.subr.mxu0 0.0
        %4120 = vmatpush1.msra.mxu0 0.0
        %4121 = vmatprep.subr.mxu0 0.0
        %4122 = vmatpush1.msra.mxu0 0.0
        %4123 = vmatprep.subr.mxu0 0.0
        %4124 = vmatpush1.msra.mxu0 0.0
        %4125 = vmatprep.mubr.f32.mxu0 0.0
        %4126 = vmatmul.mubr.f32.gmra.mrb[0].mxu0 %v3917
        %v4127 = vpop.f32.mrb[0].mxu0
        %v4128 = vadd.f32 0.0, %v4127
        %v4129 = vpop.f32.mrb[0].mxu0
        %v4130 = vadd.f32 0.0, %v4129
        %4131 = vdwg.mxu0
        %4132 = vmatprep.subr.mxu0 %v426
        %4133 = vmatpush1.msra.mxu0 %v425
        %4134 = vmatprep.subr.mxu0 %v3811
        %4135 = vmatpush1.msra.mxu0 %v3810
        %4136 = vmatprep.subr.mxu0 %v3819
        %4137 = vmatpush1.msra.mxu0 %v3818
        %4138 = vmatprep.subr.mxu0 %v3827
        %4139 = vmatpush1.msra.mxu0 %v3826
        %4140 = vmatprep.subr.mxu0 %v3835
        %4141 = vmatpush1.msra.mxu0 %v3834
        %4142 = vmatprep.subr.mxu0 %v3843
        %4143 = vmatpush1.msra.mxu0 %v3842
        %4144 = vmatprep.subr.mxu0 %v3851
        %4145 = vmatpush1.msra.mxu0 %v3850
        %4146 = vmatprep.subr.mxu0 %v3859
        %4147 = vmatpush1.msra.mxu0 %v3858
        %4148 = vmatprep.subr.mxu0 0.0
        %4149 = vmatpush1.msra.mxu0 0.0
        %4150 = vmatprep.subr.mxu0 0.0
        %4151 = vmatpush1.msra.mxu0 0.0
        %4152 = vmatprep.subr.mxu0 0.0
        %4153 = vmatpush1.msra.mxu0 0.0
        %4154 = vmatprep.subr.mxu0 0.0
        %4155 = vmatpush1.msra.mxu0 0.0
        %4156 = vmatprep.subr.mxu0 0.0
        %4157 = vmatpush1.msra.mxu0 0.0
        %4158 = vmatprep.subr.mxu0 0.0
        %4159 = vmatpush1.msra.mxu0 0.0
        %4160 = vmatprep.subr.mxu0 0.0
        %4161 = vmatpush1.msra.mxu0 0.0
        %4162 = vmatprep.subr.mxu0 0.0
        %4163 = vmatpush1.msra.mxu0 0.0
        %4164 = vmatprep.subr.mxu0 0.0
        %4165 = vmatpush1.msra.mxu0 0.0
        %4166 = vmatprep.subr.mxu0 0.0
        %4167 = vmatpush1.msra.mxu0 0.0
        %4168 = vmatprep.subr.mxu0 0.0
        %4169 = vmatpush1.msra.mxu0 0.0
        %4170 = vmatprep.subr.mxu0 0.0
        %4171 = vmatpush1.msra.mxu0 0.0
        %4172 = vmatprep.subr.mxu0 0.0
        %4173 = vmatpush1.msra.mxu0 0.0
        %4174 = vmatprep.subr.mxu0 0.0
        %4175 = vmatpush1.msra.mxu0 0.0
        %4176 = vmatprep.subr.mxu0 0.0
        %4177 = vmatpush1.msra.mxu0 0.0
        %4178 = vmatprep.subr.mxu0 0.0
        %4179 = vmatpush1.msra.mxu0 0.0
        %4180 = vmatprep.subr.mxu0 0.0
        %4181 = vmatpush1.msra.mxu0 0.0
        %4182 = vmatprep.subr.mxu0 0.0
        %4183 = vmatpush1.msra.mxu0 0.0
        %4184 = vmatprep.subr.mxu0 0.0
        %4185 = vmatpush1.msra.mxu0 0.0
        %4186 = vmatprep.subr.mxu0 0.0
        %4187 = vmatpush1.msra.mxu0 0.0
        %4188 = vmatprep.subr.mxu0 0.0
        %4189 = vmatpush1.msra.mxu0 0.0
        %4190 = vmatprep.subr.mxu0 0.0
        %4191 = vmatpush1.msra.mxu0 0.0
        %4192 = vmatprep.subr.mxu0 0.0
        %4193 = vmatpush1.msra.mxu0 0.0
        %4194 = vmatprep.subr.mxu0 0.0
        %4195 = vmatpush1.msra.mxu0 0.0
        %4196 = vmatprep.mubr.f32.mxu0 0.0
        %4197 = vmatmul.mubr.f32.gmra.mrb[0].mxu0 %v3917
        %v4198 = vpop.f32.mrb[0].mxu0
        %v4199 = vadd.f32 0.0, %v4198
        %v4200 = vpop.f32.mrb[0].mxu0
        %v4201 = vadd.f32 0.0, %v4200
        %4202 = vdwg.mxu0
        %v4203 = vmul.f32 %v3986, %v763
        %v4204 = vmul.f32 %v3988, %v767
        %v4205 = vmul.f32 %v4057, %v771
        %v4206 = vmul.f32 %v4059, %v775
        %v4207 = vmul.f32 %v4128, %v779
        %v4208 = vmul.f32 %v4130, %v783
        %v4209 = vmul.f32 %v4199, %v787
        %v4210 = vmul.f32 %v4201, %v791
        %v4211 = vadd.f32 %v4203, %v4204
        %v4212 = vadd.f32 %v4211, %v4205
        %v4213 = vadd.f32 %v4212, %v4206
        %v4214 = vadd.f32 %v4213, %v4207
        %v4215 = vadd.f32 %v4214, %v4208
        %v4216 = vadd.f32 %v4215, %v4209
        %v4217 = vsel %vm814, %v4210, 0.0
        %v4218 = vadd.f32 %v4216, %v4217
        %4219 = vadd.xlane.f32.xlu0 %v4218
        %v4220 = vpop.xlane.xlu0 %4219
        %v4221 = vadd.f32 %v3647, %v4220
        %v4222 = vmul.f32 %v4203, %v3986
        %v4223 = vmul.f32 %v4204, %v3988
        %v4224 = vmul.f32 %v4205, %v4057
        %v4225 = vmul.f32 %v4206, %v4059
        %v4226 = vmul.f32 %v4207, %v4128
        %v4227 = vmul.f32 %v4208, %v4130
        %v4228 = vmul.f32 %v4209, %v4199
        %v4229 = vmul.f32 %v4210, %v4201
        %v4230 = vadd.f32 %v4222, %v4223
        %v4231 = vadd.f32 %v4230, %v4224
        %v4232 = vadd.f32 %v4231, %v4225
        %v4233 = vadd.f32 %v4232, %v4226
        %v4234 = vadd.f32 %v4233, %v4227
        %v4235 = vadd.f32 %v4234, %v4228
        %v4236 = vsel %vm814, %v4229, 0.0
        %v4237 = vadd.f32 %v4235, %v4236
        %4238 = vadd.xlane.f32.xlu0 %v4237
        %v4239 = vpop.xlane.xlu0 %4238
        %v4240 = vadd.f32 %v3666, %v4239
        %s4241 = scalar_lea.vmem %s213, 384 [#allocation8]
        %4242 = vst [vmem:[%s4241] sm:$0xff] %v3986
        %4243 = vst [vmem:[%s4241 + $0x8] sm:$0xff] %v3988
        %4244 = vst [vmem:[%s4241 + $0x10] sm:$0xff] %v4057
        %4245 = vst [vmem:[%s4241 + $0x18] sm:$0xff] %v4059
        %4246 = vst [vmem:[%s4241 + $0x20] sm:$0xff] %v4128
        %4247 = vst [vmem:[%s4241 + $0x28] sm:$0xff] %v4130
        %4248 = vst [vmem:[%s4241 + $0x30] sm:$0xff] %v4199
        %4249 = vst.msk [vmem:[%s4241 + $0x38] sm:$0xff] %vm814, %v4201
        %s4250 = scalar_lea.vmem [#allocation5], 56
        %v4251 = vld [vmem:[%s4250] sm:$0xff]
        %4252 = vrot.lane.b32.xlu0 %v250, 17
        %v4253 = vpop.permute.xlu0 %4252
        %4254 = vrot.lane.b32.xlu0 %v251, 17
        %v4255 = vpop.permute.xlu0 %4254
        %4256 = vrot.lane.b32.xlu0 %v252, 17
        %v4257 = vpop.permute.xlu0 %4256
        %4258 = vrot.lane.b32.xlu0 %v253, 17
        %v4259 = vpop.permute.xlu0 %4258
        %4260 = vrot.lane.b32.xlu0 %v254, 17
        %v4261 = vpop.permute.xlu0 %4260
        %4262 = vrot.lane.b32.xlu0 %v255, 17
        %v4263 = vpop.permute.xlu0 %4262
        %4264 = vrot.lane.b32.xlu0 %v256, 17
        %v4265 = vpop.permute.xlu0 %4264
        %4266 = vrot.lane.b32.xlu0 %v2508, 17
        %v4267 = vpop.permute.xlu0 %4266
        %4268 = vrot.lane.b32.xlu0 %v2507, 17
        %v4269 = vpop.permute.xlu0 %4268
        %4270 = vrot.lane.b32.xlu0 %v282, 17
        %v4271 = vpop.permute.xlu0 %4270
        %4272 = vrot.lane.b32.xlu0 %v283, 17
        %v4273 = vpop.permute.xlu0 %4272
        %4274 = vrot.lane.b32.xlu0 %v284, 17
        %v4275 = vpop.permute.xlu0 %4274
        %4276 = vrot.lane.b32.xlu0 %v285, 17
        %v4277 = vpop.permute.xlu0 %4276
        %4278 = vrot.lane.b32.xlu0 %v286, 17
        %v4279 = vpop.permute.xlu0 %4278
        %4280 = vrot.lane.b32.xlu0 %v287, 17
        %v4281 = vpop.permute.xlu0 %4280
        %4282 = vrot.lane.b32.xlu0 %v288, 17
        %v4283 = vpop.permute.xlu0 %4282
        %4284 = vrot.lane.b32.xlu0 %v2511, 17
        %v4285 = vpop.permute.xlu0 %4284
        %4286 = vrot.lane.b32.xlu0 %v2510, 17
        %v4287 = vpop.permute.xlu0 %4286
        %4288 = vrot.lane.b32.xlu0 %v314, 17
        %v4289 = vpop.permute.xlu0 %4288
        %4290 = vrot.lane.b32.xlu0 %v315, 17
        %v4291 = vpop.permute.xlu0 %4290
        %4292 = vrot.lane.b32.xlu0 %v316, 17
        %v4293 = vpop.permute.xlu0 %4292
        %4294 = vrot.lane.b32.xlu0 %v317, 17
        %v4295 = vpop.permute.xlu0 %4294
        %4296 = vrot.lane.b32.xlu0 %v318, 17
        %v4297 = vpop.permute.xlu0 %4296
        %4298 = vrot.lane.b32.xlu0 %v319, 17
        %v4299 = vpop.permute.xlu0 %4298
        %4300 = vrot.lane.b32.xlu0 %v320, 17
        %v4301 = vpop.permute.xlu0 %4300
        %4302 = vrot.lane.b32.xlu0 %v2514, 17
        %v4303 = vpop.permute.xlu0 %4302
        %4304 = vrot.lane.b32.xlu0 %v2513, 17
        %v4305 = vpop.permute.xlu0 %4304
        %4306 = vrot.lane.b32.xlu0 %v333, 17
        %v4307 = vpop.permute.xlu0 %4306
        %4308 = vrot.lane.b32.xlu0 %v350, 17
        %v4309 = vpop.permute.xlu0 %4308
        %4310 = vrot.lane.b32.xlu0 %v351, 17
        %v4311 = vpop.permute.xlu0 %4310
        %4312 = vrot.lane.b32.xlu0 %v352, 17
        %v4313 = vpop.permute.xlu0 %4312
        %4314 = vrot.lane.b32.xlu0 %v353, 17
        %v4315 = vpop.permute.xlu0 %4314
        %4316 = vrot.lane.b32.xlu0 %v354, 17
        %v4317 = vpop.permute.xlu0 %4316
        %4318 = vrot.lane.b32.xlu0 %v355, 17
        %v4319 = vpop.permute.xlu0 %4318
        %4320 = vrot.lane.b32.xlu0 %v356, 17
        %v4321 = vpop.permute.xlu0 %4320
        %4322 = vrot.lane.b32.xlu0 %v2518, 17
        %v4323 = vpop.permute.xlu0 %4322
        %4324 = vrot.lane.b32.xlu0 %v368, 17
        %v4325 = vpop.permute.xlu0 %4324
        %4326 = vrot.lane.b32.xlu0 %v385, 17
        %v4327 = vpop.permute.xlu0 %4326
        %4328 = vrot.lane.b32.xlu0 %v386, 17
        %v4329 = vpop.permute.xlu0 %4328
        %4330 = vrot.lane.b32.xlu0 %v387, 17
        %v4331 = vpop.permute.xlu0 %4330
        %4332 = vrot.lane.b32.xlu0 %v388, 17
        %v4333 = vpop.permute.xlu0 %4332
        %4334 = vrot.lane.b32.xlu0 %v389, 17
        %v4335 = vpop.permute.xlu0 %4334
        %4336 = vrot.lane.b32.xlu0 %v390, 17
        %v4337 = vpop.permute.xlu0 %4336
        %4338 = vrot.lane.b32.xlu0 %v391, 17
        %v4339 = vpop.permute.xlu0 %4338
        %4340 = vrot.lane.b32.xlu0 %v2521, 17
        %v4341 = vpop.permute.xlu0 %4340
        %4342 = vrot.lane.b32.xlu0 %v403, 17
        %v4343 = vpop.permute.xlu0 %4342
        %4344 = vrot.lane.b32.xlu0 %v420, 17
        %v4345 = vpop.permute.xlu0 %4344
        %4346 = vrot.lane.b32.xlu0 %v421, 17
        %v4347 = vpop.permute.xlu0 %4346
        %4348 = vrot.lane.b32.xlu0 %v422, 17
        %v4349 = vpop.permute.xlu0 %4348
        %4350 = vrot.lane.b32.xlu0 %v423, 17
        %v4351 = vpop.permute.xlu0 %4350
        %4352 = vrot.lane.b32.xlu0 %v424, 17
        %v4353 = vpop.permute.xlu0 %4352
        %4354 = vrot.lane.b32.xlu0 %v425, 17
        %v4355 = vpop.permute.xlu0 %4354
        %4356 = vrot.lane.b32.xlu0 %v426, 17
        %v4357 = vpop.permute.xlu0 %4356
        %4358 = vrot.lane.b32.xlu0 %v2524, 17
        %v4359 = vpop.permute.xlu0 %4358
        %4360 = vrot.lane.b32.xlu0 %v438, 17
        %v4361 = vpop.permute.xlu0 %4360
        %4362 = vrot.lane.b32.xlu0 %v455, 17
        %v4363 = vpop.permute.xlu0 %4362
        %4364 = vrot.lane.b32.xlu0 %v456, 17
        %v4365 = vpop.permute.xlu0 %4364
        %4366 = vrot.lane.b32.xlu0 %v457, 17
        %v4367 = vpop.permute.xlu0 %4366
        %4368 = vrot.lane.b32.xlu0 %v458, 17
        %v4369 = vpop.permute.xlu0 %4368
        %4370 = vrot.lane.b32.xlu0 %v459, 17
        %v4371 = vpop.permute.xlu0 %4370
        %4372 = vrot.lane.b32.xlu0 %v460, 17
        %v4373 = vpop.permute.xlu0 %4372
        %4374 = vrot.lane.b32.xlu0 %v461, 17
        %v4375 = vpop.permute.xlu0 %4374
        %4376 = vrot.lane.b32.xlu0 %v2527, 17
        %v4377 = vpop.permute.xlu0 %4376
        %v4378 = vsel %vm453, %v4253, %v4255
        %v4379 = vsel %vm453, %v4255, %v4257
        %v4380 = vsel %vm453, %v4257, %v4259
        %v4381 = vsel %vm453, %v4259, %v4261
        %v4382 = vsel %vm453, %v4261, %v4263
        %v4383 = vsel %vm453, %v4263, %v4265
        %v4384 = vsel %vm453, %v4265, %v4267
        %v4385 = vsel %vm453, %v4267, %v4269
        %v4386 = vsel %vm453, %v4271, %v4273
        %v4387 = vsel %vm453, %v4273, %v4275
        %v4388 = vsel %vm453, %v4275, %v4277
        %v4389 = vsel %vm453, %v4277, %v4279
        %v4390 = vsel %vm453, %v4279, %v4281
        %v4391 = vsel %vm453, %v4281, %v4283
        %v4392 = vsel %vm453, %v4283, %v4285
        %v4393 = vsel %vm453, %v4285, %v4287
        %v4394 = vsel %vm453, %v4289, %v4291
        %v4395 = vsel %vm453, %v4291, %v4293
        %v4396 = vsel %vm453, %v4293, %v4295
        %v4397 = vsel %vm453, %v4295, %v4297
        %v4398 = vsel %vm453, %v4297, %v4299
        %v4399 = vsel %vm453, %v4299, %v4301
        %v4400 = vsel %vm453, %v4301, %v4303
        %v4401 = vsel %vm453, %v4303, %v4305
        %v4402 = vsel %vm453, %v4307, %v4309
        %v4403 = vsel %vm453, %v4309, %v4311
        %v4404 = vsel %vm453, %v4311, %v4313
        %v4405 = vsel %vm453, %v4313, %v4315
        %v4406 = vsel %vm453, %v4315, %v4317
        %v4407 = vsel %vm453, %v4317, %v4319
        %v4408 = vsel %vm453, %v4319, %v4321
        %v4409 = vsel %vm453, %v4321, %v4323
        %v4410 = vsel %vm453, %v4325, %v4327
        %v4411 = vsel %vm453, %v4327, %v4329
        %v4412 = vsel %vm453, %v4329, %v4331
        %v4413 = vsel %vm453, %v4331, %v4333
        %v4414 = vsel %vm453, %v4333, %v4335
        %v4415 = vsel %vm453, %v4335, %v4337
        %v4416 = vsel %vm453, %v4337, %v4339
        %v4417 = vsel %vm453, %v4339, %v4341
        %v4418 = vsel %vm453, %v4343, %v4345
        %v4419 = vsel %vm453, %v4345, %v4347
        %v4420 = vsel %vm453, %v4347, %v4349
        %v4421 = vsel %vm453, %v4349, %v4351
        %v4422 = vsel %vm453, %v4351, %v4353
        %v4423 = vsel %vm453, %v4353, %v4355
        %v4424 = vsel %vm453, %v4355, %v4357
        %v4425 = vsel %vm453, %v4357, %v4359
        %v4426 = vsel %vm453, %v4361, %v4363
        %v4427 = vsel %vm453, %v4363, %v4365
        %v4428 = vsel %vm453, %v4365, %v4367
        %v4429 = vsel %vm453, %v4367, %v4369
        %v4430 = vsel %vm453, %v4369, %v4371
        %v4431 = vsel %vm453, %v4371, %v4373
        %v4432 = vsel %vm453, %v4373, %v4375
        %v4433 = vsel %vm453, %v4375, %v4377
        %v4491 = vsel %vm471, %v4251, 0
        %4493 = vmatprep.subr.mxu0 %v455
        %4494 = vmatpush1.msra.mxu0 %v454
        %4495 = vmatprep.subr.mxu0 %v4379
        %4496 = vmatpush1.msra.mxu0 %v4378
        %4497 = vmatprep.subr.mxu0 %v4387
        %4498 = vmatpush1.msra.mxu0 %v4386
        %4499 = vmatprep.subr.mxu0 %v4395
        %4500 = vmatpush1.msra.mxu0 %v4394
        %4501 = vmatprep.subr.mxu0 %v4403
        %4502 = vmatpush1.msra.mxu0 %v4402
        %4503 = vmatprep.subr.mxu0 %v4411
        %4504 = vmatpush1.msra.mxu0 %v4410
        %4505 = vmatprep.subr.mxu0 %v4419
        %4506 = vmatpush1.msra.mxu0 %v4418
        %4507 = vmatprep.subr.mxu0 %v4427
        %4508 = vmatpush1.msra.mxu0 %v4426
        %4509 = vmatprep.subr.mxu0 0.0
        %4510 = vmatpush1.msra.mxu0 0.0
        %4511 = vmatprep.subr.mxu0 0.0
        %4512 = vmatpush1.msra.mxu0 0.0
        %4513 = vmatprep.subr.mxu0 0.0
        %4514 = vmatpush1.msra.mxu0 0.0
        %4515 = vmatprep.subr.mxu0 0.0
        %4516 = vmatpush1.msra.mxu0 0.0
        %4517 = vmatprep.subr.mxu0 0.0
        %4518 = vmatpush1.msra.mxu0 0.0
        %4519 = vmatprep.subr.mxu0 0.0
        %4520 = vmatpush1.msra.mxu0 0.0
        %4521 = vmatprep.subr.mxu0 0.0
        %4522 = vmatpush1.msra.mxu0 0.0
        %4523 = vmatprep.subr.mxu0 0.0
        %4524 = vmatpush1.msra.mxu0 0.0
        %4525 = vmatprep.subr.mxu0 0.0
        %4526 = vmatpush1.msra.mxu0 0.0
        %4527 = vmatprep.subr.mxu0 0.0
        %4528 = vmatpush1.msra.mxu0 0.0
        %4529 = vmatprep.subr.mxu0 0.0
        %4530 = vmatpush1.msra.mxu0 0.0
        %4531 = vmatprep.subr.mxu0 0.0
        %4532 = vmatpush1.msra.mxu0 0.0
        %4533 = vmatprep.subr.mxu0 0.0
        %4534 = vmatpush1.msra.mxu0 0.0
        %4535 = vmatprep.subr.mxu0 0.0
        %4536 = vmatpush1.msra.mxu0 0.0
        %4537 = vmatprep.subr.mxu0 0.0
        %4538 = vmatpush1.msra.mxu0 0.0
        %4539 = vmatprep.subr.mxu0 0.0
        %4540 = vmatpush1.msra.mxu0 0.0
        %4541 = vmatprep.subr.mxu0 0.0
        %4542 = vmatpush1.msra.mxu0 0.0
        %4543 = vmatprep.subr.mxu0 0.0
        %4544 = vmatpush1.msra.mxu0 0.0
        %4545 = vmatprep.subr.mxu0 0.0
        %4546 = vmatpush1.msra.mxu0 0.0
        %4547 = vmatprep.subr.mxu0 0.0
        %4548 = vmatpush1.msra.mxu0 0.0
        %4549 = vmatprep.subr.mxu0 0.0
        %4550 = vmatpush1.msra.mxu0 0.0
        %4551 = vmatprep.subr.mxu0 0.0
        %4552 = vmatpush1.msra.mxu0 0.0
        %4553 = vmatprep.subr.mxu0 0.0
        %4554 = vmatpush1.msra.mxu0 0.0
        %4555 = vmatprep.subr.mxu0 0.0
        %4556 = vmatpush1.msra.mxu0 0.0
        %4557 = vmatprep.mubr.f32.mxu0 0.0
        %4558 = vmatmul.mubr.f32.gmra.mrb[0].mxu0 %v4491
        %v4559 = vpop.f32.mrb[0].mxu0
        %v4560 = vadd.f32 0.0, %v4559
        %v4561 = vpop.f32.mrb[0].mxu0
        %v4562 = vadd.f32 0.0, %v4561
        %4563 = vdwg.mxu0
        %4564 = vmatprep.subr.mxu0 %v457
        %4565 = vmatpush1.msra.mxu0 %v456
        %4566 = vmatprep.subr.mxu0 %v4381
        %4567 = vmatpush1.msra.mxu0 %v4380
        %4568 = vmatprep.subr.mxu0 %v4389
        %4569 = vmatpush1.msra.mxu0 %v4388
        %4570 = vmatprep.subr.mxu0 %v4397
        %4571 = vmatpush1.msra.mxu0 %v4396
        %4572 = vmatprep.subr.mxu0 %v4405
        %4573 = vmatpush1.msra.mxu0 %v4404
        %4574 = vmatprep.subr.mxu0 %v4413
        %4575 = vmatpush1.msra.mxu0 %v4412
        %4576 = vmatprep.subr.mxu0 %v4421
        %4577 = vmatpush1.msra.mxu0 %v4420
        %4578 = vmatprep.subr.mxu0 %v4429
        %4579 = vmatpush1.msra.mxu0 %v4428
        %4580 = vmatprep.subr.mxu0 0.0
        %4581 = vmatpush1.msra.mxu0 0.0
        %4582 = vmatprep.subr.mxu0 0.0
        %4583 = vmatpush1.msra.mxu0 0.0
        %4584 = vmatprep.subr.mxu0 0.0
        %4585 = vmatpush1.msra.mxu0 0.0
        %4586 = vmatprep.subr.mxu0 0.0
        %4587 = vmatpush1.msra.mxu0 0.0
        %4588 = vmatprep.subr.mxu0 0.0
        %4589 = vmatpush1.msra.mxu0 0.0
        %4590 = vmatprep.subr.mxu0 0.0
        %4591 = vmatpush1.msra.mxu0 0.0
        %4592 = vmatprep.subr.mxu0 0.0
        %4593 = vmatpush1.msra.mxu0 0.0
        %4594 = vmatprep.subr.mxu0 0.0
        %4595 = vmatpush1.msra.mxu0 0.0
        %4596 = vmatprep.subr.mxu0 0.0
        %4597 = vmatpush1.msra.mxu0 0.0
        %4598 = vmatprep.subr.mxu0 0.0
        %4599 = vmatpush1.msra.mxu0 0.0
        %4600 = vmatprep.subr.mxu0 0.0
        %4601 = vmatpush1.msra.mxu0 0.0
        %4602 = vmatprep.subr.mxu0 0.0
        %4603 = vmatpush1.msra.mxu0 0.0
        %4604 = vmatprep.subr.mxu0 0.0
        %4605 = vmatpush1.msra.mxu0 0.0
        %4606 = vmatprep.subr.mxu0 0.0
        %4607 = vmatpush1.msra.mxu0 0.0
        %4608 = vmatprep.subr.mxu0 0.0
        %4609 = vmatpush1.msra.mxu0 0.0
        %4610 = vmatprep.subr.mxu0 0.0
        %4611 = vmatpush1.msra.mxu0 0.0
        %4612 = vmatprep.subr.mxu0 0.0
        %4613 = vmatpush1.msra.mxu0 0.0
        %4614 = vmatprep.subr.mxu0 0.0
        %4615 = vmatpush1.msra.mxu0 0.0
        %4616 = vmatprep.subr.mxu0 0.0
        %4617 = vmatpush1.msra.mxu0 0.0
        %4618 = vmatprep.subr.mxu0 0.0
        %4619 = vmatpush1.msra.mxu0 0.0
        %4620 = vmatprep.subr.mxu0 0.0
        %4621 = vmatpush1.msra.mxu0 0.0
        %4622 = vmatprep.subr.mxu0 0.0
        %4623 = vmatpush1.msra.mxu0 0.0
        %4624 = vmatprep.subr.mxu0 0.0
        %4625 = vmatpush1.msra.mxu0 0.0
        %4626 = vmatprep.subr.mxu0 0.0
        %4627 = vmatpush1.msra.mxu0 0.0
        %4628 = vmatprep.mubr.f32.mxu0 0.0
        %4629 = vmatmul.mubr.f32.gmra.mrb[0].mxu0 %v4491
        %v4630 = vpop.f32.mrb[0].mxu0
        %v4631 = vadd.f32 0.0, %v4630
        %v4632 = vpop.f32.mrb[0].mxu0
        %v4633 = vadd.f32 0.0, %v4632
        %4634 = vdwg.mxu0
        %4635 = vmatprep.subr.mxu0 %v459
        %4636 = vmatpush1.msra.mxu0 %v458
        %4637 = vmatprep.subr.mxu0 %v4383
        %4638 = vmatpush1.msra.mxu0 %v4382
        %4639 = vmatprep.subr.mxu0 %v4391
        %4640 = vmatpush1.msra.mxu0 %v4390
        %4641 = vmatprep.subr.mxu0 %v4399
        %4642 = vmatpush1.msra.mxu0 %v4398
        %4643 = vmatprep.subr.mxu0 %v4407
        %4644 = vmatpush1.msra.mxu0 %v4406
        %4645 = vmatprep.subr.mxu0 %v4415
        %4646 = vmatpush1.msra.mxu0 %v4414
        %4647 = vmatprep.subr.mxu0 %v4423
        %4648 = vmatpush1.msra.mxu0 %v4422
        %4649 = vmatprep.subr.mxu0 %v4431
        %4650 = vmatpush1.msra.mxu0 %v4430
        %4651 = vmatprep.subr.mxu0 0.0
        %4652 = vmatpush1.msra.mxu0 0.0
        %4653 = vmatprep.subr.mxu0 0.0
        %4654 = vmatpush1.msra.mxu0 0.0
        %4655 = vmatprep.subr.mxu0 0.0
        %4656 = vmatpush1.msra.mxu0 0.0
        %4657 = vmatprep.subr.mxu0 0.0
        %4658 = vmatpush1.msra.mxu0 0.0
        %4659 = vmatprep.subr.mxu0 0.0
        %4660 = vmatpush1.msra.mxu0 0.0
        %4661 = vmatprep.subr.mxu0 0.0
        %4662 = vmatpush1.msra.mxu0 0.0
        %4663 = vmatprep.subr.mxu0 0.0
        %4664 = vmatpush1.msra.mxu0 0.0
        %4665 = vmatprep.subr.mxu0 0.0
        %4666 = vmatpush1.msra.mxu0 0.0
        %4667 = vmatprep.subr.mxu0 0.0
        %4668 = vmatpush1.msra.mxu0 0.0
        %4669 = vmatprep.subr.mxu0 0.0
        %4670 = vmatpush1.msra.mxu0 0.0
        %4671 = vmatprep.subr.mxu0 0.0
        %4672 = vmatpush1.msra.mxu0 0.0
        %4673 = vmatprep.subr.mxu0 0.0
        %4674 = vmatpush1.msra.mxu0 0.0
        %4675 = vmatprep.subr.mxu0 0.0
        %4676 = vmatpush1.msra.mxu0 0.0
        %4677 = vmatprep.subr.mxu0 0.0
        %4678 = vmatpush1.msra.mxu0 0.0
        %4679 = vmatprep.subr.mxu0 0.0
        %4680 = vmatpush1.msra.mxu0 0.0
        %4681 = vmatprep.subr.mxu0 0.0
        %4682 = vmatpush1.msra.mxu0 0.0
        %4683 = vmatprep.subr.mxu0 0.0
        %4684 = vmatpush1.msra.mxu0 0.0
        %4685 = vmatprep.subr.mxu0 0.0
        %4686 = vmatpush1.msra.mxu0 0.0
        %4687 = vmatprep.subr.mxu0 0.0
        %4688 = vmatpush1.msra.mxu0 0.0
        %4689 = vmatprep.subr.mxu0 0.0
        %4690 = vmatpush1.msra.mxu0 0.0
        %4691 = vmatprep.subr.mxu0 0.0
        %4692 = vmatpush1.msra.mxu0 0.0
        %4693 = vmatprep.subr.mxu0 0.0
        %4694 = vmatpush1.msra.mxu0 0.0
        %4695 = vmatprep.subr.mxu0 0.0
        %4696 = vmatpush1.msra.mxu0 0.0
        %4697 = vmatprep.subr.mxu0 0.0
        %4698 = vmatpush1.msra.mxu0 0.0
        %4699 = vmatprep.mubr.f32.mxu0 0.0
        %4700 = vmatmul.mubr.f32.gmra.mrb[0].mxu0 %v4491
        %v4701 = vpop.f32.mrb[0].mxu0
        %v4702 = vadd.f32 0.0, %v4701
        %v4703 = vpop.f32.mrb[0].mxu0
        %v4704 = vadd.f32 0.0, %v4703
        %4705 = vdwg.mxu0
        %4706 = vmatprep.subr.mxu0 %v461
        %4707 = vmatpush1.msra.mxu0 %v460
        %4708 = vmatprep.subr.mxu0 %v4385
        %4709 = vmatpush1.msra.mxu0 %v4384
        %4710 = vmatprep.subr.mxu0 %v4393
        %4711 = vmatpush1.msra.mxu0 %v4392
        %4712 = vmatprep.subr.mxu0 %v4401
        %4713 = vmatpush1.msra.mxu0 %v4400
        %4714 = vmatprep.subr.mxu0 %v4409
        %4715 = vmatpush1.msra.mxu0 %v4408
        %4716 = vmatprep.subr.mxu0 %v4417
        %4717 = vmatpush1.msra.mxu0 %v4416
        %4718 = vmatprep.subr.mxu0 %v4425
        %4719 = vmatpush1.msra.mxu0 %v4424
        %4720 = vmatprep.subr.mxu0 %v4433
        %4721 = vmatpush1.msra.mxu0 %v4432
        %4722 = vmatprep.subr.mxu0 0.0
        %4723 = vmatpush1.msra.mxu0 0.0
        %4724 = vmatprep.subr.mxu0 0.0
        %4725 = vmatpush1.msra.mxu0 0.0
        %4726 = vmatprep.subr.mxu0 0.0
        %4727 = vmatpush1.msra.mxu0 0.0
        %4728 = vmatprep.subr.mxu0 0.0
        %4729 = vmatpush1.msra.mxu0 0.0
        %4730 = vmatprep.subr.mxu0 0.0
        %4731 = vmatpush1.msra.mxu0 0.0
        %4732 = vmatprep.subr.mxu0 0.0
        %4733 = vmatpush1.msra.mxu0 0.0
        %4734 = vmatprep.subr.mxu0 0.0
        %4735 = vmatpush1.msra.mxu0 0.0
        %4736 = vmatprep.subr.mxu0 0.0
        %4737 = vmatpush1.msra.mxu0 0.0
        %4738 = vmatprep.subr.mxu0 0.0
        %4739 = vmatpush1.msra.mxu0 0.0
        %4740 = vmatprep.subr.mxu0 0.0
        %4741 = vmatpush1.msra.mxu0 0.0
        %4742 = vmatprep.subr.mxu0 0.0
        %4743 = vmatpush1.msra.mxu0 0.0
        %4744 = vmatprep.subr.mxu0 0.0
        %4745 = vmatpush1.msra.mxu0 0.0
        %4746 = vmatprep.subr.mxu0 0.0
        %4747 = vmatpush1.msra.mxu0 0.0
        %4748 = vmatprep.subr.mxu0 0.0
        %4749 = vmatpush1.msra.mxu0 0.0
        %4750 = vmatprep.subr.mxu0 0.0
        %4751 = vmatpush1.msra.mxu0 0.0
        %4752 = vmatprep.subr.mxu0 0.0
        %4753 = vmatpush1.msra.mxu0 0.0
        %4754 = vmatprep.subr.mxu0 0.0
        %4755 = vmatpush1.msra.mxu0 0.0
        %4756 = vmatprep.subr.mxu0 0.0
        %4757 = vmatpush1.msra.mxu0 0.0
        %4758 = vmatprep.subr.mxu0 0.0
        %4759 = vmatpush1.msra.mxu0 0.0
        %4760 = vmatprep.subr.mxu0 0.0
        %4761 = vmatpush1.msra.mxu0 0.0
        %4762 = vmatprep.subr.mxu0 0.0
        %4763 = vmatpush1.msra.mxu0 0.0
        %4764 = vmatprep.subr.mxu0 0.0
        %4765 = vmatpush1.msra.mxu0 0.0
        %4766 = vmatprep.subr.mxu0 0.0
        %4767 = vmatpush1.msra.mxu0 0.0
        %4768 = vmatprep.subr.mxu0 0.0
        %4769 = vmatpush1.msra.mxu0 0.0
        %4770 = vmatprep.mubr.f32.mxu0 0.0
        %4771 = vmatmul.mubr.f32.gmra.mrb[0].mxu0 %v4491
        %v4772 = vpop.f32.mrb[0].mxu0
        %v4773 = vadd.f32 0.0, %v4772
        %v4774 = vpop.f32.mrb[0].mxu0
        %v4775 = vadd.f32 0.0, %v4774
        %4776 = vdwg.mxu0
        %v4777 = vmul.f32 %v4560, %v763
        %v4778 = vmul.f32 %v4562, %v767
        %v4779 = vmul.f32 %v4631, %v771
        %v4780 = vmul.f32 %v4633, %v775
        %v4781 = vmul.f32 %v4702, %v779
        %v4782 = vmul.f32 %v4704, %v783
        %v4783 = vmul.f32 %v4773, %v787
        %v4784 = vmul.f32 %v4775, %v791
        %v4785 = vadd.f32 %v4777, %v4778
        %v4786 = vadd.f32 %v4785, %v4779
        %v4787 = vadd.f32 %v4786, %v4780
        %v4788 = vadd.f32 %v4787, %v4781
        %v4789 = vadd.f32 %v4788, %v4782
        %v4790 = vadd.f32 %v4789, %v4783
        %v4791 = vsel %vm814, %v4784, 0.0
        %v4792 = vadd.f32 %v4790, %v4791
        %4793 = vadd.xlane.f32.xlu0 %v4792
        %v4794 = vpop.xlane.xlu0 %4793
        %v4795 = vadd.f32 %v4221, %v4794
        %v4796 = vmul.f32 %v4777, %v4560
        %v4797 = vmul.f32 %v4778, %v4562
        %v4798 = vmul.f32 %v4779, %v4631
        %v4799 = vmul.f32 %v4780, %v4633
        %v4800 = vmul.f32 %v4781, %v4702
        %v4801 = vmul.f32 %v4782, %v4704
        %v4802 = vmul.f32 %v4783, %v4773
        %v4803 = vmul.f32 %v4784, %v4775
        %v4804 = vadd.f32 %v4796, %v4797
        %v4805 = vadd.f32 %v4804, %v4798
        %v4806 = vadd.f32 %v4805, %v4799
        %v4807 = vadd.f32 %v4806, %v4800
        %v4808 = vadd.f32 %v4807, %v4801
        %v4809 = vadd.f32 %v4808, %v4802
        %v4810 = vsel %vm814, %v4803, 0.0
        %v4811 = vadd.f32 %v4809, %v4810
        %4812 = vadd.xlane.f32.xlu0 %v4811
        %v4813 = vpop.xlane.xlu0 %4812
        %v4814 = vadd.f32 %v4240, %v4813
        %s4815 = scalar_lea.vmem %s213, 448 [#allocation8]
        %4816 = vst [vmem:[%s4815] sm:$0xff] %v4560
        %4817 = vst [vmem:[%s4815 + $0x8] sm:$0xff] %v4562
        %4818 = vst [vmem:[%s4815 + $0x10] sm:$0xff] %v4631
        %4819 = vst [vmem:[%s4815 + $0x18] sm:$0xff] %v4633
        %4820 = vst [vmem:[%s4815 + $0x20] sm:$0xff] %v4702
        %4821 = vst [vmem:[%s4815 + $0x28] sm:$0xff] %v4704
        %4822 = vst [vmem:[%s4815 + $0x30] sm:$0xff] %v4773
        %4823 = vst.msk [vmem:[%s4815 + $0x38] sm:$0xff] %vm814, %v4775
        %v4824 = vrcp.pop 4096.0
        %v4825 = vmul.f32 %v4795, %v4824
        %v4826 = vmul.f32 %v4814, %v4824
        %v4827 = vmul.f32 %v4825, %v4825
        %v4828 = vsub.f32 %v4826, %v4827
        %v4829 = vadd.f32 %v4828, 1e-05
        %v4830 = vrsqrt.pop %v4829
        %v4831 = vsub.f32 0.0, %v4825
        %v4832 = vmul.f32 %v4831, %v4830
        %v4833 = vld [vmem:[%s213] sm:$0xff]
        %v4834 = vld [vmem:[%s213 + $0x8] sm:$0xff]
        %v4835 = vld [vmem:[%s213 + $0x10] sm:$0xff]
        %v4836 = vld [vmem:[%s213 + $0x18] sm:$0xff]
        %v4837 = vld [vmem:[%s213 + $0x20] sm:$0xff]
        %v4838 = vld [vmem:[%s213 + $0x28] sm:$0xff]
        %v4839 = vld [vmem:[%s213 + $0x30] sm:$0xff]
        %v4840 = vld [vmem:[%s213 + $0x38] sm:$0xff]
        %v4841 = vmul.f32 %v4833, %v4830
        %v4842 = vmul.f32 %v4834, %v4830
        %v4843 = vmul.f32 %v4835, %v4830
        %v4844 = vmul.f32 %v4836, %v4830
        %v4845 = vmul.f32 %v4837, %v4830
        %v4846 = vmul.f32 %v4838, %v4830
        %v4847 = vmul.f32 %v4839, %v4830
        %v4848 = vmul.f32 %v4840, %v4830
        %v4849 = vadd.f32 %v4841, %v4832
        %v4850 = vadd.f32 %v4842, %v4832
        %v4851 = vadd.f32 %v4843, %v4832
        %v4852 = vadd.f32 %v4844, %v4832
        %v4853 = vadd.f32 %v4845, %v4832
        %v4854 = vadd.f32 %v4846, %v4832
        %v4855 = vadd.f32 %v4847, %v4832
        %v4856 = vadd.f32 %v4848, %v4832
        %v4857 = vmax.f32 %v4849, 0.0
        %v4858 = vmax.f32 %v4850, 0.0
        %v4859 = vmax.f32 %v4851, 0.0
        %v4860 = vmax.f32 %v4852, 0.0
        %v4861 = vmax.f32 %v4853, 0.0
        %v4862 = vmax.f32 %v4854, 0.0
        %v4863 = vmax.f32 %v4855, 0.0
        %v4864 = vmax.f32 %v4856, 0.0
        %4865 = vst [vmem:[%s213] sm:$0xff] %v4857
        %4866 = vst [vmem:[%s213 + $0x8] sm:$0xff] %v4858
        %4867 = vst [vmem:[%s213 + $0x10] sm:$0xff] %v4859
        %4868 = vst [vmem:[%s213 + $0x18] sm:$0xff] %v4860
        %4869 = vst [vmem:[%s213 + $0x20] sm:$0xff] %v4861
        %4870 = vst [vmem:[%s213 + $0x28] sm:$0xff] %v4862
        %4871 = vst [vmem:[%s213 + $0x30] sm:$0xff] %v4863
        %4872 = vst.msk [vmem:[%s213 + $0x38] sm:$0xff] %vm814, %v4864
        %v4873 = vld [vmem:[%s1391] sm:$0xff]
        %v4874 = vld [vmem:[%s1391 + $0x8] sm:$0xff]
        %v4875 = vld [vmem:[%s1391 + $0x10] sm:$0xff]
        %v4876 = vld [vmem:[%s1391 + $0x18] sm:$0xff]
        %v4877 = vld [vmem:[%s1391 + $0x20] sm:$0xff]
        %v4878 = vld [vmem:[%s1391 + $0x28] sm:$0xff]
        %v4879 = vld [vmem:[%s1391 + $0x30] sm:$0xff]
        %v4880 = vld [vmem:[%s1391 + $0x38] sm:$0xff]
        %v4881 = vmul.f32 %v4873, %v4830
        %v4882 = vmul.f32 %v4874, %v4830
        %v4883 = vmul.f32 %v4875, %v4830
        %v4884 = vmul.f32 %v4876, %v4830
        %v4885 = vmul.f32 %v4877, %v4830
        %v4886 = vmul.f32 %v4878, %v4830
        %v4887 = vmul.f32 %v4879, %v4830
        %v4888 = vmul.f32 %v4880, %v4830
        %v4889 = vadd.f32 %v4881, %v4832
        %v4890 = vadd.f32 %v4882, %v4832
        %v4891 = vadd.f32 %v4883, %v4832
        %v4892 = vadd.f32 %v4884, %v4832
        %v4893 = vadd.f32 %v4885, %v4832
        %v4894 = vadd.f32 %v4886, %v4832
        %v4895 = vadd.f32 %v4887, %v4832
        %v4896 = vadd.f32 %v4888, %v4832
        %v4897 = vmax.f32 %v4889, 0.0
        %v4898 = vmax.f32 %v4890, 0.0
        %v4899 = vmax.f32 %v4891, 0.0
        %v4900 = vmax.f32 %v4892, 0.0
        %v4901 = vmax.f32 %v4893, 0.0
        %v4902 = vmax.f32 %v4894, 0.0
        %v4903 = vmax.f32 %v4895, 0.0
        %v4904 = vmax.f32 %v4896, 0.0
        %4905 = vst [vmem:[%s1391] sm:$0xff] %v4897
        %4906 = vst [vmem:[%s1391 + $0x8] sm:$0xff] %v4898
        %4907 = vst [vmem:[%s1391 + $0x10] sm:$0xff] %v4899
        %4908 = vst [vmem:[%s1391 + $0x18] sm:$0xff] %v4900
        %4909 = vst [vmem:[%s1391 + $0x20] sm:$0xff] %v4901
        %4910 = vst [vmem:[%s1391 + $0x28] sm:$0xff] %v4902
        %4911 = vst [vmem:[%s1391 + $0x30] sm:$0xff] %v4903
        %4912 = vst.msk [vmem:[%s1391 + $0x38] sm:$0xff] %vm814, %v4904
        %v4913 = vld [vmem:[%s1944] sm:$0xff]
        %v4914 = vld [vmem:[%s1944 + $0x8] sm:$0xff]
        %v4915 = vld [vmem:[%s1944 + $0x10] sm:$0xff]
        %v4916 = vld [vmem:[%s1944 + $0x18] sm:$0xff]
        %v4917 = vld [vmem:[%s1944 + $0x20] sm:$0xff]
        %v4918 = vld [vmem:[%s1944 + $0x28] sm:$0xff]
        %v4919 = vld [vmem:[%s1944 + $0x30] sm:$0xff]
        %v4920 = vld [vmem:[%s1944 + $0x38] sm:$0xff]
        %v4921 = vmul.f32 %v4913, %v4830
        %v4922 = vmul.f32 %v4914, %v4830
        %v4923 = vmul.f32 %v4915, %v4830
        %v4924 = vmul.f32 %v4916, %v4830
        %v4925 = vmul.f32 %v4917, %v4830
        %v4926 = vmul.f32 %v4918, %v4830
        %v4927 = vmul.f32 %v4919, %v4830
        %v4928 = vmul.f32 %v4920, %v4830
        %v4929 = vadd.f32 %v4921, %v4832
        %v4930 = vadd.f32 %v4922, %v4832
        %v4931 = vadd.f32 %v4923, %v4832
        %v4932 = vadd.f32 %v4924, %v4832
        %v4933 = vadd.f32 %v4925, %v4832
        %v4934 = vadd.f32 %v4926, %v4832
        %v4935 = vadd.f32 %v4927, %v4832
        %v4936 = vadd.f32 %v4928, %v4832
        %v4937 = vmax.f32 %v4929, 0.0
        %v4938 = vmax.f32 %v4930, 0.0
        %v4939 = vmax.f32 %v4931, 0.0
        %v4940 = vmax.f32 %v4932, 0.0
        %v4941 = vmax.f32 %v4933, 0.0
        %v4942 = vmax.f32 %v4934, 0.0
        %v4943 = vmax.f32 %v4935, 0.0
        %v4944 = vmax.f32 %v4936, 0.0
        %4945 = vst [vmem:[%s1944] sm:$0xff] %v4937
        %4946 = vst [vmem:[%s1944 + $0x8] sm:$0xff] %v4938
        %4947 = vst [vmem:[%s1944 + $0x10] sm:$0xff] %v4939
        %4948 = vst [vmem:[%s1944 + $0x18] sm:$0xff] %v4940
        %4949 = vst [vmem:[%s1944 + $0x20] sm:$0xff] %v4941
        %4950 = vst [vmem:[%s1944 + $0x28] sm:$0xff] %v4942
        %4951 = vst [vmem:[%s1944 + $0x30] sm:$0xff] %v4943
        %4952 = vst.msk [vmem:[%s1944 + $0x38] sm:$0xff] %vm814, %v4944
        %v4953 = vld [vmem:[%s2497] sm:$0xff]
        %v4954 = vld [vmem:[%s2497 + $0x8] sm:$0xff]
        %v4955 = vld [vmem:[%s2497 + $0x10] sm:$0xff]
        %v4956 = vld [vmem:[%s2497 + $0x18] sm:$0xff]
        %v4957 = vld [vmem:[%s2497 + $0x20] sm:$0xff]
        %v4958 = vld [vmem:[%s2497 + $0x28] sm:$0xff]
        %v4959 = vld [vmem:[%s2497 + $0x30] sm:$0xff]
        %v4960 = vld [vmem:[%s2497 + $0x38] sm:$0xff]
        %v4961 = vmul.f32 %v4953, %v4830
        %v4962 = vmul.f32 %v4954, %v4830
        %v4963 = vmul.f32 %v4955, %v4830
        %v4964 = vmul.f32 %v4956, %v4830
        %v4965 = vmul.f32 %v4957, %v4830
        %v4966 = vmul.f32 %v4958, %v4830
        %v4967 = vmul.f32 %v4959, %v4830
        %v4968 = vmul.f32 %v4960, %v4830
        %v4969 = vadd.f32 %v4961, %v4832
        %v4970 = vadd.f32 %v4962, %v4832
        %v4971 = vadd.f32 %v4963, %v4832
        %v4972 = vadd.f32 %v4964, %v4832
        %v4973 = vadd.f32 %v4965, %v4832
        %v4974 = vadd.f32 %v4966, %v4832
        %v4975 = vadd.f32 %v4967, %v4832
        %v4976 = vadd.f32 %v4968, %v4832
        %v4977 = vmax.f32 %v4969, 0.0
        %v4978 = vmax.f32 %v4970, 0.0
        %v4979 = vmax.f32 %v4971, 0.0
        %v4980 = vmax.f32 %v4972, 0.0
        %v4981 = vmax.f32 %v4973, 0.0
        %v4982 = vmax.f32 %v4974, 0.0
        %v4983 = vmax.f32 %v4975, 0.0
        %v4984 = vmax.f32 %v4976, 0.0
        %4985 = vst [vmem:[%s2497] sm:$0xff] %v4977
        %4986 = vst [vmem:[%s2497 + $0x8] sm:$0xff] %v4978
        %4987 = vst [vmem:[%s2497 + $0x10] sm:$0xff] %v4979
        %4988 = vst [vmem:[%s2497 + $0x18] sm:$0xff] %v4980
        %4989 = vst [vmem:[%s2497 + $0x20] sm:$0xff] %v4981
        %4990 = vst [vmem:[%s2497 + $0x28] sm:$0xff] %v4982
        %4991 = vst [vmem:[%s2497 + $0x30] sm:$0xff] %v4983
        %4992 = vst.msk [vmem:[%s2497 + $0x38] sm:$0xff] %vm814, %v4984
        %v4993 = vld [vmem:[%s3093] sm:$0xff]
        %v4994 = vld [vmem:[%s3093 + $0x8] sm:$0xff]
        %v4995 = vld [vmem:[%s3093 + $0x10] sm:$0xff]
        %v4996 = vld [vmem:[%s3093 + $0x18] sm:$0xff]
        %v4997 = vld [vmem:[%s3093 + $0x20] sm:$0xff]
        %v4998 = vld [vmem:[%s3093 + $0x28] sm:$0xff]
        %v4999 = vld [vmem:[%s3093 + $0x30] sm:$0xff]
        %v5000 = vld [vmem:[%s3093 + $0x38] sm:$0xff]
        %v5001 = vmul.f32 %v4993, %v4830
        %v5002 = vmul.f32 %v4994, %v4830
        %v5003 = vmul.f32 %v4995, %v4830
        %v5004 = vmul.f32 %v4996, %v4830
        %v5005 = vmul.f32 %v4997, %v4830
        %v5006 = vmul.f32 %v4998, %v4830
        %v5007 = vmul.f32 %v4999, %v4830
        %v5008 = vmul.f32 %v5000, %v4830
        %v5009 = vadd.f32 %v5001, %v4832
        %v5010 = vadd.f32 %v5002, %v4832
        %v5011 = vadd.f32 %v5003, %v4832
        %v5012 = vadd.f32 %v5004, %v4832
        %v5013 = vadd.f32 %v5005, %v4832
        %v5014 = vadd.f32 %v5006, %v4832
        %v5015 = vadd.f32 %v5007, %v4832
        %v5016 = vadd.f32 %v5008, %v4832
        %v5017 = vmax.f32 %v5009, 0.0
        %v5018 = vmax.f32 %v5010, 0.0
        %v5019 = vmax.f32 %v5011, 0.0
        %v5020 = vmax.f32 %v5012, 0.0
        %v5021 = vmax.f32 %v5013, 0.0
        %v5022 = vmax.f32 %v5014, 0.0
        %v5023 = vmax.f32 %v5015, 0.0
        %v5024 = vmax.f32 %v5016, 0.0
        %5025 = vst [vmem:[%s3093] sm:$0xff] %v5017
        %5026 = vst [vmem:[%s3093 + $0x8] sm:$0xff] %v5018
        %5027 = vst [vmem:[%s3093 + $0x10] sm:$0xff] %v5019
        %5028 = vst [vmem:[%s3093 + $0x18] sm:$0xff] %v5020
        %5029 = vst [vmem:[%s3093 + $0x20] sm:$0xff] %v5021
        %5030 = vst [vmem:[%s3093 + $0x28] sm:$0xff] %v5022
        %5031 = vst [vmem:[%s3093 + $0x30] sm:$0xff] %v5023
        %5032 = vst.msk [vmem:[%s3093 + $0x38] sm:$0xff] %vm814, %v5024
        %v5033 = vld [vmem:[%s3667] sm:$0xff]
        %v5034 = vld [vmem:[%s3667 + $0x8] sm:$0xff]
        %v5035 = vld [vmem:[%s3667 + $0x10] sm:$0xff]
        %v5036 = vld [vmem:[%s3667 + $0x18] sm:$0xff]
        %v5037 = vld [vmem:[%s3667 + $0x20] sm:$0xff]
        %v5038 = vld [vmem:[%s3667 + $0x28] sm:$0xff]
        %v5039 = vld [vmem:[%s3667 + $0x30] sm:$0xff]
        %v5040 = vld [vmem:[%s3667 + $0x38] sm:$0xff]
        %v5041 = vmul.f32 %v5033, %v4830
        %v5042 = vmul.f32 %v5034, %v4830
        %v5043 = vmul.f32 %v5035, %v4830
        %v5044 = vmul.f32 %v5036, %v4830
        %v5045 = vmul.f32 %v5037, %v4830
        %v5046 = vmul.f32 %v5038, %v4830
        %v5047 = vmul.f32 %v5039, %v4830
        %v5048 = vmul.f32 %v5040, %v4830
        %v5049 = vadd.f32 %v5041, %v4832
        %v5050 = vadd.f32 %v5042, %v4832
        %v5051 = vadd.f32 %v5043, %v4832
        %v5052 = vadd.f32 %v5044, %v4832
        %v5053 = vadd.f32 %v5045, %v4832
        %v5054 = vadd.f32 %v5046, %v4832
        %v5055 = vadd.f32 %v5047, %v4832
        %v5056 = vadd.f32 %v5048, %v4832
        %v5057 = vmax.f32 %v5049, 0.0
        %v5058 = vmax.f32 %v5050, 0.0
        %v5059 = vmax.f32 %v5051, 0.0
        %v5060 = vmax.f32 %v5052, 0.0
        %v5061 = vmax.f32 %v5053, 0.0
        %v5062 = vmax.f32 %v5054, 0.0
        %v5063 = vmax.f32 %v5055, 0.0
        %v5064 = vmax.f32 %v5056, 0.0
        %5065 = vst [vmem:[%s3667] sm:$0xff] %v5057
        %5066 = vst [vmem:[%s3667 + $0x8] sm:$0xff] %v5058
        %5067 = vst [vmem:[%s3667 + $0x10] sm:$0xff] %v5059
        %5068 = vst [vmem:[%s3667 + $0x18] sm:$0xff] %v5060
        %5069 = vst [vmem:[%s3667 + $0x20] sm:$0xff] %v5061
        %5070 = vst [vmem:[%s3667 + $0x28] sm:$0xff] %v5062
        %5071 = vst [vmem:[%s3667 + $0x30] sm:$0xff] %v5063
        %5072 = vst.msk [vmem:[%s3667 + $0x38] sm:$0xff] %vm814, %v5064
        %v5073 = vld [vmem:[%s4241] sm:$0xff]
        %v5074 = vld [vmem:[%s4241 + $0x8] sm:$0xff]
        %v5075 = vld [vmem:[%s4241 + $0x10] sm:$0xff]
        %v5076 = vld [vmem:[%s4241 + $0x18] sm:$0xff]
        %v5077 = vld [vmem:[%s4241 + $0x20] sm:$0xff]
        %v5078 = vld [vmem:[%s4241 + $0x28] sm:$0xff]
        %v5079 = vld [vmem:[%s4241 + $0x30] sm:$0xff]
        %v5080 = vld [vmem:[%s4241 + $0x38] sm:$0xff]
        %v5081 = vmul.f32 %v5073, %v4830
        %v5082 = vmul.f32 %v5074, %v4830
        %v5083 = vmul.f32 %v5075, %v4830
        %v5084 = vmul.f32 %v5076, %v4830
        %v5085 = vmul.f32 %v5077, %v4830
        %v5086 = vmul.f32 %v5078, %v4830
        %v5087 = vmul.f32 %v5079, %v4830
        %v5088 = vmul.f32 %v5080, %v4830
        %v5089 = vadd.f32 %v5081, %v4832
        %v5090 = vadd.f32 %v5082, %v4832
        %v5091 = vadd.f32 %v5083, %v4832
        %v5092 = vadd.f32 %v5084, %v4832
        %v5093 = vadd.f32 %v5085, %v4832
        %v5094 = vadd.f32 %v5086, %v4832
        %v5095 = vadd.f32 %v5087, %v4832
        %v5096 = vadd.f32 %v5088, %v4832
        %v5097 = vmax.f32 %v5089, 0.0
        %v5098 = vmax.f32 %v5090, 0.0
        %v5099 = vmax.f32 %v5091, 0.0
        %v5100 = vmax.f32 %v5092, 0.0
        %v5101 = vmax.f32 %v5093, 0.0
        %v5102 = vmax.f32 %v5094, 0.0
        %v5103 = vmax.f32 %v5095, 0.0
        %v5104 = vmax.f32 %v5096, 0.0
        %5105 = vst [vmem:[%s4241] sm:$0xff] %v5097
        %5106 = vst [vmem:[%s4241 + $0x8] sm:$0xff] %v5098
        %5107 = vst [vmem:[%s4241 + $0x10] sm:$0xff] %v5099
        %5108 = vst [vmem:[%s4241 + $0x18] sm:$0xff] %v5100
        %5109 = vst [vmem:[%s4241 + $0x20] sm:$0xff] %v5101
        %5110 = vst [vmem:[%s4241 + $0x28] sm:$0xff] %v5102
        %5111 = vst [vmem:[%s4241 + $0x30] sm:$0xff] %v5103
        %5112 = vst.msk [vmem:[%s4241 + $0x38] sm:$0xff] %vm814, %v5104
        %v5113 = vld [vmem:[%s4815] sm:$0xff]
        %v5114 = vld [vmem:[%s4815 + $0x8] sm:$0xff]
        %v5115 = vld [vmem:[%s4815 + $0x10] sm:$0xff]
        %v5116 = vld [vmem:[%s4815 + $0x18] sm:$0xff]
        %v5117 = vld [vmem:[%s4815 + $0x20] sm:$0xff]
        %v5118 = vld [vmem:[%s4815 + $0x28] sm:$0xff]
        %v5119 = vld [vmem:[%s4815 + $0x30] sm:$0xff]
        %v5120 = vld [vmem:[%s4815 + $0x38] sm:$0xff]
        %v5121 = vmul.f32 %v5113, %v4830
        %v5122 = vmul.f32 %v5114, %v4830
        %v5123 = vmul.f32 %v5115, %v4830
        %v5124 = vmul.f32 %v5116, %v4830
        %v5125 = vmul.f32 %v5117, %v4830
        %v5126 = vmul.f32 %v5118, %v4830
        %v5127 = vmul.f32 %v5119, %v4830
        %v5128 = vmul.f32 %v5120, %v4830
        %v5129 = vadd.f32 %v5121, %v4832
        %v5130 = vadd.f32 %v5122, %v4832
        %v5131 = vadd.f32 %v5123, %v4832
        %v5132 = vadd.f32 %v5124, %v4832
        %v5133 = vadd.f32 %v5125, %v4832
        %v5134 = vadd.f32 %v5126, %v4832
        %v5135 = vadd.f32 %v5127, %v4832
        %v5136 = vadd.f32 %v5128, %v4832
        %v5137 = vmax.f32 %v5129, 0.0
        %v5138 = vmax.f32 %v5130, 0.0
        %v5139 = vmax.f32 %v5131, 0.0
        %v5140 = vmax.f32 %v5132, 0.0
        %v5141 = vmax.f32 %v5133, 0.0
        %v5142 = vmax.f32 %v5134, 0.0
        %v5143 = vmax.f32 %v5135, 0.0
        %v5144 = vmax.f32 %v5136, 0.0
        %5145 = vst [vmem:[%s4815] sm:$0xff] %v5137
        %5146 = vst [vmem:[%s4815 + $0x8] sm:$0xff] %v5138
        %5147 = vst [vmem:[%s4815 + $0x10] sm:$0xff] %v5139
        %5148 = vst [vmem:[%s4815 + $0x18] sm:$0xff] %v5140
        %5149 = vst [vmem:[%s4815 + $0x20] sm:$0xff] %v5141
        %5150 = vst [vmem:[%s4815 + $0x28] sm:$0xff] %v5142
        %5151 = vst [vmem:[%s4815 + $0x30] sm:$0xff] %v5143
        %5152 = vst.msk [vmem:[%s4815 + $0x38] sm:$0xff] %vm814, %v5144
        %s5153 = sand.u32 %s97, 1
        %s5154 = scalar_lea.sflag [#allocation4], %s5153
        %s5155 = sand.u32 %s97, 1
        %s5156 = smul.addr %s5155, 512
        %s5157 = scalar_lea.vmem [#allocation8], %s5156
        // Predicated region
        $region45: #{tpu_custom_call.1} parent=31 // pred_check
          %p5158 = pneg %p107
        $region46: #{tpu_custom_call.1} parent=31 // pred_check_branch
          %5160 = sbr.rel (%p5158) target = $region48
        $region47: #{tpu_custom_call.1} parent=31 // pred_region
          %s5162 = ssub.s32 8192, 8192
          %5163 = vsyncadd %s5154, %s5162
          %s5164 = smul.addr %s21, 64
          %s5165 = smul.addr %s5164, 128
          %s5166 = scalar_lea.hbm %s3, %s5165
          %s5167 = sshll.u32 %s5157, 4
          %s5168 = int_to_ptr.vmem [resolvable:$true] %s5167
          %5173 = dma.vmem_to_hbm [thread:$0]  %s5168, 8192, %s5166, %s5154, 1024, 1024, 64
        $region48: #{tpu_custom_call.1} parent=31 // pred_fallthru
          _
      $region32: #{tpu_custom_call.1} parent=5 // pred_fallthru
        _
      %p5174 = scmp.le.s32.totalorder 2, %s16
      // Predicated region
      $region49: #{tpu_custom_call.1} parent=5 // pred_check
        %p5175 = pneg %p5174
      $region50: #{tpu_custom_call.1} parent=5 // pred_check_branch
        %5177 = sbr.rel (%p5175) target = $region52
      $region51: #{tpu_custom_call.1} parent=5 // pred_region
        %s5178 = ssub.s32 %s16, 2
        // Predicated region
        $region53: #{tpu_custom_call.1} parent=51 // pred_check
          %p5179 = pneg %p113
        $region54: #{tpu_custom_call.1} parent=51 // pred_check_branch
          %5181 = sbr.rel (%p5179) target = $region56
        $region55: #{tpu_custom_call.1} parent=51 // pred_region
          %s5182 = sand.u32 %s98, 1
          %s5183 = scalar_lea.sflag [#allocation4], %s5182
          %s5184 = sand.u32 %s98, 1
          %s5185 = smul.addr %s5184, 512
          %s5186 = scalar_lea.vmem [#allocation8], %s5185
          %5187 = dma.done %s5183, 8192
        $region56: #{tpu_custom_call.1} parent=51 // pred_fallthru
          _
      $region52: #{tpu_custom_call.1} parent=5 // pred_fallthru
        _
    $region6: #{tpu_custom_call.1} parent=1 // loop_footer
      %s20 = sadd.s32 1, %s16
    $region7: #{tpu_custom_call.1} parent=1 // loop_footer_branch
      %15 = sbr.rel target = $region3
    $region8: #{tpu_custom_call.1} parent=1 // loop_exit
      _
    %5188 = vsyncpa [#allocation3], 1
    %s5189 = scalar_lea.sflag [#allocation3], 1
    %5190 = vsyncpa %s5189, 1
    %5191 = vsyncpa [#allocation6], 1
    %5192 = vsyncpa [#allocation4], 1
    %s5193 = scalar_lea.sflag [#allocation4], 1
    %5194 = vsyncpa %s5193, 1

</llo_original>
